<compile_context>
chip_gen: v7x
topology: tpu7x:2x2x1
jax: 0.10.0
libtpu: 0.0.40
codegen_flags: <defaults>
</compile_context>

<pallas_src>
import numpy as np
import jax
import jax.numpy as jnp
from jax import lax
from jax.experimental import pallas as pl
from jax.experimental.pallas import tpu as pltpu

EPS = 1e-5                      # nn.BatchNorm2d default eps
# TODO(synk): re-derive the VMEM budget / introduce row-group + 2-row-halo conv tiling
# before scaling H/W/C (v7x has only 64 MiB physical VMEM).
VMEM_LIMIT = 32 * 1024 * 1024


def _round_up(v, m):
    return (v + m - 1) // m * m


def _lp(h, w):
    """Lane-padded flat length of one zero-bordered (h+2)x(w+2) plane."""
    return _round_up((h + 2) * (w + 2), 128)


# ----------------------- pltpu.roll shift-convention probe -----------------------
def _probe_roll_sign():
    """Detect pltpu.roll's shift convention with a tiny one-time kernel.

    Returns +1 if pltpu.roll(x, s) == jnp.roll(x, s), -1 if the convention is
    flipped, 0 if the op is unavailable (then fall back to slice+concat).
    """
    lanes = 768                                     # multi-vreg lane axis, like level 0

    def k(x_ref, o_ref):
        o_ref[...] = pltpu.roll(x_ref[...], 19, axis=-1)

    try:
        x = jnp.tile(jnp.arange(lanes, dtype=jnp.float32), (8, 1))
        y = pl.pallas_call(
            k,
            out_shape=jax.ShapeDtypeStruct((8, lanes), jnp.float32),
            grid=(1,),
            in_specs=[pl.BlockSpec((8, lanes), lambda i: (0, 0))],
            out_specs=pl.BlockSpec((8, lanes), lambda i: (0, 0)),
            compiler_params=pltpu.CompilerParams(vmem_limit_bytes=VMEM_LIMIT),
        )(x)
        row = np.asarray(jax.block_until_ready(y))[0]
        ref = np.arange(lanes, dtype=np.float32)
        if np.array_equal(row, np.roll(ref, 19)):
            return 1
        if np.array_equal(row, np.roll(ref, -19)):
            return -1
    except Exception:
        pass
    return 0


def _roll_lanes(x, off, sign):
    """y[..., m] = x[..., (m + off) % lanes]  (static circular shift along lanes)."""
    lanes = x.shape[-1]
    off = off % lanes
    if off == 0:
        return x
    if sign != 0:
        # jnp.roll semantics: roll(x, s)[m] = x[(m - s) % lanes]; we want s = -off.
        return pltpu.roll(x, (sign * (-off)) % lanes, axis=-1)
    # VALU fallback if pltpu.roll is unavailable on this build.
    return jnp.concatenate([x[..., off:], x[..., :off]], axis=-1)


# ------------------------------ layout helpers (XLA) ------------------------------
def _to_folded(x_nchw, cin_p):
    """NCHW -> channels-first folded padded-flat layout (cin_p, N*Lp), zero borders,
    zero pad-channels / pad-lanes; image n owns lanes [n*Lp, (n+1)*Lp)."""
    n, c, h, w = x_nchw.shape
    lp = _lp(h, w)
    xp = jnp.pad(x_nchw.astype(jnp.float32),
                 ((0, 0), (0, cin_p - c), (1, 1), (1, 1)))
    xf = xp.reshape(n, cin_p, (h + 2) * (w + 2))
    xf = jnp.pad(xf, ((0, 0), (0, 0), (0, lp - (h + 2) * (w + 2))))
    return jnp.transpose(xf, (1, 0, 2)).reshape(cin_p, n * lp)


def _from_folded(xf, n, c, h, w):
    """Folded padded-flat (cp, N*Lp) -> NCHW (n, c, h, w) valid region."""
    lp = _lp(h, w)
    cp = xf.shape[0]
    x = xf.reshape(cp, n, lp)[:, :, :(h + 2) * (w + 2)]
    x = jnp.transpose(x, (1, 0, 2)).reshape(n, cp, h + 2, w + 2)
    return x[:, :c, 1:h + 1, 1:w + 1]


def _pack_weight(w_oihw, cin_p, coutp):
    """(Cout, Cin, 3, 3) -> (coutp, 9*cin_p); column index = (dy*3+dx)*cin_p + ci."""
    cout, cin, kh, kw = w_oihw.shape
    wt = jnp.transpose(w_oihw.astype(jnp.float32), (0, 2, 3, 1))   # (Cout, kh, kw, Cin)
    wt = jnp.pad(wt, ((0, coutp - cout), (0, 0), (0, 0), (0, cin_p - cin)))
    return wt.reshape(coutp, kh * kw * cin_p)


def _pad_col(v, coutp):
    return jnp.pad(v.astype(jnp.float32), (0, coutp - v.shape[0])).reshape(coutp, 1)


def _valid_mask(n, h, w):
    """(1, N*Lp) f32: 1 at valid interior positions of each image segment, else 0."""
    lp = _lp(h, w)
    m = np.zeros((h + 2, w + 2), np.float32)
    m[1:h + 1, 1:w + 1] = 1.0
    m = np.pad(m.reshape(-1), (0, lp - (h + 2) * (w + 2)))
    return jnp.asarray(np.tile(m, n).reshape(1, n * lp))


def _pool_select(n, h, w):
    """Exact 0/1 selection (N*Lp, N*Lp2): 2x2 window anchor -> next level's padded
    position, block-diagonal per image so the pooled output lands directly in the
    next level's folded zero-bordered layout."""
    lp, wp = _lp(h, w), w + 2
    ho, wo = h // 2, w // 2
    lp2, wp2 = _lp(ho, wo), wo + 2
    sel = np.zeros((n * lp, n * lp2), np.float32)
    for b in range(n):
        for oy in range(ho):
            for ox in range(wo):
                sel[b * lp + (1 + 2 * oy) * wp + (1 + 2 * ox),
                    b * lp2 + (1 + oy) * wp2 + (1 + ox)] = 1.0
    # TODO(synk): replace the dense selection matmul with a strided gather for large
    # feature maps (it grows ~H^2*W^2/4 and would blow v7x VMEM when scaled).
    return jnp.asarray(sel)


# --------------------------- fused EncoderBlock kernel ----------------------------
def encoder_level(x_folded, lvl, n, h, w, roll_sign):
    """One EncoderBlock (2 x [conv3x3 -> BN(batch stats) -> ReLU] + MaxPool2d(2)) as a
    single fused Pallas kernel.  Input and outputs use the folded padded-flat layout;
    returns (features_folded, pooled_folded)."""
    assert h % 2 == 0 and w % 2 == 0
    cin_p, nl = x_folded.shape
    lp, wp = _lp(h, w), w + 2
    assert nl == n * lp
    cout = lvl["w1"].shape[0]
    coutp = _round_up(cout, 8)
    ho, wo = h // 2, w // 2
    nl2 = n * _lp(ho, wo)

    w1 = _pack_weight(lvl["w1"], cin_p, coutp)      # (coutp, 9*cin_p)
    w2 = _pack_weight(lvl["w2"], coutp, coutp)      # (coutp, 9*coutp)
    g1, b1 = _pad_col(lvl["g1"], coutp), _pad_col(lvl["b1"], coutp)
    g2, b2 = _pad_col(lvl["g2"], coutp), _pad_col(lvl["b2"], coutp)
    mask = _valid_mask(n, h, w)                     # (1, N*Lp)
    sel = _pool_select(n, h, w)                     # (N*Lp, N*Lp2)
    inv_count = 1.0 / float(n * h * w)              # valid positions per channel

    def conv3x3(x, wmat):
        # 9 taps by lane rotation of the zero-bordered tile; wrap/segment-crossing
        # lanes only affect border/pad outputs, which the valid mask zeroes before use.
        taps = [_roll_lanes(x, (dy - 1) * wp + (dx - 1), roll_sign)
                for dy in range(3) for dx in range(3)]
        xcol = jnp.concatenate(taps, axis=0)                     # (9*cin, N*Lp)
        return jnp.dot(wmat, xcol, preferred_element_type=jnp.float32)

    def bn_relu(acc, g_col, b_col, mm):
        # BatchNorm2d, training semantics: batch statistics over the valid positions
        # of the whole batch (global, since the batch is folded into this one step).
        # The conv bias is dropped because it cancels against the mean exactly.
        masked = acc * mm
        mean = jnp.sum(masked, axis=1, keepdims=True) * inv_count
        var = jnp.maximum(
            jnp.sum(masked * acc, axis=1, keepdims=True) * inv_count - mean * mean, 0.0)
        scale = g_col * lax.rsqrt(var + EPS)
        shift = b_col - mean * scale
        # The mask re-zeroes the border, which is exactly the next conv's zero padding.
        return jnp.maximum(acc * scale + shift, 0.0) * mm

    def level_kernel(x_ref, w1_ref, g1_ref, b1_ref, w2_ref, g2_ref, b2_ref,
                     m_ref, sel_ref, feat_ref, pool_ref):
        mm = m_ref[...]                                          # (1, N*Lp)
        act1 = bn_relu(conv3x3(x_ref[...], w1_ref[...]), g1_ref[...], b1_ref[...], mm)
        act2 = bn_relu(conv3x3(act1, w2_ref[...]), g2_ref[...], b2_ref[...], mm)
        feat_ref[...] = act2
        # MaxPool2d(2): window max via 3 lane rolls, then one exact 0/1 selection
        # matmul into the next level's padded-flat layout (anchors are interior, so
        # no cross-image contamination at selected lanes).
        wmax = jnp.maximum(jnp.maximum(act2, _roll_lanes(act2, 1, roll_sign)),
                           jnp.maximum(_roll_lanes(act2, wp, roll_sign),
                                       _roll_lanes(act2, wp + 1, roll_sign)))
        pool_ref[...] = jnp.dot(wmax, sel_ref[...],
                                preferred_element_type=jnp.float32)

    flops = int(2 * coutp * nl * (9 * cin_p + 9 * coutp) + 2 * coutp * nl * nl2)
    bytes_accessed = int(4 * (cin_p * nl + coutp * (9 * cin_p + 9 * coutp + 4)
                              + nl + nl * nl2 + coutp * nl + coutp * nl2))

    feat, pooled = pl.pallas_call(
        level_kernel,
        out_shape=(jax.ShapeDtypeStruct((coutp, nl), jnp.float32),
                   jax.ShapeDtypeStruct((coutp, nl2), jnp.float32)),
        grid=(1,),
        in_specs=[pl.BlockSpec((cin_p, nl), lambda i: (0, 0)),
                  pl.BlockSpec((coutp, 9 * cin_p), lambda i: (0, 0)),
                  pl.BlockSpec((coutp, 1), lambda i: (0, 0)),
                  pl.BlockSpec((coutp, 1), lambda i: (0, 0)),
                  pl.BlockSpec((coutp, 9 * coutp), lambda i: (0, 0)),
                  pl.BlockSpec((coutp, 1), lambda i: (0, 0)),
                  pl.BlockSpec((coutp, 1), lambda i: (0, 0)),
                  pl.BlockSpec((1, nl), lambda i: (0, 0)),
                  pl.BlockSpec((nl, nl2), lambda i: (0, 0))],
        out_specs=(pl.BlockSpec((coutp, nl), lambda i: (0, 0)),
                   pl.BlockSpec((coutp, nl2), lambda i: (0, 0))),
        compiler_params=pltpu.CompilerParams(
            # Single fused grid step: nothing to pipeline, and megacore sharding of a
            # microsecond-scale step is a net loss at this problem size.
            dimension_semantics=("arbitrary",),
            vmem_limit_bytes=VMEM_LIMIT),
        cost_estimate=pl.CostEstimate(flops=flops, transcendentals=2 * coutp,
                                      bytes_accessed=bytes_accessed),
    )(x_folded, w1, g1, b1, w2, g2, b2, mask, sel)
    return feat, pooled


def unet_encoder_forward(x_nchw, params, roll_sign):
    """Pallas forward of UNetEncoder.forward; returns (x, features)."""
    n, c, h, w = x_nchw.shape
    cur = _to_folded(x_nchw, _round_up(c, 8))
    features = []
    for lvl in params:
        cout = lvl["w2"].shape[0]
        feat, cur = encoder_level(cur, lvl, n, h, w, roll_sign)
        features.append(_from_folded(feat, n, cout, h, w))
        h, w = h // 2, w // 2
    x_out = _from_folded(cur, n, params[-1]["w2"].shape[0], h, w)
    return x_out, features


# ------------------------- pure-JAX reference (matches PyTorch) -------------------------
def _ref_conv_block(x, wt, b, gamma, beta):
    y = lax.conv_general_dilated(x, wt, (1, 1), ((1, 1), (1, 1)),
                                 dimension_numbers=('NCHW', 'OIHW', 'NCHW'),
                                 precision=lax.Precision.HIGHEST)
    y = y + b.reshape(1, -1, 1, 1)
    mean = jnp.mean(y, axis=(0, 2, 3), keepdims=True)
    var = jnp.mean((y - mean) ** 2, axis=(0, 2, 3), keepdims=True)
    y = (y - mean) * lax.rsqrt(var + EPS)
    y = y * gamma.reshape(1, -1, 1, 1) + beta.reshape(1, -1, 1, 1)
    return jnp.maximum(y, 0.0)


def unet_encoder_reference(x, params):
    features = []
    cur = x
    for lvl in params:
        cur = _ref_conv_block(cur, lvl["w1"], lvl["bias1"], lvl["g1"], lvl["b1"])
        cur = _ref_conv_block(cur, lvl["w2"], lvl["bias2"], lvl["g2"], lvl["b2"])
        features.append(cur)
        cur = lax.reduce_window(cur, -jnp.inf, lax.max,
                                (1, 1, 2, 2), (1, 1, 2, 2), 'VALID')
    return cur, features


if __name__ == "__main__":
    # UNetEncoder(in_channels=4, depth=2, first_channels=8), input (2, 4, 16, 16).
    N, Cin, H, W = 2, 4, 16, 16
    depth, first_channels = 2, 8

    key = jax.random.PRNGKey(0)
    params = []
    c_in = Cin
    for lvl_i in range(depth):
        c_out = first_channels * (2 ** lvl_i)
        lvl = {}
        for j, (ci, co) in enumerate(((c_in, c_out), (c_out, c_out)), start=1):
            key, kw_, kb_ = jax.random.split(key, 3)
            bound = 1.0 / float(np.sqrt(ci * 9))          # nn.Conv2d default init bound
            lvl[f"w{j}"] = jax.random.uniform(kw_, (co, ci, 3, 3), jnp.float32,
                                              -bound, bound)
            lvl[f"bias{j}"] = jax.random.uniform(kb_, (co,), jnp.float32,
                                                 -bound, bound)
            lvl[f"g{j}"] = jnp.ones((co,), jnp.float32)    # BatchNorm2d affine defaults
            lvl[f"b{j}"] = jnp.zeros((co,), jnp.float32)
        params.append(lvl)
        c_in = c_out

    key, kx = jax.random.split(key)
    x = jax.random.normal(kx, (N, Cin, H, W), jnp.float32)

    roll_sign = _probe_roll_sign()                 # one-time device probe

    fwd = jax.jit(lambda xx: unet_encoder_forward(xx, params, roll_sign))
    out, feats = fwd(x)
    out = jax.block_until_ready(out)

    ref_out, ref_feats = unet_encoder_reference(x, params)
    ref_out = jax.block_until_ready(ref_out)

    assert out.shape == (N, first_channels * 2 ** (depth - 1),
                         H // 2 ** depth, W // 2 ** depth), out.shape
    # MXU-vs-XLA accumulation-order differences across 4 stacked conv+BN layers.
    tol = dict(atol=2e-2, rtol=2e-2)
    assert jnp.allclose(out, ref_out, **tol), float(jnp.max(jnp.abs(out - ref_out)))
    for f, rf in zip(feats, ref_feats):
        assert f.shape == rf.shape, (f.shape, rf.shape)
        assert jnp.allclose(f, rf, **tol), float(jnp.max(jnp.abs(f - rf)))
    print("KERNEL_OK")
</pallas_src>

<mosaic_0001>
module attributes {stable_mosaic.version = 11 : i64} {
  func.func @level_kernel(%arg0: i32, %arg1: memref<8x768xf32, #tpu.memory_space<vmem>>, %arg2: memref<8x72xf32, #tpu.memory_space<vmem>>, %arg3: memref<8x1xf32, #tpu.memory_space<vmem>>, %arg4: memref<8x1xf32, #tpu.memory_space<vmem>>, %arg5: memref<8x72xf32, #tpu.memory_space<vmem>>, %arg6: memref<8x1xf32, #tpu.memory_space<vmem>>, %arg7: memref<8x1xf32, #tpu.memory_space<vmem>>, %arg8: memref<1x768xf32, #tpu.memory_space<vmem>>, %arg9: memref<768x256xf32, #tpu.memory_space<vmem>>, %arg10: memref<8x768xf32, #tpu.memory_space<vmem>>, %arg11: memref<8x256xf32, #tpu.memory_space<vmem>>) attributes {dimension_semantics = [#tpu.dimension_semantics<arbitrary>], iteration_bounds = array<i64: 1>, scalar_prefetch = 0 : i64, scratch_operands = 0 : i64, tpu.core_type = #tpu.core_type<tc>, window_params = [{pipeline_mode = #tpu.pipeline_mode<synchronous>, transform_indices = @transform_0, window_bounds = array<i64: 8, 768>}, {pipeline_mode = #tpu.pipeline_mode<synchronous>, transform_indices = @transform_1, window_bounds = array<i64: 8, 72>}, {pipeline_mode = #tpu.pipeline_mode<synchronous>, transform_indices = @transform_2, window_bounds = array<i64: 8, 1>}, {pipeline_mode = #tpu.pipeline_mode<synchronous>, transform_indices = @transform_3, window_bounds = array<i64: 8, 1>}, {pipeline_mode = #tpu.pipeline_mode<synchronous>, transform_indices = @transform_4, window_bounds = array<i64: 8, 72>}, {pipeline_mode = #tpu.pipeline_mode<synchronous>, transform_indices = @transform_5, window_bounds = array<i64: 8, 1>}, {pipeline_mode = #tpu.pipeline_mode<synchronous>, transform_indices = @transform_6, window_bounds = array<i64: 8, 1>}, {pipeline_mode = #tpu.pipeline_mode<synchronous>, transform_indices = @transform_7, window_bounds = array<i64: 1, 768>}, {pipeline_mode = #tpu.pipeline_mode<synchronous>, transform_indices = @transform_8, window_bounds = array<i64: 768, 256>}, {pipeline_mode = #tpu.pipeline_mode<synchronous>, transform_indices = @transform_9, window_bounds = array<i64: 8, 768>}, {pipeline_mode = #tpu.pipeline_mode<synchronous>, transform_indices = @transform_10, window_bounds = array<i64: 8, 256>}]} {
    %c0 = arith.constant 0 : index
    %c0_0 = arith.constant 0 : index
    %0 = vector.load %arg8[%c0, %c0_0] : memref<1x768xf32, #tpu.memory_space<vmem>>, vector<1x768xf32>
    %c0_1 = arith.constant 0 : index
    %c0_2 = arith.constant 0 : index
    %1 = vector.load %arg1[%c0_1, %c0_2] : memref<8x768xf32, #tpu.memory_space<vmem>>, vector<8x768xf32>
    %c0_3 = arith.constant 0 : index
    %c0_4 = arith.constant 0 : index
    %2 = vector.load %arg2[%c0_3, %c0_4] : memref<8x72xf32, #tpu.memory_space<vmem>>, vector<8x72xf32>
    %3 = vector.extract_strided_slice %1 {offsets = [0, 749], sizes = [8, 19], strides = [1, 1]} : vector<8x768xf32> to vector<8x19xf32>
    %4 = vector.extract_strided_slice %1 {offsets = [0, 0], sizes = [8, 749], strides = [1, 1]} : vector<8x768xf32> to vector<8x749xf32>
    %5 = tpu.concatenate %3, %4 in 1 : vector<8x19xf32>, vector<8x749xf32> -> vector<8x768xf32>
    %6 = vector.extract_strided_slice %1 {offsets = [0, 750], sizes = [8, 18], strides = [1, 1]} : vector<8x768xf32> to vector<8x18xf32>
    %7 = vector.extract_strided_slice %1 {offsets = [0, 0], sizes = [8, 750], strides = [1, 1]} : vector<8x768xf32> to vector<8x750xf32>
    %8 = tpu.concatenate %6, %7 in 1 : vector<8x18xf32>, vector<8x750xf32> -> vector<8x768xf32>
    %9 = vector.extract_strided_slice %1 {offsets = [0, 751], sizes = [8, 17], strides = [1, 1]} : vector<8x768xf32> to vector<8x17xf32>
    %10 = vector.extract_strided_slice %1 {offsets = [0, 0], sizes = [8, 751], strides = [1, 1]} : vector<8x768xf32> to vector<8x751xf32>
    %11 = tpu.concatenate %9, %10 in 1 : vector<8x17xf32>, vector<8x751xf32> -> vector<8x768xf32>
    %12 = vector.extract_strided_slice %1 {offsets = [0, 767], sizes = [8, 1], strides = [1, 1]} : vector<8x768xf32> to vector<8x1xf32>
    %13 = vector.extract_strided_slice %1 {offsets = [0, 0], sizes = [8, 767], strides = [1, 1]} : vector<8x768xf32> to vector<8x767xf32>
    %14 = tpu.concatenate %12, %13 in 1 : vector<8x1xf32>, vector<8x767xf32> -> vector<8x768xf32>
    %15 = vector.extract_strided_slice %1 {offsets = [0, 1], sizes = [8, 767], strides = [1, 1]} : vector<8x768xf32> to vector<8x767xf32>
    %16 = vector.extract_strided_slice %1 {offsets = [0, 0], sizes = [8, 1], strides = [1, 1]} : vector<8x768xf32> to vector<8x1xf32>
    %17 = tpu.concatenate %15, %16 in 1 : vector<8x767xf32>, vector<8x1xf32> -> vector<8x768xf32>
    %18 = vector.extract_strided_slice %1 {offsets = [0, 17], sizes = [8, 751], strides = [1, 1]} : vector<8x768xf32> to vector<8x751xf32>
    %19 = vector.extract_strided_slice %1 {offsets = [0, 0], sizes = [8, 17], strides = [1, 1]} : vector<8x768xf32> to vector<8x17xf32>
    %20 = tpu.concatenate %18, %19 in 1 : vector<8x751xf32>, vector<8x17xf32> -> vector<8x768xf32>
    %21 = vector.extract_strided_slice %1 {offsets = [0, 18], sizes = [8, 750], strides = [1, 1]} : vector<8x768xf32> to vector<8x750xf32>
    %22 = vector.extract_strided_slice %1 {offsets = [0, 0], sizes = [8, 18], strides = [1, 1]} : vector<8x768xf32> to vector<8x18xf32>
    %23 = tpu.concatenate %21, %22 in 1 : vector<8x750xf32>, vector<8x18xf32> -> vector<8x768xf32>
    %24 = vector.extract_strided_slice %1 {offsets = [0, 19], sizes = [8, 749], strides = [1, 1]} : vector<8x768xf32> to vector<8x749xf32>
    %25 = vector.extract_strided_slice %1 {offsets = [0, 0], sizes = [8, 19], strides = [1, 1]} : vector<8x768xf32> to vector<8x19xf32>
    %26 = tpu.concatenate %24, %25 in 1 : vector<8x749xf32>, vector<8x19xf32> -> vector<8x768xf32>
    %27 = tpu.concatenate %5, %8, %11, %14, %1, %17, %20, %23, %26 in 0 : vector<8x768xf32>, vector<8x768xf32>, vector<8x768xf32>, vector<8x768xf32>, vector<8x768xf32>, vector<8x768xf32>, vector<8x768xf32>, vector<8x768xf32>, vector<8x768xf32> -> vector<72x768xf32>
    %cst = arith.constant dense<0.000000e+00> : vector<8x768xf32>
    %28 = tpu.matmul %2, %27, %cst {dimension_numbers = #tpu.dot_dimension_numbers<[1], [0], [0], [1], [0, 0, 1, 1], [], []>} : vector<8x72xf32>, vector<72x768xf32>, vector<8x768xf32> -> vector<8x768xf32>
    %c0_5 = arith.constant 0 : index
    %c0_6 = arith.constant 0 : index
    %29 = vector.load %arg3[%c0_5, %c0_6] : memref<8x1xf32, #tpu.memory_space<vmem>>, vector<8x1xf32>
    %c0_7 = arith.constant 0 : index
    %c0_8 = arith.constant 0 : index
    %30 = vector.load %arg4[%c0_7, %c0_8] : memref<8x1xf32, #tpu.memory_space<vmem>>, vector<8x1xf32>
    %31 = vector.broadcast %0 : vector<1x768xf32> to vector<8x768xf32>
    %32 = arith.mulf %28, %31 : vector<8x768xf32>
    %cst_9 = arith.constant dense<0.000000e+00> : vector<8xf32>
    %33 = vector.multi_reduction <add>, %32, %cst_9 [1] : vector<8x768xf32> to vector<8xf32>
    %34 = vector.shape_cast %33 : vector<8xf32> to vector<8x1xf32>
    %cst_10 = arith.constant 0.001953125 : f32
    %35 = vector.broadcast %cst_10 : f32 to vector<8x1xf32>
    %36 = arith.mulf %34, %35 : vector<8x1xf32>
    %37 = arith.mulf %32, %28 : vector<8x768xf32>
    %cst_11 = arith.constant dense<0.000000e+00> : vector<8xf32>
    %38 = vector.multi_reduction <add>, %37, %cst_11 [1] : vector<8x768xf32> to vector<8xf32>
    %39 = vector.shape_cast %38 : vector<8xf32> to vector<8x1xf32>
    %cst_12 = arith.constant 0.001953125 : f32
    %40 = vector.broadcast %cst_12 : f32 to vector<8x1xf32>
    %41 = arith.mulf %39, %40 : vector<8x1xf32>
    %42 = arith.mulf %36, %36 : vector<8x1xf32>
    %43 = arith.subf %41, %42 : vector<8x1xf32>
    %cst_13 = arith.constant 0.000000e+00 : f32
    %44 = vector.broadcast %cst_13 : f32 to vector<8x1xf32>
    %45 = arith.maximumf %43, %44 : vector<8x1xf32>
    %cst_14 = arith.constant 9.99999974E-6 : f32
    %46 = vector.broadcast %cst_14 : f32 to vector<8x1xf32>
    %47 = arith.addf %45, %46 : vector<8x1xf32>
    %48 = math.rsqrt %47 : vector<8x1xf32>
    %49 = arith.mulf %29, %48 : vector<8x1xf32>
    %50 = arith.mulf %36, %49 : vector<8x1xf32>
    %51 = arith.subf %30, %50 : vector<8x1xf32>
    %52 = vector.broadcast %49 : vector<8x1xf32> to vector<8x768xf32>
    %53 = arith.mulf %28, %52 : vector<8x768xf32>
    %54 = vector.broadcast %51 : vector<8x1xf32> to vector<8x768xf32>
    %55 = arith.addf %53, %54 : vector<8x768xf32>
    %cst_15 = arith.constant 0.000000e+00 : f32
    %56 = vector.broadcast %cst_15 : f32 to vector<8x768xf32>
    %57 = arith.maximumf %55, %56 : vector<8x768xf32>
    %58 = vector.broadcast %0 : vector<1x768xf32> to vector<8x768xf32>
    %59 = arith.mulf %57, %58 : vector<8x768xf32>
    %c0_16 = arith.constant 0 : index
    %c0_17 = arith.constant 0 : index
    %60 = vector.load %arg5[%c0_16, %c0_17] : memref<8x72xf32, #tpu.memory_space<vmem>>, vector<8x72xf32>
    %61 = vector.extract_strided_slice %59 {offsets = [0, 749], sizes = [8, 19], strides = [1, 1]} : vector<8x768xf32> to vector<8x19xf32>
    %62 = vector.extract_strided_slice %59 {offsets = [0, 0], sizes = [8, 749], strides = [1, 1]} : vector<8x768xf32> to vector<8x749xf32>
    %63 = tpu.concatenate %61, %62 in 1 : vector<8x19xf32>, vector<8x749xf32> -> vector<8x768xf32>
    %64 = vector.extract_strided_slice %59 {offsets = [0, 750], sizes = [8, 18], strides = [1, 1]} : vector<8x768xf32> to vector<8x18xf32>
    %65 = vector.extract_strided_slice %59 {offsets = [0, 0], sizes = [8, 750], strides = [1, 1]} : vector<8x768xf32> to vector<8x750xf32>
    %66 = tpu.concatenate %64, %65 in 1 : vector<8x18xf32>, vector<8x750xf32> -> vector<8x768xf32>
    %67 = vector.extract_strided_slice %59 {offsets = [0, 751], sizes = [8, 17], strides = [1, 1]} : vector<8x768xf32> to vector<8x17xf32>
    %68 = vector.extract_strided_slice %59 {offsets = [0, 0], sizes = [8, 751], strides = [1, 1]} : vector<8x768xf32> to vector<8x751xf32>
    %69 = tpu.concatenate %67, %68 in 1 : vector<8x17xf32>, vector<8x751xf32> -> vector<8x768xf32>
    %70 = vector.extract_strided_slice %59 {offsets = [0, 767], sizes = [8, 1], strides = [1, 1]} : vector<8x768xf32> to vector<8x1xf32>
    %71 = vector.extract_strided_slice %59 {offsets = [0, 0], sizes = [8, 767], strides = [1, 1]} : vector<8x768xf32> to vector<8x767xf32>
    %72 = tpu.concatenate %70, %71 in 1 : vector<8x1xf32>, vector<8x767xf32> -> vector<8x768xf32>
    %73 = vector.extract_strided_slice %59 {offsets = [0, 1], sizes = [8, 767], strides = [1, 1]} : vector<8x768xf32> to vector<8x767xf32>
    %74 = vector.extract_strided_slice %59 {offsets = [0, 0], sizes = [8, 1], strides = [1, 1]} : vector<8x768xf32> to vector<8x1xf32>
    %75 = tpu.concatenate %73, %74 in 1 : vector<8x767xf32>, vector<8x1xf32> -> vector<8x768xf32>
    %76 = vector.extract_strided_slice %59 {offsets = [0, 17], sizes = [8, 751], strides = [1, 1]} : vector<8x768xf32> to vector<8x751xf32>
    %77 = vector.extract_strided_slice %59 {offsets = [0, 0], sizes = [8, 17], strides = [1, 1]} : vector<8x768xf32> to vector<8x17xf32>
    %78 = tpu.concatenate %76, %77 in 1 : vector<8x751xf32>, vector<8x17xf32> -> vector<8x768xf32>
    %79 = vector.extract_strided_slice %59 {offsets = [0, 18], sizes = [8, 750], strides = [1, 1]} : vector<8x768xf32> to vector<8x750xf32>
    %80 = vector.extract_strided_slice %59 {offsets = [0, 0], sizes = [8, 18], strides = [1, 1]} : vector<8x768xf32> to vector<8x18xf32>
    %81 = tpu.concatenate %79, %80 in 1 : vector<8x750xf32>, vector<8x18xf32> -> vector<8x768xf32>
    %82 = vector.extract_strided_slice %59 {offsets = [0, 19], sizes = [8, 749], strides = [1, 1]} : vector<8x768xf32> to vector<8x749xf32>
    %83 = vector.extract_strided_slice %59 {offsets = [0, 0], sizes = [8, 19], strides = [1, 1]} : vector<8x768xf32> to vector<8x19xf32>
    %84 = tpu.concatenate %82, %83 in 1 : vector<8x749xf32>, vector<8x19xf32> -> vector<8x768xf32>
    %85 = tpu.concatenate %63, %66, %69, %72, %59, %75, %78, %81, %84 in 0 : vector<8x768xf32>, vector<8x768xf32>, vector<8x768xf32>, vector<8x768xf32>, vector<8x768xf32>, vector<8x768xf32>, vector<8x768xf32>, vector<8x768xf32>, vector<8x768xf32> -> vector<72x768xf32>
    %cst_18 = arith.constant dense<0.000000e+00> : vector<8x768xf32>
    %86 = tpu.matmul %60, %85, %cst_18 {dimension_numbers = #tpu.dot_dimension_numbers<[1], [0], [0], [1], [0, 0, 1, 1], [], []>} : vector<8x72xf32>, vector<72x768xf32>, vector<8x768xf32> -> vector<8x768xf32>
    %c0_19 = arith.constant 0 : index
    %c0_20 = arith.constant 0 : index
    %87 = vector.load %arg6[%c0_19, %c0_20] : memref<8x1xf32, #tpu.memory_space<vmem>>, vector<8x1xf32>
    %c0_21 = arith.constant 0 : index
    %c0_22 = arith.constant 0 : index
    %88 = vector.load %arg7[%c0_21, %c0_22] : memref<8x1xf32, #tpu.memory_space<vmem>>, vector<8x1xf32>
    %89 = vector.broadcast %0 : vector<1x768xf32> to vector<8x768xf32>
    %90 = arith.mulf %86, %89 : vector<8x768xf32>
    %cst_23 = arith.constant dense<0.000000e+00> : vector<8xf32>
    %91 = vector.multi_reduction <add>, %90, %cst_23 [1] : vector<8x768xf32> to vector<8xf32>
    %92 = vector.shape_cast %91 : vector<8xf32> to vector<8x1xf32>
    %cst_24 = arith.constant 0.001953125 : f32
    %93 = vector.broadcast %cst_24 : f32 to vector<8x1xf32>
    %94 = arith.mulf %92, %93 : vector<8x1xf32>
    %95 = arith.mulf %90, %86 : vector<8x768xf32>
    %cst_25 = arith.constant dense<0.000000e+00> : vector<8xf32>
    %96 = vector.multi_reduction <add>, %95, %cst_25 [1] : vector<8x768xf32> to vector<8xf32>
    %97 = vector.shape_cast %96 : vector<8xf32> to vector<8x1xf32>
    %cst_26 = arith.constant 0.001953125 : f32
    %98 = vector.broadcast %cst_26 : f32 to vector<8x1xf32>
    %99 = arith.mulf %97, %98 : vector<8x1xf32>
    %100 = arith.mulf %94, %94 : vector<8x1xf32>
    %101 = arith.subf %99, %100 : vector<8x1xf32>
    %cst_27 = arith.constant 0.000000e+00 : f32
    %102 = vector.broadcast %cst_27 : f32 to vector<8x1xf32>
    %103 = arith.maximumf %101, %102 : vector<8x1xf32>
    %cst_28 = arith.constant 9.99999974E-6 : f32
    %104 = vector.broadcast %cst_28 : f32 to vector<8x1xf32>
    %105 = arith.addf %103, %104 : vector<8x1xf32>
    %106 = math.rsqrt %105 : vector<8x1xf32>
    %107 = arith.mulf %87, %106 : vector<8x1xf32>
    %108 = arith.mulf %94, %107 : vector<8x1xf32>
    %109 = arith.subf %88, %108 : vector<8x1xf32>
    %110 = vector.broadcast %107 : vector<8x1xf32> to vector<8x768xf32>
    %111 = arith.mulf %86, %110 : vector<8x768xf32>
    %112 = vector.broadcast %109 : vector<8x1xf32> to vector<8x768xf32>
    %113 = arith.addf %111, %112 : vector<8x768xf32>
    %cst_29 = arith.constant 0.000000e+00 : f32
    %114 = vector.broadcast %cst_29 : f32 to vector<8x768xf32>
    %115 = arith.maximumf %113, %114 : vector<8x768xf32>
    %116 = vector.broadcast %0 : vector<1x768xf32> to vector<8x768xf32>
    %117 = arith.mulf %115, %116 : vector<8x768xf32>
    %c0_30 = arith.constant 0 : index
    %c0_31 = arith.constant 0 : index
    %118 = vector.load %arg10[%c0_30, %c0_31] : memref<8x768xf32, #tpu.memory_space<vmem>>, vector<8x768xf32>
    tpu.vector_store %arg10[%c0_30, %c0_31], %117 {strides = array<i32>} : memref<8x768xf32, #tpu.memory_space<vmem>>, vector<8x768xf32>,
    %119 = vector.extract_strided_slice %117 {offsets = [0, 1], sizes = [8, 767], strides = [1, 1]} : vector<8x768xf32> to vector<8x767xf32>
    %120 = vector.extract_strided_slice %117 {offsets = [0, 0], sizes = [8, 1], strides = [1, 1]} : vector<8x768xf32> to vector<8x1xf32>
    %121 = tpu.concatenate %119, %120 in 1 : vector<8x767xf32>, vector<8x1xf32> -> vector<8x768xf32>
    %122 = arith.maximumf %117, %121 : vector<8x768xf32>
    %123 = vector.extract_strided_slice %117 {offsets = [0, 18], sizes = [8, 750], strides = [1, 1]} : vector<8x768xf32> to vector<8x750xf32>
    %124 = vector.extract_strided_slice %117 {offsets = [0, 0], sizes = [8, 18], strides = [1, 1]} : vector<8x768xf32> to vector<8x18xf32>
    %125 = tpu.concatenate %123, %124 in 1 : vector<8x750xf32>, vector<8x18xf32> -> vector<8x768xf32>
    %126 = vector.extract_strided_slice %117 {offsets = [0, 19], sizes = [8, 749], strides = [1, 1]} : vector<8x768xf32> to vector<8x749xf32>
    %127 = vector.extract_strided_slice %117 {offsets = [0, 0], sizes = [8, 19], strides = [1, 1]} : vector<8x768xf32> to vector<8x19xf32>
    %128 = tpu.concatenate %126, %127 in 1 : vector<8x749xf32>, vector<8x19xf32> -> vector<8x768xf32>
    %129 = arith.maximumf %125, %128 : vector<8x768xf32>
    %130 = arith.maximumf %122, %129 : vector<8x768xf32>
    %c0_32 = arith.constant 0 : index
    %c0_33 = arith.constant 0 : index
    %131 = vector.load %arg9[%c0_32, %c0_33] : memref<768x256xf32, #tpu.memory_space<vmem>>, vector<768x256xf32>
    %cst_34 = arith.constant dense<0.000000e+00> : vector<8x256xf32>
    %132 = tpu.matmul %130, %131, %cst_34 {dimension_numbers = #tpu.dot_dimension_numbers<[1], [0], [0], [1], [0, 0, 1, 1], [], []>} : vector<8x768xf32>, vector<768x256xf32>, vector<8x256xf32> -> vector<8x256xf32>
    %c0_35 = arith.constant 0 : index
    %c0_36 = arith.constant 0 : index
    %133 = vector.load %arg11[%c0_35, %c0_36] : memref<8x256xf32, #tpu.memory_space<vmem>>, vector<8x256xf32>
    tpu.vector_store %arg11[%c0_35, %c0_36], %132 {strides = array<i32>} : memref<8x256xf32, #tpu.memory_space<vmem>>, vector<8x256xf32>,
    return
  }
  func.func @transform_0(%arg0: i32) -> (i32, i32) {
    %c0_i32 = arith.constant 0 : i32
    %c0_i32_0 = arith.constant 0 : i32
    %c0_i32_1 = arith.constant 0 : i32
    return %c0_i32, %c0_i32_0 : i32, i32
  }
  func.func @transform_1(%arg0: i32) -> (i32, i32) {
    %c0_i32 = arith.constant 0 : i32
    %c0_i32_0 = arith.constant 0 : i32
    %c0_i32_1 = arith.constant 0 : i32
    return %c0_i32, %c0_i32_0 : i32, i32
  }
  func.func @transform_2(%arg0: i32) -> (i32, i32) {
    %c0_i32 = arith.constant 0 : i32
    %c0_i32_0 = arith.constant 0 : i32
    %c0_i32_1 = arith.constant 0 : i32
    return %c0_i32, %c0_i32_0 : i32, i32
  }
  func.func @transform_3(%arg0: i32) -> (i32, i32) {
    %c0_i32 = arith.constant 0 : i32
    %c0_i32_0 = arith.constant 0 : i32
    %c0_i32_1 = arith.constant 0 : i32
    return %c0_i32, %c0_i32_0 : i32, i32
  }
  func.func @transform_4(%arg0: i32) -> (i32, i32) {
    %c0_i32 = arith.constant 0 : i32
    %c0_i32_0 = arith.constant 0 : i32
    %c0_i32_1 = arith.constant 0 : i32
    return %c0_i32, %c0_i32_0 : i32, i32
  }
  func.func @transform_5(%arg0: i32) -> (i32, i32) {
    %c0_i32 = arith.constant 0 : i32
    %c0_i32_0 = arith.constant 0 : i32
    %c0_i32_1 = arith.constant 0 : i32
    return %c0_i32, %c0_i32_0 : i32, i32
  }
  func.func @transform_6(%arg0: i32) -> (i32, i32) {
    %c0_i32 = arith.constant 0 : i32
    %c0_i32_0 = arith.constant 0 : i32
    %c0_i32_1 = arith.constant 0 : i32
    return %c0_i32, %c0_i32_0 : i32, i32
  }
  func.func @transform_7(%arg0: i32) -> (i32, i32) {
    %c0_i32 = arith.constant 0 : i32
    %c0_i32_0 = arith.constant 0 : i32
    %c0_i32_1 = arith.constant 0 : i32
    return %c0_i32, %c0_i32_0 : i32, i32
  }
  func.func @transform_8(%arg0: i32) -> (i32, i32) {
    %c0_i32 = arith.constant 0 : i32
    %c0_i32_0 = arith.constant 0 : i32
    %c0_i32_1 = arith.constant 0 : i32
    return %c0_i32, %c0_i32_0 : i32, i32
  }
  func.func @transform_9(%arg0: i32) -> (i32, i32) {
    %c0_i32 = arith.constant 0 : i32
    %c0_i32_0 = arith.constant 0 : i32
    %c0_i32_1 = arith.constant 0 : i32
    return %c0_i32, %c0_i32_0 : i32, i32
  }
  func.func @transform_10(%arg0: i32) -> (i32, i32) {
    %c0_i32 = arith.constant 0 : i32
    %c0_i32_0 = arith.constant 0 : i32
    %c0_i32_1 = arith.constant 0 : i32
    return %c0_i32, %c0_i32_0 : i32, i32
  }
}

module attributes {stable_mosaic.version = 11 : i64} {
  func.func @level_kernel(%arg0: i32, %arg1: memref<8x256xf32, #tpu.memory_space<vmem>>, %arg2: memref<16x72xf32, #tpu.memory_space<vmem>>, %arg3: memref<16x1xf32, #tpu.memory_space<vmem>>, %arg4: memref<16x1xf32, #tpu.memory_space<vmem>>, %arg5: memref<16x144xf32, #tpu.memory_space<vmem>>, %arg6: memref<16x1xf32, #tpu.memory_space<vmem>>, %arg7: memref<16x1xf32, #tpu.memory_space<vmem>>, %arg8: memref<1x256xf32, #tpu.memory_space<vmem>>, %arg9: memref<256x256xf32, #tpu.memory_space<vmem>>, %arg10: memref<16x256xf32, #tpu.memory_space<vmem>>, %arg11: memref<16x256xf32, #tpu.memory_space<vmem>>) attributes {dimension_semantics = [#tpu.dimension_semantics<arbitrary>], iteration_bounds = array<i64: 1>, scalar_prefetch = 0 : i64, scratch_operands = 0 : i64, tpu.core_type = #tpu.core_type<tc>, window_params = [{pipeline_mode = #tpu.pipeline_mode<synchronous>, transform_indices = @transform_0, window_bounds = array<i64: 8, 256>}, {pipeline_mode = #tpu.pipeline_mode<synchronous>, transform_indices = @transform_1, window_bounds = array<i64: 16, 72>}, {pipeline_mode = #tpu.pipeline_mode<synchronous>, transform_indices = @transform_2, window_bounds = array<i64: 16, 1>}, {pipeline_mode = #tpu.pipeline_mode<synchronous>, transform_indices = @transform_3, window_bounds = array<i64: 16, 1>}, {pipeline_mode = #tpu.pipeline_mode<synchronous>, transform_indices = @transform_4, window_bounds = array<i64: 16, 144>}, {pipeline_mode = #tpu.pipeline_mode<synchronous>, transform_indices = @transform_5, window_bounds = array<i64: 16, 1>}, {pipeline_mode = #tpu.pipeline_mode<synchronous>, transform_indices = @transform_6, window_bounds = array<i64: 16, 1>}, {pipeline_mode = #tpu.pipeline_mode<synchronous>, transform_indices = @transform_7, window_bounds = array<i64: 1, 256>}, {pipeline_mode = #tpu.pipeline_mode<synchronous>, transform_indices = @transform_8, window_bounds = array<i64: 256, 256>}, {pipeline_mode = #tpu.pipeline_mode<synchronous>, transform_indices = @transform_9, window_bounds = array<i64: 16, 256>}, {pipeline_mode = #tpu.pipeline_mode<synchronous>, transform_indices = @transform_10, window_bounds = array<i64: 16, 256>}]} {
    %c0 = arith.constant 0 : index
    %c0_0 = arith.constant 0 : index
    %0 = vector.load %arg8[%c0, %c0_0] : memref<1x256xf32, #tpu.memory_space<vmem>>, vector<1x256xf32>
    %c0_1 = arith.constant 0 : index
    %c0_2 = arith.constant 0 : index
    %1 = vector.load %arg1[%c0_1, %c0_2] : memref<8x256xf32, #tpu.memory_space<vmem>>, vector<8x256xf32>
    %c0_3 = arith.constant 0 : index
    %c0_4 = arith.constant 0 : index
    %2 = vector.load %arg2[%c0_3, %c0_4] : memref<16x72xf32, #tpu.memory_space<vmem>>, vector<16x72xf32>
    %3 = vector.extract_strided_slice %1 {offsets = [0, 245], sizes = [8, 11], strides = [1, 1]} : vector<8x256xf32> to vector<8x11xf32>
    %4 = vector.extract_strided_slice %1 {offsets = [0, 0], sizes = [8, 245], strides = [1, 1]} : vector<8x256xf32> to vector<8x245xf32>
    %5 = tpu.concatenate %3, %4 in 1 : vector<8x11xf32>, vector<8x245xf32> -> vector<8x256xf32>
    %6 = vector.extract_strided_slice %1 {offsets = [0, 246], sizes = [8, 10], strides = [1, 1]} : vector<8x256xf32> to vector<8x10xf32>
    %7 = vector.extract_strided_slice %1 {offsets = [0, 0], sizes = [8, 246], strides = [1, 1]} : vector<8x256xf32> to vector<8x246xf32>
    %8 = tpu.concatenate %6, %7 in 1 : vector<8x10xf32>, vector<8x246xf32> -> vector<8x256xf32>
    %9 = vector.extract_strided_slice %1 {offsets = [0, 247], sizes = [8, 9], strides = [1, 1]} : vector<8x256xf32> to vector<8x9xf32>
    %10 = vector.extract_strided_slice %1 {offsets = [0, 0], sizes = [8, 247], strides = [1, 1]} : vector<8x256xf32> to vector<8x247xf32>
    %11 = tpu.concatenate %9, %10 in 1 : vector<8x9xf32>, vector<8x247xf32> -> vector<8x256xf32>
    %12 = vector.extract_strided_slice %1 {offsets = [0, 255], sizes = [8, 1], strides = [1, 1]} : vector<8x256xf32> to vector<8x1xf32>
    %13 = vector.extract_strided_slice %1 {offsets = [0, 0], sizes = [8, 255], strides = [1, 1]} : vector<8x256xf32> to vector<8x255xf32>
    %14 = tpu.concatenate %12, %13 in 1 : vector<8x1xf32>, vector<8x255xf32> -> vector<8x256xf32>
    %15 = vector.extract_strided_slice %1 {offsets = [0, 1], sizes = [8, 255], strides = [1, 1]} : vector<8x256xf32> to vector<8x255xf32>
    %16 = vector.extract_strided_slice %1 {offsets = [0, 0], sizes = [8, 1], strides = [1, 1]} : vector<8x256xf32> to vector<8x1xf32>
    %17 = tpu.concatenate %15, %16 in 1 : vector<8x255xf32>, vector<8x1xf32> -> vector<8x256xf32>
    %18 = vector.extract_strided_slice %1 {offsets = [0, 9], sizes = [8, 247], strides = [1, 1]} : vector<8x256xf32> to vector<8x247xf32>
    %19 = vector.extract_strided_slice %1 {offsets = [0, 0], sizes = [8, 9], strides = [1, 1]} : vector<8x256xf32> to vector<8x9xf32>
    %20 = tpu.concatenate %18, %19 in 1 : vector<8x247xf32>, vector<8x9xf32> -> vector<8x256xf32>
    %21 = vector.extract_strided_slice %1 {offsets = [0, 10], sizes = [8, 246], strides = [1, 1]} : vector<8x256xf32> to vector<8x246xf32>
    %22 = vector.extract_strided_slice %1 {offsets = [0, 0], sizes = [8, 10], strides = [1, 1]} : vector<8x256xf32> to vector<8x10xf32>
    %23 = tpu.concatenate %21, %22 in 1 : vector<8x246xf32>, vector<8x10xf32> -> vector<8x256xf32>
    %24 = vector.extract_strided_slice %1 {offsets = [0, 11], sizes = [8, 245], strides = [1, 1]} : vector<8x256xf32> to vector<8x245xf32>
    %25 = vector.extract_strided_slice %1 {offsets = [0, 0], sizes = [8, 11], strides = [1, 1]} : vector<8x256xf32> to vector<8x11xf32>
    %26 = tpu.concatenate %24, %25 in 1 : vector<8x245xf32>, vector<8x11xf32> -> vector<8x256xf32>
    %27 = tpu.concatenate %5, %8, %11, %14, %1, %17, %20, %23, %26 in 0 : vector<8x256xf32>, vector<8x256xf32>, vector<8x256xf32>, vector<8x256xf32>, vector<8x256xf32>, vector<8x256xf32>, vector<8x256xf32>, vector<8x256xf32>, vector<8x256xf32> -> vector<72x256xf32>
    %cst = arith.constant dense<0.000000e+00> : vector<16x256xf32>
    %28 = tpu.matmul %2, %27, %cst {dimension_numbers = #tpu.dot_dimension_numbers<[1], [0], [0], [1], [0, 0, 1, 1], [], []>} : vector<16x72xf32>, vector<72x256xf32>, vector<16x256xf32> -> vector<16x256xf32>
    %c0_5 = arith.constant 0 : index
    %c0_6 = arith.constant 0 : index
    %29 = vector.load %arg3[%c0_5, %c0_6] : memref<16x1xf32, #tpu.memory_space<vmem>>, vector<16x1xf32>
    %c0_7 = arith.constant 0 : index
    %c0_8 = arith.constant 0 : index
    %30 = vector.load %arg4[%c0_7, %c0_8] : memref<16x1xf32, #tpu.memory_space<vmem>>, vector<16x1xf32>
    %31 = vector.broadcast %0 : vector<1x256xf32> to vector<16x256xf32>
    %32 = arith.mulf %28, %31 : vector<16x256xf32>
    %cst_9 = arith.constant dense<0.000000e+00> : vector<16xf32>
    %33 = vector.multi_reduction <add>, %32, %cst_9 [1] : vector<16x256xf32> to vector<16xf32>
    %34 = vector.shape_cast %33 : vector<16xf32> to vector<16x1xf32>
    %cst_10 = arith.constant 7.812500e-03 : f32
    %35 = vector.broadcast %cst_10 : f32 to vector<16x1xf32>
    %36 = arith.mulf %34, %35 : vector<16x1xf32>
    %37 = arith.mulf %32, %28 : vector<16x256xf32>
    %cst_11 = arith.constant dense<0.000000e+00> : vector<16xf32>
    %38 = vector.multi_reduction <add>, %37, %cst_11 [1] : vector<16x256xf32> to vector<16xf32>
    %39 = vector.shape_cast %38 : vector<16xf32> to vector<16x1xf32>
    %cst_12 = arith.constant 7.812500e-03 : f32
    %40 = vector.broadcast %cst_12 : f32 to vector<16x1xf32>
    %41 = arith.mulf %39, %40 : vector<16x1xf32>
    %42 = arith.mulf %36, %36 : vector<16x1xf32>
    %43 = arith.subf %41, %42 : vector<16x1xf32>
    %cst_13 = arith.constant 0.000000e+00 : f32
    %44 = vector.broadcast %cst_13 : f32 to vector<16x1xf32>
    %45 = arith.maximumf %43, %44 : vector<16x1xf32>
    %cst_14 = arith.constant 9.99999974E-6 : f32
    %46 = vector.broadcast %cst_14 : f32 to vector<16x1xf32>
    %47 = arith.addf %45, %46 : vector<16x1xf32>
    %48 = math.rsqrt %47 : vector<16x1xf32>
    %49 = arith.mulf %29, %48 : vector<16x1xf32>
    %50 = arith.mulf %36, %49 : vector<16x1xf32>
    %51 = arith.subf %30, %50 : vector<16x1xf32>
    %52 = vector.broadcast %49 : vector<16x1xf32> to vector<16x256xf32>
    %53 = arith.mulf %28, %52 : vector<16x256xf32>
    %54 = vector.broadcast %51 : vector<16x1xf32> to vector<16x256xf32>
    %55 = arith.addf %53, %54 : vector<16x256xf32>
    %cst_15 = arith.constant 0.000000e+00 : f32
    %56 = vector.broadcast %cst_15 : f32 to vector<16x256xf32>
    %57 = arith.maximumf %55, %56 : vector<16x256xf32>
    %58 = vector.broadcast %0 : vector<1x256xf32> to vector<16x256xf32>
    %59 = arith.mulf %57, %58 : vector<16x256xf32>
    %c0_16 = arith.constant 0 : index
    %c0_17 = arith.constant 0 : index
    %60 = vector.load %arg5[%c0_16, %c0_17] : memref<16x144xf32, #tpu.memory_space<vmem>>, vector<16x144xf32>
    %61 = vector.extract_strided_slice %59 {offsets = [0, 245], sizes = [16, 11], strides = [1, 1]} : vector<16x256xf32> to vector<16x11xf32>
    %62 = vector.extract_strided_slice %59 {offsets = [0, 0], sizes = [16, 245], strides = [1, 1]} : vector<16x256xf32> to vector<16x245xf32>
    %63 = tpu.concatenate %61, %62 in 1 : vector<16x11xf32>, vector<16x245xf32> -> vector<16x256xf32>
    %64 = vector.extract_strided_slice %59 {offsets = [0, 246], sizes = [16, 10], strides = [1, 1]} : vector<16x256xf32> to vector<16x10xf32>
    %65 = vector.extract_strided_slice %59 {offsets = [0, 0], sizes = [16, 246], strides = [1, 1]} : vector<16x256xf32> to vector<16x246xf32>
    %66 = tpu.concatenate %64, %65 in 1 : vector<16x10xf32>, vector<16x246xf32> -> vector<16x256xf32>
    %67 = vector.extract_strided_slice %59 {offsets = [0, 247], sizes = [16, 9], strides = [1, 1]} : vector<16x256xf32> to vector<16x9xf32>
    %68 = vector.extract_strided_slice %59 {offsets = [0, 0], sizes = [16, 247], strides = [1, 1]} : vector<16x256xf32> to vector<16x247xf32>
    %69 = tpu.concatenate %67, %68 in 1 : vector<16x9xf32>, vector<16x247xf32> -> vector<16x256xf32>
    %70 = vector.extract_strided_slice %59 {offsets = [0, 255], sizes = [16, 1], strides = [1, 1]} : vector<16x256xf32> to vector<16x1xf32>
    %71 = vector.extract_strided_slice %59 {offsets = [0, 0], sizes = [16, 255], strides = [1, 1]} : vector<16x256xf32> to vector<16x255xf32>
    %72 = tpu.concatenate %70, %71 in 1 : vector<16x1xf32>, vector<16x255xf32> -> vector<16x256xf32>
    %73 = vector.extract_strided_slice %59 {offsets = [0, 1], sizes = [16, 255], strides = [1, 1]} : vector<16x256xf32> to vector<16x255xf32>
    %74 = vector.extract_strided_slice %59 {offsets = [0, 0], sizes = [16, 1], strides = [1, 1]} : vector<16x256xf32> to vector<16x1xf32>
    %75 = tpu.concatenate %73, %74 in 1 : vector<16x255xf32>, vector<16x1xf32> -> vector<16x256xf32>
    %76 = vector.extract_strided_slice %59 {offsets = [0, 9], sizes = [16, 247], strides = [1, 1]} : vector<16x256xf32> to vector<16x247xf32>
    %77 = vector.extract_strided_slice %59 {offsets = [0, 0], sizes = [16, 9], strides = [1, 1]} : vector<16x256xf32> to vector<16x9xf32>
    %78 = tpu.concatenate %76, %77 in 1 : vector<16x247xf32>, vector<16x9xf32> -> vector<16x256xf32>
    %79 = vector.extract_strided_slice %59 {offsets = [0, 10], sizes = [16, 246], strides = [1, 1]} : vector<16x256xf32> to vector<16x246xf32>
    %80 = vector.extract_strided_slice %59 {offsets = [0, 0], sizes = [16, 10], strides = [1, 1]} : vector<16x256xf32> to vector<16x10xf32>
    %81 = tpu.concatenate %79, %80 in 1 : vector<16x246xf32>, vector<16x10xf32> -> vector<16x256xf32>
    %82 = vector.extract_strided_slice %59 {offsets = [0, 11], sizes = [16, 245], strides = [1, 1]} : vector<16x256xf32> to vector<16x245xf32>
    %83 = vector.extract_strided_slice %59 {offsets = [0, 0], sizes = [16, 11], strides = [1, 1]} : vector<16x256xf32> to vector<16x11xf32>
    %84 = tpu.concatenate %82, %83 in 1 : vector<16x245xf32>, vector<16x11xf32> -> vector<16x256xf32>
    %85 = tpu.concatenate %63, %66, %69, %72, %59, %75, %78, %81, %84 in 0 : vector<16x256xf32>, vector<16x256xf32>, vector<16x256xf32>, vector<16x256xf32>, vector<16x256xf32>, vector<16x256xf32>, vector<16x256xf32>, vector<16x256xf32>, vector<16x256xf32> -> vector<144x256xf32>
    %cst_18 = arith.constant dense<0.000000e+00> : vector<16x256xf32>
    %86 = tpu.matmul %60, %85, %cst_18 {dimension_numbers = #tpu.dot_dimension_numbers<[1], [0], [0], [1], [0, 0, 1, 1], [], []>} : vector<16x144xf32>, vector<144x256xf32>, vector<16x256xf32> -> vector<16x256xf32>
    %c0_19 = arith.constant 0 : index
    %c0_20 = arith.constant 0 : index
    %87 = vector.load %arg6[%c0_19, %c0_20] : memref<16x1xf32, #tpu.memory_space<vmem>>, vector<16x1xf32>
    %c0_21 = arith.constant 0 : index
    %c0_22 = arith.constant 0 : index
    %88 = vector.load %arg7[%c0_21, %c0_22] : memref<16x1xf32, #tpu.memory_space<vmem>>, vector<16x1xf32>
    %89 = vector.broadcast %0 : vector<1x256xf32> to vector<16x256xf32>
    %90 = arith.mulf %86, %89 : vector<16x256xf32>
    %cst_23 = arith.constant dense<0.000000e+00> : vector<16xf32>
    %91 = vector.multi_reduction <add>, %90, %cst_23 [1] : vector<16x256xf32> to vector<16xf32>
    %92 = vector.shape_cast %91 : vector<16xf32> to vector<16x1xf32>
    %cst_24 = arith.constant 7.812500e-03 : f32
    %93 = vector.broadcast %cst_24 : f32 to vector<16x1xf32>
    %94 = arith.mulf %92, %93 : vector<16x1xf32>
    %95 = arith.mulf %90, %86 : vector<16x256xf32>
    %cst_25 = arith.constant dense<0.000000e+00> : vector<16xf32>
    %96 = vector.multi_reduction <add>, %95, %cst_25 [1] : vector<16x256xf32> to vector<16xf32>
    %97 = vector.shape_cast %96 : vector<16xf32> to vector<16x1xf32>
    %cst_26 = arith.constant 7.812500e-03 : f32
    %98 = vector.broadcast %cst_26 : f32 to vector<16x1xf32>
    %99 = arith.mulf %97, %98 : vector<16x1xf32>
    %100 = arith.mulf %94, %94 : vector<16x1xf32>
    %101 = arith.subf %99, %100 : vector<16x1xf32>
    %cst_27 = arith.constant 0.000000e+00 : f32
    %102 = vector.broadcast %cst_27 : f32 to vector<16x1xf32>
    %103 = arith.maximumf %101, %102 : vector<16x1xf32>
    %cst_28 = arith.constant 9.99999974E-6 : f32
    %104 = vector.broadcast %cst_28 : f32 to vector<16x1xf32>
    %105 = arith.addf %103, %104 : vector<16x1xf32>
    %106 = math.rsqrt %105 : vector<16x1xf32>
    %107 = arith.mulf %87, %106 : vector<16x1xf32>
    %108 = arith.mulf %94, %107 : vector<16x1xf32>
    %109 = arith.subf %88, %108 : vector<16x1xf32>
    %110 = vector.broadcast %107 : vector<16x1xf32> to vector<16x256xf32>
    %111 = arith.mulf %86, %110 : vector<16x256xf32>
    %112 = vector.broadcast %109 : vector<16x1xf32> to vector<16x256xf32>
    %113 = arith.addf %111, %112 : vector<16x256xf32>
    %cst_29 = arith.constant 0.000000e+00 : f32
    %114 = vector.broadcast %cst_29 : f32 to vector<16x256xf32>
    %115 = arith.maximumf %113, %114 : vector<16x256xf32>
    %116 = vector.broadcast %0 : vector<1x256xf32> to vector<16x256xf32>
    %117 = arith.mulf %115, %116 : vector<16x256xf32>
    %c0_30 = arith.constant 0 : index
    %c0_31 = arith.constant 0 : index
    %118 = vector.load %arg10[%c0_30, %c0_31] : memref<16x256xf32, #tpu.memory_space<vmem>>, vector<16x256xf32>
    tpu.vector_store %arg10[%c0_30, %c0_31], %117 {strides = array<i32>} : memref<16x256xf32, #tpu.memory_space<vmem>>, vector<16x256xf32>,
    %119 = vector.extract_strided_slice %117 {offsets = [0, 1], sizes = [16, 255], strides = [1, 1]} : vector<16x256xf32> to vector<16x255xf32>
    %120 = vector.extract_strided_slice %117 {offsets = [0, 0], sizes = [16, 1], strides = [1, 1]} : vector<16x256xf32> to vector<16x1xf32>
    %121 = tpu.concatenate %119, %120 in 1 : vector<16x255xf32>, vector<16x1xf32> -> vector<16x256xf32>
    %122 = arith.maximumf %117, %121 : vector<16x256xf32>
    %123 = vector.extract_strided_slice %117 {offsets = [0, 10], sizes = [16, 246], strides = [1, 1]} : vector<16x256xf32> to vector<16x246xf32>
    %124 = vector.extract_strided_slice %117 {offsets = [0, 0], sizes = [16, 10], strides = [1, 1]} : vector<16x256xf32> to vector<16x10xf32>
    %125 = tpu.concatenate %123, %124 in 1 : vector<16x246xf32>, vector<16x10xf32> -> vector<16x256xf32>
    %126 = vector.extract_strided_slice %117 {offsets = [0, 11], sizes = [16, 245], strides = [1, 1]} : vector<16x256xf32> to vector<16x245xf32>
    %127 = vector.extract_strided_slice %117 {offsets = [0, 0], sizes = [16, 11], strides = [1, 1]} : vector<16x256xf32> to vector<16x11xf32>
    %128 = tpu.concatenate %126, %127 in 1 : vector<16x245xf32>, vector<16x11xf32> -> vector<16x256xf32>
    %129 = arith.maximumf %125, %128 : vector<16x256xf32>
    %130 = arith.maximumf %122, %129 : vector<16x256xf32>
    %c0_32 = arith.constant 0 : index
    %c0_33 = arith.constant 0 : index
    %131 = vector.load %arg9[%c0_32, %c0_33] : memref<256x256xf32, #tpu.memory_space<vmem>>, vector<256x256xf32>
    %cst_34 = arith.constant dense<0.000000e+00> : vector<16x256xf32>
    %132 = tpu.matmul %130, %131, %cst_34 {dimension_numbers = #tpu.dot_dimension_numbers<[1], [0], [0], [1], [0, 0, 1, 1], [], []>} : vector<16x256xf32>, vector<256x256xf32>, vector<16x256xf32> -> vector<16x256xf32>
    %c0_35 = arith.constant 0 : index
    %c0_36 = arith.constant 0 : index
    %133 = vector.load %arg11[%c0_35, %c0_36] : memref<16x256xf32, #tpu.memory_space<vmem>>, vector<16x256xf32>
    tpu.vector_store %arg11[%c0_35, %c0_36], %132 {strides = array<i32>} : memref<16x256xf32, #tpu.memory_space<vmem>>, vector<16x256xf32>,
    return
  }
  func.func @transform_0(%arg0: i32) -> (i32, i32) {
    %c0_i32 = arith.constant 0 : i32
    %c0_i32_0 = arith.constant 0 : i32
    %c0_i32_1 = arith.constant 0 : i32
    return %c0_i32, %c0_i32_0 : i32, i32
  }
  func.func @transform_1(%arg0: i32) -> (i32, i32) {
    %c0_i32 = arith.constant 0 : i32
    %c0_i32_0 = arith.constant 0 : i32
    %c0_i32_1 = arith.constant 0 : i32
    return %c0_i32, %c0_i32_0 : i32, i32
  }
  func.func @transform_2(%arg0: i32) -> (i32, i32) {
    %c0_i32 = arith.constant 0 : i32
    %c0_i32_0 = arith.constant 0 : i32
    %c0_i32_1 = arith.constant 0 : i32
    return %c0_i32, %c0_i32_0 : i32, i32
  }
  func.func @transform_3(%arg0: i32) -> (i32, i32) {
    %c0_i32 = arith.constant 0 : i32
    %c0_i32_0 = arith.constant 0 : i32
    %c0_i32_1 = arith.constant 0 : i32
    return %c0_i32, %c0_i32_0 : i32, i32
  }
  func.func @transform_4(%arg0: i32) -> (i32, i32) {
    %c0_i32 = arith.constant 0 : i32
    %c0_i32_0 = arith.constant 0 : i32
    %c0_i32_1 = arith.constant 0 : i32
    return %c0_i32, %c0_i32_0 : i32, i32
  }
  func.func @transform_5(%arg0: i32) -> (i32, i32) {
    %c0_i32 = arith.constant 0 : i32
    %c0_i32_0 = arith.constant 0 : i32
    %c0_i32_1 = arith.constant 0 : i32
    return %c0_i32, %c0_i32_0 : i32, i32
  }
  func.func @transform_6(%arg0: i32) -> (i32, i32) {
    %c0_i32 = arith.constant 0 : i32
    %c0_i32_0 = arith.constant 0 : i32
    %c0_i32_1 = arith.constant 0 : i32
    return %c0_i32, %c0_i32_0 : i32, i32
  }
  func.func @transform_7(%arg0: i32) -> (i32, i32) {
    %c0_i32 = arith.constant 0 : i32
    %c0_i32_0 = arith.constant 0 : i32
    %c0_i32_1 = arith.constant 0 : i32
    return %c0_i32, %c0_i32_0 : i32, i32
  }
  func.func @transform_8(%arg0: i32) -> (i32, i32) {
    %c0_i32 = arith.constant 0 : i32
    %c0_i32_0 = arith.constant 0 : i32
    %c0_i32_1 = arith.constant 0 : i32
    return %c0_i32, %c0_i32_0 : i32, i32
  }
  func.func @transform_9(%arg0: i32) -> (i32, i32) {
    %c0_i32 = arith.constant 0 : i32
    %c0_i32_0 = arith.constant 0 : i32
    %c0_i32_1 = arith.constant 0 : i32
    return %c0_i32, %c0_i32_0 : i32, i32
  }
  func.func @transform_10(%arg0: i32) -> (i32, i32) {
    %c0_i32 = arith.constant 0 : i32
    %c0_i32_0 = arith.constant 0 : i32
    %c0_i32_1 = arith.constant 0 : i32
    return %c0_i32, %c0_i32_0 : i32, i32
  }
}

</mosaic_0001>

<llo_original>
// kernel: _lambda_.3
$region0: #{_lambda_.3}
  #allocation0 [shape = 'u32[]', space=smem, size = 0x4, offset = 0x4, fixed_abs, tag = 'smem constant byte address 0x4 - core index']
  #allocation1 [shape = 'u32[144,128]{1,0:T(1,128)}', space=vmem, size = 0x12000, scoped, tag = 'internal scratch']
  %s0 = inlined_call_operand.vmem [shape: f32[8,256], index: 0, kind: input, shape index: {}]
  %s1 = inlined_call_operand.vmem [shape: f32[16,72], index: 1, kind: input, shape index: {}]
  %s2 = inlined_call_operand.vmem [shape: f32[16,1], index: 2, kind: input, shape index: {}, may-alias: {2,5}]
  %s3 = inlined_call_operand.vmem [shape: f32[16,1], index: 3, kind: input, shape index: {}, may-alias: {3,6}]
  %s4 = inlined_call_operand.vmem [shape: f32[16,144], index: 4, kind: input, shape index: {}]
  %s5 = inlined_call_operand.vmem [shape: f32[16,1], index: 5, kind: input, shape index: {}, may-alias: {2,5}]
  %s6 = inlined_call_operand.vmem [shape: f32[16,1], index: 6, kind: input, shape index: {}, may-alias: {3,6}]
  %s7 = inlined_call_operand.vmem [shape: f32[1,256], index: 7, kind: input, shape index: {}]
  %s8 = inlined_call_operand.vmem [shape: f32[256,256], index: 8, kind: input, shape index: {}]
  %s9 = inlined_call_operand.vmem [shape: f32[16,256], index: 9, kind: output, shape index: {0}]
  %s10 = inlined_call_operand.vmem [shape: f32[16,256], index: 10, kind: output, shape index: {1}]
  %11 = xla_tuple %s9, %s10
  %s12 = sld [smem:[#allocation0]]
  $region54: #{_lambda_.3} parent=0
    _
  %s14 = ssub.s32 1, %s12
  %s15 = scalar_select 0, %s14, %s12
  // Predicated region
  $region2: #{_lambda_.3} parent=0 // pred_check
    _
  $region3: #{_lambda_.3} parent=0 // pred_check_branch
    %17 = sbr.rel (0) target = $region5
  $region4: #{_lambda_.3} parent=0 // pred_region
    _
  $region5: #{_lambda_.3} parent=0 // pred_fallthru
    _
  // Predicated region
  $region6: #{_lambda_.3} parent=0 // pred_check
    _
  $region7: #{_lambda_.3} parent=0 // pred_check_branch
    %19 = sbr.rel (0) target = $region9
  $region8: #{_lambda_.3} parent=0 // pred_region
    _
  $region9: #{_lambda_.3} parent=0 // pred_fallthru
    _
  // Predicated region
  $region10: #{_lambda_.3} parent=0 // pred_check
    _
  $region11: #{_lambda_.3} parent=0 // pred_check_branch
    %21 = sbr.rel (0) target = $region13
  $region12: #{_lambda_.3} parent=0 // pred_region
    _
  $region13: #{_lambda_.3} parent=0 // pred_fallthru
    _
  // Predicated region
  $region14: #{_lambda_.3} parent=0 // pred_check
    _
  $region15: #{_lambda_.3} parent=0 // pred_check_branch
    %23 = sbr.rel (0) target = $region17
  $region16: #{_lambda_.3} parent=0 // pred_region
    _
  $region17: #{_lambda_.3} parent=0 // pred_fallthru
    _
  // Predicated region
  $region18: #{_lambda_.3} parent=0 // pred_check
    _
  $region19: #{_lambda_.3} parent=0 // pred_check_branch
    %25 = sbr.rel (0) target = $region21
  $region20: #{_lambda_.3} parent=0 // pred_region
    _
  $region21: #{_lambda_.3} parent=0 // pred_fallthru
    _
  // Predicated region
  $region22: #{_lambda_.3} parent=0 // pred_check
    _
  $region23: #{_lambda_.3} parent=0 // pred_check_branch
    %27 = sbr.rel (0) target = $region25
  $region24: #{_lambda_.3} parent=0 // pred_region
    _
  $region25: #{_lambda_.3} parent=0 // pred_fallthru
    _
  // Predicated region
  $region26: #{_lambda_.3} parent=0 // pred_check
    _
  $region27: #{_lambda_.3} parent=0 // pred_check_branch
    %29 = sbr.rel (0) target = $region29
  $region28: #{_lambda_.3} parent=0 // pred_region
    _
  $region29: #{_lambda_.3} parent=0 // pred_fallthru
    _
  // Predicated region
  $region30: #{_lambda_.3} parent=0 // pred_check
    _
  $region31: #{_lambda_.3} parent=0 // pred_check_branch
    %31 = sbr.rel (0) target = $region33
  $region32: #{_lambda_.3} parent=0 // pred_region
    _
  $region33: #{_lambda_.3} parent=0 // pred_fallthru
    _
  // Predicated region
  $region34: #{_lambda_.3} parent=0 // pred_check
    _
  $region35: #{_lambda_.3} parent=0 // pred_check_branch
    %33 = sbr.rel (0) target = $region37
  $region36: #{_lambda_.3} parent=0 // pred_region
    _
  $region37: #{_lambda_.3} parent=0 // pred_fallthru
    _
  %v34 = vld [vmem:[%s7] sm:$0x3]
  %v35 = vld [vmem:[%s0] sm:$0xff]
  %v36 = vld [vmem:[%s0 + $0x8] sm:$0xff]
  %v37 = vld [vmem:[%s1] sm:$0xff]
  %v38 = vld [vmem:[%s1 + $0x8] sm:$0xff]
  %40 = vrot.lane.b32.xlu0 %v36, 11
  %v41 = vpop.permute.xlu0 %40
  %44 = vrot.lane.b32.xlu0 %v35, 11
  %v45 = vpop.permute.xlu0 %44
  %vm46 = vcmask 89088
  %v47 = vsel %vm46, %v45, %v41
  %v50 = vsel %vm46, %v41, %v45
  %51 = vrot.lane.b32.xlu0 %v36, 10
  %v52 = vpop.permute.xlu0 %51
  %54 = vrot.lane.b32.xlu0 %v35, 10
  %v55 = vpop.permute.xlu0 %54
  %vm56 = vcmask 80896
  %v57 = vsel %vm56, %v55, %v52
  %v60 = vsel %vm56, %v52, %v55
  %61 = vrot.lane.b32.xlu0 %v36, 9
  %v62 = vpop.permute.xlu0 %61
  %64 = vrot.lane.b32.xlu0 %v35, 9
  %v65 = vpop.permute.xlu0 %64
  %vm66 = vcmask 72704
  %v67 = vsel %vm66, %v65, %v62
  %v70 = vsel %vm66, %v62, %v65
  %71 = vrot.lane.b32.xlu0 %v36, 1
  %v72 = vpop.permute.xlu0 %71
  %74 = vrot.lane.b32.xlu0 %v35, 1
  %v75 = vpop.permute.xlu0 %74
  %vm76 = vcmask 7168
  %v77 = vsel %vm76, %v75, %v72
  %v80 = vsel %vm76, %v72, %v75
  %81 = vrot.lane.b32.xlu0 %v35, 127
  %v82 = vpop.permute.xlu0 %81
  %83 = vrot.lane.b32.xlu0 %v36, 127
  %v84 = vpop.permute.xlu0 %83
  %vm85 = vcmask 1039360
  %v86 = vsel %vm85, %v82, %v84
  %v90 = vsel %vm85, %v84, %v82
  %91 = vrot.lane.b32.xlu0 %v35, 119
  %v92 = vpop.permute.xlu0 %91
  %93 = vrot.lane.b32.xlu0 %v36, 119
  %v94 = vpop.permute.xlu0 %93
  %vm95 = vcmask 973824
  %v96 = vsel %vm95, %v92, %v94
  %v100 = vsel %vm95, %v94, %v92
  %101 = vrot.lane.b32.xlu0 %v35, 118
  %v102 = vpop.permute.xlu0 %101
  %103 = vrot.lane.b32.xlu0 %v36, 118
  %v104 = vpop.permute.xlu0 %103
  %vm105 = vcmask 965632
  %v106 = vsel %vm105, %v102, %v104
  %v110 = vsel %vm105, %v104, %v102
  %111 = vrot.lane.b32.xlu0 %v35, 117
  %v112 = vpop.permute.xlu0 %111
  %113 = vrot.lane.b32.xlu0 %v36, 117
  %v114 = vpop.permute.xlu0 %113
  %vm115 = vcmask 957440
  %v116 = vsel %vm115, %v112, %v114
  %v120 = vsel %vm115, %v114, %v112
  %vm121 = vcmask 588800
  %v123 = vsel %vm121, %v37, 0
  %v126 = vsel %vm121, %v38, 0
  %128 = vmatprep.subr.mxu0 %v47
  %129 = vmatpush1.msra.mxu0 %v50
  %130 = vmatprep.subr.mxu0 %v57
  %131 = vmatpush1.msra.mxu0 %v60
  %132 = vmatprep.subr.mxu0 %v67
  %133 = vmatpush1.msra.mxu0 %v70
  %134 = vmatprep.subr.mxu0 %v77
  %135 = vmatpush1.msra.mxu0 %v80
  %136 = vmatprep.subr.mxu0 %v36
  %137 = vmatpush1.msra.mxu0 %v35
  %138 = vmatprep.subr.mxu0 %v90
  %139 = vmatpush1.msra.mxu0 %v86
  %140 = vmatprep.subr.mxu0 %v100
  %141 = vmatpush1.msra.mxu0 %v96
  %142 = vmatprep.subr.mxu0 %v110
  %143 = vmatpush1.msra.mxu0 %v106
  %144 = vmatprep.subr.mxu0 %v120
  %145 = vmatpush1.msra.mxu0 %v116
  %146 = vmatprep.subr.mxu0 0.0
  %147 = vmatpush1.msra.mxu0 0.0
  %148 = vmatprep.subr.mxu0 0.0
  %149 = vmatpush1.msra.mxu0 0.0
  %150 = vmatprep.subr.mxu0 0.0
  %151 = vmatpush1.msra.mxu0 0.0
  %152 = vmatprep.subr.mxu0 0.0
  %153 = vmatpush1.msra.mxu0 0.0
  %154 = vmatprep.subr.mxu0 0.0
  %155 = vmatpush1.msra.mxu0 0.0
  %156 = vmatprep.subr.mxu0 0.0
  %157 = vmatpush1.msra.mxu0 0.0
  %158 = vmatprep.subr.mxu0 0.0
  %159 = vmatpush1.msra.mxu0 0.0
  %160 = vmatprep.subr.mxu0 0.0
  %161 = vmatpush1.msra.mxu0 0.0
  %162 = vmatprep.subr.mxu0 0.0
  %163 = vmatpush1.msra.mxu0 0.0
  %164 = vmatprep.subr.mxu0 0.0
  %165 = vmatpush1.msra.mxu0 0.0
  %166 = vmatprep.subr.mxu0 0.0
  %167 = vmatpush1.msra.mxu0 0.0
  %168 = vmatprep.subr.mxu0 0.0
  %169 = vmatpush1.msra.mxu0 0.0
  %170 = vmatprep.subr.mxu0 0.0
  %171 = vmatpush1.msra.mxu0 0.0
  %172 = vmatprep.subr.mxu0 0.0
  %173 = vmatpush1.msra.mxu0 0.0
  %174 = vmatprep.subr.mxu0 0.0
  %175 = vmatpush1.msra.mxu0 0.0
  %176 = vmatprep.subr.mxu0 0.0
  %177 = vmatpush1.msra.mxu0 0.0
  %178 = vmatprep.subr.mxu0 0.0
  %179 = vmatpush1.msra.mxu0 0.0
  %180 = vmatprep.subr.mxu0 0.0
  %181 = vmatpush1.msra.mxu0 0.0
  %182 = vmatprep.subr.mxu0 0.0
  %183 = vmatpush1.msra.mxu0 0.0
  %184 = vmatprep.subr.mxu0 0.0
  %185 = vmatpush1.msra.mxu0 0.0
  %186 = vmatprep.subr.mxu0 0.0
  %187 = vmatpush1.msra.mxu0 0.0
  %188 = vmatprep.subr.mxu0 0.0
  %189 = vmatpush1.msra.mxu0 0.0
  %190 = vmatprep.subr.mxu0 0.0
  %191 = vmatpush1.msra.mxu0 0.0
  %192 = vmatprep.mubr.f32.mxu0 0.0
  %193 = vmatmul.mubr.f32.gmra.mrb[0].mxu0 %v123
  %v194 = vpop.f32.mrb[0].mxu0
  %v195 = vadd.f32 0.0, %v194
  %v196 = vpop.f32.mrb[0].mxu0
  %v197 = vadd.f32 0.0, %v196
  %198 = vmatprep.mubr.f32.mxu0 0.0
  %199 = vmatmul.mubr.f32.gmra.mrb[0].mxu0 %v126
  %v200 = vpop.f32.mrb[0].mxu0
  %v201 = vadd.f32 0.0, %v200
  %v202 = vpop.f32.mrb[0].mxu0
  %v203 = vadd.f32 0.0, %v202
  %204 = vdwg.mxu0
  %v205 = vld [vmem:[%s2] sm:$0xff]
  %v206 = vld [vmem:[%s2 + $0x8] sm:$0xff]
  %v207 = vld [vmem:[%s3] sm:$0xff]
  %v208 = vld [vmem:[%s3 + $0x8] sm:$0xff]
  %v210 = vlaneseq
  %v211 = vshrl.u32 %v210, 7
  %v212 = vsub.s32 0, %v211
  %v213 = vrot.slane %v34, %v212
  %v214 = vlaneseq
  %v215 = vshrl.u32 %v214, 7
  %v216 = vsub.s32 1, %v215
  %v217 = vrot.slane %v34, %v216
  %v220 = vmul.f32 %v195, %v213
  %v221 = vmul.f32 %v197, %v217
  %v222 = vmul.f32 %v201, %v213
  %v223 = vmul.f32 %v203, %v217
  %v224 = vadd.f32 %v220, %v221
  %225 = vadd.xlane.f32.xlu0 %v224
  %v226 = vpop.xlane.xlu0 %225
  %v227 = vadd.f32 %v222, %v223
  %228 = vadd.xlane.f32.xlu0 %v227
  %v229 = vpop.xlane.xlu0 %228
  %v230 = vmul.f32 %v226, 0.0078125
  %v231 = vmul.f32 %v229, 0.0078125
  %v232 = vmul.f32 %v220, %v195
  %v233 = vmul.f32 %v221, %v197
  %v234 = vmul.f32 %v222, %v201
  %v235 = vmul.f32 %v223, %v203
  %v236 = vadd.f32 %v232, %v233
  %237 = vadd.xlane.f32.xlu0 %v236
  %v238 = vpop.xlane.xlu0 %237
  %v239 = vadd.f32 %v234, %v235
  %240 = vadd.xlane.f32.xlu0 %v239
  %v241 = vpop.xlane.xlu0 %240
  %v242 = vmul.f32 %v238, 0.0078125
  %v243 = vmul.f32 %v241, 0.0078125
  %v244 = vmul.f32 %v230, %v230
  %v245 = vmul.f32 %v231, %v231
  %v246 = vsub.f32 %v242, %v244
  %v247 = vsub.f32 %v243, %v245
  %v248 = vmax.f32 %v246, 0.0
  %v249 = vmax.f32 %v247, 0.0
  %v250 = vadd.f32 %v248, 1e-05
  %v251 = vadd.f32 %v249, 1e-05
  %v252 = vrsqrt.pop %v250
  %v253 = vrsqrt.pop %v251
  %v254 = vmul.f32 %v205, %v252
  %v255 = vmul.f32 %v206, %v253
  %v256 = vmul.f32 %v230, %v254
  %v257 = vmul.f32 %v231, %v255
  %v258 = vsub.f32 %v207, %v256
  %v259 = vsub.f32 %v208, %v257
  %261 = vset.pattern.permute.xlu0 0
  %262 = vperm.xlu0 %261, %v254
  %v263 = vpop.permute.xlu0 %262
  %266 = vset.pattern.permute.xlu0 0
  %267 = vperm.xlu0 %266, %v255
  %v268 = vpop.permute.xlu0 %267
  %v270 = vmul.f32 %v195, %v263
  %v271 = vmul.f32 %v197, %v263
  %v272 = vmul.f32 %v201, %v268
  %v273 = vmul.f32 %v203, %v268
  %275 = vset.pattern.permute.xlu0 0
  %276 = vperm.xlu0 %275, %v258
  %v277 = vpop.permute.xlu0 %276
  %280 = vset.pattern.permute.xlu0 0
  %281 = vperm.xlu0 %280, %v259
  %v282 = vpop.permute.xlu0 %281
  %v284 = vadd.f32 %v270, %v277
  %v285 = vadd.f32 %v271, %v277
  %v286 = vadd.f32 %v272, %v282
  %v287 = vadd.f32 %v273, %v282
  %v288 = vmax.f32 %v284, 0.0
  %v289 = vmax.f32 %v285, 0.0
  %v290 = vmax.f32 %v286, 0.0
  %v291 = vmax.f32 %v287, 0.0
  %v292 = vmul.f32 %v288, %v213
  %v293 = vmul.f32 %v289, %v217
  %v294 = vmul.f32 %v290, %v213
  %v295 = vmul.f32 %v291, %v217
  %v296 = vld [vmem:[%s4] sm:$0xff]
  %v297 = vld [vmem:[%s4 + $0x8] sm:$0xff]
  %v298 = vld [vmem:[%s4 + $0x10] sm:$0xff]
  %v299 = vld [vmem:[%s4 + $0x18] sm:$0xff]
  %302 = vrot.lane.b32.xlu0 %v293, 11
  %v303 = vpop.permute.xlu0 %302
  %304 = vrot.lane.b32.xlu0 %v295, 11
  %v305 = vpop.permute.xlu0 %304
  %310 = vrot.lane.b32.xlu0 %v292, 11
  %v311 = vpop.permute.xlu0 %310
  %312 = vrot.lane.b32.xlu0 %v294, 11
  %v313 = vpop.permute.xlu0 %312
  %v314 = vsel %vm46, %v311, %v303
  %v315 = vsel %vm46, %v313, %v305
  %v320 = vsel %vm46, %v303, %v311
  %v321 = vsel %vm46, %v305, %v313
  %322 = vrot.lane.b32.xlu0 %v293, 10
  %v323 = vpop.permute.xlu0 %322
  %324 = vrot.lane.b32.xlu0 %v295, 10
  %v325 = vpop.permute.xlu0 %324
  %328 = vrot.lane.b32.xlu0 %v292, 10
  %v329 = vpop.permute.xlu0 %328
  %330 = vrot.lane.b32.xlu0 %v294, 10
  %v331 = vpop.permute.xlu0 %330
  %v332 = vsel %vm56, %v329, %v323
  %v333 = vsel %vm56, %v331, %v325
  %v338 = vsel %vm56, %v323, %v329
  %v339 = vsel %vm56, %v325, %v331
  %340 = vrot.lane.b32.xlu0 %v293, 9
  %v341 = vpop.permute.xlu0 %340
  %342 = vrot.lane.b32.xlu0 %v295, 9
  %v343 = vpop.permute.xlu0 %342
  %346 = vrot.lane.b32.xlu0 %v292, 9
  %v347 = vpop.permute.xlu0 %346
  %348 = vrot.lane.b32.xlu0 %v294, 9
  %v349 = vpop.permute.xlu0 %348
  %v350 = vsel %vm66, %v347, %v341
  %v351 = vsel %vm66, %v349, %v343
  %v356 = vsel %vm66, %v341, %v347
  %v357 = vsel %vm66, %v343, %v349
  %358 = vrot.lane.b32.xlu0 %v293, 1
  %v359 = vpop.permute.xlu0 %358
  %360 = vrot.lane.b32.xlu0 %v295, 1
  %v361 = vpop.permute.xlu0 %360
  %364 = vrot.lane.b32.xlu0 %v292, 1
  %v365 = vpop.permute.xlu0 %364
  %366 = vrot.lane.b32.xlu0 %v294, 1
  %v367 = vpop.permute.xlu0 %366
  %v368 = vsel %vm76, %v365, %v359
  %v369 = vsel %vm76, %v367, %v361
  %v374 = vsel %vm76, %v359, %v365
  %v375 = vsel %vm76, %v361, %v367
  %376 = vrot.lane.b32.xlu0 %v292, 127
  %v377 = vpop.permute.xlu0 %376
  %378 = vrot.lane.b32.xlu0 %v293, 127
  %v379 = vpop.permute.xlu0 %378
  %380 = vrot.lane.b32.xlu0 %v294, 127
  %v381 = vpop.permute.xlu0 %380
  %382 = vrot.lane.b32.xlu0 %v295, 127
  %v383 = vpop.permute.xlu0 %382
  %v384 = vsel %vm85, %v377, %v379
  %v385 = vsel %vm85, %v381, %v383
  %v392 = vsel %vm85, %v379, %v377
  %v393 = vsel %vm85, %v383, %v381
  %394 = vrot.lane.b32.xlu0 %v292, 119
  %v395 = vpop.permute.xlu0 %394
  %396 = vrot.lane.b32.xlu0 %v293, 119
  %v397 = vpop.permute.xlu0 %396
  %398 = vrot.lane.b32.xlu0 %v294, 119
  %v399 = vpop.permute.xlu0 %398
  %400 = vrot.lane.b32.xlu0 %v295, 119
  %v401 = vpop.permute.xlu0 %400
  %v402 = vsel %vm95, %v395, %v397
  %v403 = vsel %vm95, %v399, %v401
  %v410 = vsel %vm95, %v397, %v395
  %v411 = vsel %vm95, %v401, %v399
  %412 = vrot.lane.b32.xlu0 %v292, 118
  %v413 = vpop.permute.xlu0 %412
  %414 = vrot.lane.b32.xlu0 %v293, 118
  %v415 = vpop.permute.xlu0 %414
  %416 = vrot.lane.b32.xlu0 %v294, 118
  %v417 = vpop.permute.xlu0 %416
  %418 = vrot.lane.b32.xlu0 %v295, 118
  %v419 = vpop.permute.xlu0 %418
  %v420 = vsel %vm105, %v413, %v415
  %v421 = vsel %vm105, %v417, %v419
  %v428 = vsel %vm105, %v415, %v413
  %v429 = vsel %vm105, %v419, %v417
  %430 = vrot.lane.b32.xlu0 %v292, 117
  %v431 = vpop.permute.xlu0 %430
  %432 = vrot.lane.b32.xlu0 %v293, 117
  %v433 = vpop.permute.xlu0 %432
  %434 = vrot.lane.b32.xlu0 %v294, 117
  %v435 = vpop.permute.xlu0 %434
  %436 = vrot.lane.b32.xlu0 %v295, 117
  %v437 = vpop.permute.xlu0 %436
  %v438 = vsel %vm115, %v431, %v433
  %v439 = vsel %vm115, %v435, %v437
  %v446 = vsel %vm115, %v433, %v431
  %v447 = vsel %vm115, %v437, %v435
  %vm448 = vcmask 130048
  %v450 = vsel %vm448, %v297, 0
  %v453 = vsel %vm448, %v299, 0
  %455 = vmatprep.subr.mxu0 %v314
  %456 = vmatpush1.msra.mxu0 %v320
  %457 = vmatprep.subr.mxu0 %v315
  %458 = vmatpush1.msra.mxu0 %v321
  %459 = vmatprep.subr.mxu0 %v332
  %460 = vmatpush1.msra.mxu0 %v338
  %461 = vmatprep.subr.mxu0 %v333
  %462 = vmatpush1.msra.mxu0 %v339
  %463 = vmatprep.subr.mxu0 %v350
  %464 = vmatpush1.msra.mxu0 %v356
  %465 = vmatprep.subr.mxu0 %v351
  %466 = vmatpush1.msra.mxu0 %v357
  %467 = vmatprep.subr.mxu0 %v368
  %468 = vmatpush1.msra.mxu0 %v374
  %469 = vmatprep.subr.mxu0 %v369
  %470 = vmatpush1.msra.mxu0 %v375
  %471 = vmatprep.subr.mxu0 %v293
  %472 = vmatpush1.msra.mxu0 %v292
  %473 = vmatprep.subr.mxu0 %v295
  %474 = vmatpush1.msra.mxu0 %v294
  %475 = vmatprep.subr.mxu0 %v392
  %476 = vmatpush1.msra.mxu0 %v384
  %477 = vmatprep.subr.mxu0 %v393
  %478 = vmatpush1.msra.mxu0 %v385
  %479 = vmatprep.subr.mxu0 %v410
  %480 = vmatpush1.msra.mxu0 %v402
  %481 = vmatprep.subr.mxu0 %v411
  %482 = vmatpush1.msra.mxu0 %v403
  %483 = vmatprep.subr.mxu0 %v428
  %484 = vmatpush1.msra.mxu0 %v420
  %485 = vmatprep.subr.mxu0 %v429
  %486 = vmatpush1.msra.mxu0 %v421
  %487 = vmatprep.subr.mxu0 %v446
  %488 = vmatpush1.msra.mxu0 %v438
  %489 = vmatprep.subr.mxu0 %v447
  %490 = vmatpush1.msra.mxu0 %v439
  %491 = vmatprep.subr.mxu0 0.0
  %492 = vmatpush1.msra.mxu0 0.0
  %493 = vmatprep.subr.mxu0 0.0
  %494 = vmatpush1.msra.mxu0 0.0
  %495 = vmatprep.subr.mxu0 0.0
  %496 = vmatpush1.msra.mxu0 0.0
  %497 = vmatprep.subr.mxu0 0.0
  %498 = vmatpush1.msra.mxu0 0.0
  %499 = vmatprep.subr.mxu0 0.0
  %500 = vmatpush1.msra.mxu0 0.0
  %501 = vmatprep.subr.mxu0 0.0
  %502 = vmatpush1.msra.mxu0 0.0
  %503 = vmatprep.subr.mxu0 0.0
  %504 = vmatpush1.msra.mxu0 0.0
  %505 = vmatprep.subr.mxu0 0.0
  %506 = vmatpush1.msra.mxu0 0.0
  %507 = vmatprep.subr.mxu0 0.0
  %508 = vmatpush1.msra.mxu0 0.0
  %509 = vmatprep.subr.mxu0 0.0
  %510 = vmatpush1.msra.mxu0 0.0
  %511 = vmatprep.subr.mxu0 0.0
  %512 = vmatpush1.msra.mxu0 0.0
  %513 = vmatprep.subr.mxu0 0.0
  %514 = vmatpush1.msra.mxu0 0.0
  %515 = vmatprep.subr.mxu0 0.0
  %516 = vmatpush1.msra.mxu0 0.0
  %517 = vmatprep.subr.mxu0 0.0
  %518 = vmatpush1.msra.mxu0 0.0
  %519 = vmatprep.mubr.f32.mxu0 %v450
  %520 = vmatmul.mubr.f32.gmra.mrb[0].mxu0 %v296
  %v521 = vpop.f32.mrb[0].mxu0
  %v522 = vadd.f32 0.0, %v521
  %v523 = vpop.f32.mrb[0].mxu0
  %v524 = vadd.f32 0.0, %v523
  %525 = vmatprep.mubr.f32.mxu0 %v453
  %526 = vmatmul.mubr.f32.gmra.mrb[0].mxu0 %v298
  %v527 = vpop.f32.mrb[0].mxu0
  %v528 = vadd.f32 0.0, %v527
  %v529 = vpop.f32.mrb[0].mxu0
  %v530 = vadd.f32 0.0, %v529
  %531 = vdwg.mxu0
  %v532 = vld [vmem:[%s5] sm:$0xff]
  %v533 = vld [vmem:[%s5 + $0x8] sm:$0xff]
  %v534 = vld [vmem:[%s6] sm:$0xff]
  %v535 = vld [vmem:[%s6 + $0x8] sm:$0xff]
  %v536 = vmul.f32 %v522, %v213
  %v537 = vmul.f32 %v524, %v217
  %v538 = vmul.f32 %v528, %v213
  %v539 = vmul.f32 %v530, %v217
  %v540 = vadd.f32 %v536, %v537
  %541 = vadd.xlane.f32.xlu0 %v540
  %v542 = vpop.xlane.xlu0 %541
  %v543 = vadd.f32 %v538, %v539
  %544 = vadd.xlane.f32.xlu0 %v543
  %v545 = vpop.xlane.xlu0 %544
  %v546 = vmul.f32 %v542, 0.0078125
  %v547 = vmul.f32 %v545, 0.0078125
  %v548 = vmul.f32 %v536, %v522
  %v549 = vmul.f32 %v537, %v524
  %v550 = vmul.f32 %v538, %v528
  %v551 = vmul.f32 %v539, %v530
  %v552 = vadd.f32 %v548, %v549
  %553 = vadd.xlane.f32.xlu0 %v552
  %v554 = vpop.xlane.xlu0 %553
  %v555 = vadd.f32 %v550, %v551
  %556 = vadd.xlane.f32.xlu0 %v555
  %v557 = vpop.xlane.xlu0 %556
  %v558 = vmul.f32 %v554, 0.0078125
  %v559 = vmul.f32 %v557, 0.0078125
  %v560 = vmul.f32 %v546, %v546
  %v561 = vmul.f32 %v547, %v547
  %v562 = vsub.f32 %v558, %v560
  %v563 = vsub.f32 %v559, %v561
  %v564 = vmax.f32 %v562, 0.0
  %v565 = vmax.f32 %v563, 0.0
  %v566 = vadd.f32 %v564, 1e-05
  %v567 = vadd.f32 %v565, 1e-05
  %v568 = vrsqrt.pop %v566
  %v569 = vrsqrt.pop %v567
  %v570 = vmul.f32 %v532, %v568
  %v571 = vmul.f32 %v533, %v569
  %v572 = vmul.f32 %v546, %v570
  %v573 = vmul.f32 %v547, %v571
  %v574 = vsub.f32 %v534, %v572
  %v575 = vsub.f32 %v535, %v573
  %577 = vset.pattern.permute.xlu0 0
  %578 = vperm.xlu0 %577, %v570
  %v579 = vpop.permute.xlu0 %578
  %582 = vset.pattern.permute.xlu0 0
  %583 = vperm.xlu0 %582, %v571
  %v584 = vpop.permute.xlu0 %583
  %v586 = vmul.f32 %v522, %v579
  %v587 = vmul.f32 %v524, %v579
  %v588 = vmul.f32 %v528, %v584
  %v589 = vmul.f32 %v530, %v584
  %591 = vset.pattern.permute.xlu0 0
  %592 = vperm.xlu0 %591, %v574
  %v593 = vpop.permute.xlu0 %592
  %596 = vset.pattern.permute.xlu0 0
  %597 = vperm.xlu0 %596, %v575
  %v598 = vpop.permute.xlu0 %597
  %v600 = vadd.f32 %v586, %v593
  %v601 = vadd.f32 %v587, %v593
  %v602 = vadd.f32 %v588, %v598
  %v603 = vadd.f32 %v589, %v598
  %v604 = vmax.f32 %v600, 0.0
  %v605 = vmax.f32 %v601, 0.0
  %v606 = vmax.f32 %v602, 0.0
  %v607 = vmax.f32 %v603, 0.0
  %v608 = vmul.f32 %v604, %v213
  %v609 = vmul.f32 %v605, %v217
  %v610 = vmul.f32 %v606, %v213
  %v611 = vmul.f32 %v607, %v217
  %612 = vst [vmem:[%s9] sm:$0xff] %v608
  %613 = vst [vmem:[%s9 + $0x8] sm:$0xff] %v609
  %614 = vst [vmem:[%s9 + $0x10] sm:$0xff] %v610
  %615 = vst [vmem:[%s9 + $0x18] sm:$0xff] %v611
  %620 = vrot.lane.b32.xlu0 %v608, 127
  %v621 = vpop.permute.xlu0 %620
  %622 = vrot.lane.b32.xlu0 %v609, 127
  %v623 = vpop.permute.xlu0 %622
  %624 = vrot.lane.b32.xlu0 %v610, 127
  %v625 = vpop.permute.xlu0 %624
  %626 = vrot.lane.b32.xlu0 %v611, 127
  %v627 = vpop.permute.xlu0 %626
  %v628 = vsel %vm85, %v621, %v623
  %v629 = vsel %vm85, %v625, %v627
  %v636 = vsel %vm85, %v623, %v621
  %v637 = vsel %vm85, %v627, %v625
  %v638 = vmax.f32 %v608, %v628
  %v639 = vmax.f32 %v609, %v636
  %v640 = vmax.f32 %v610, %v629
  %v641 = vmax.f32 %v611, %v637
  %642 = vrot.lane.b32.xlu0 %v608, 118
  %v643 = vpop.permute.xlu0 %642
  %644 = vrot.lane.b32.xlu0 %v609, 118
  %v645 = vpop.permute.xlu0 %644
  %646 = vrot.lane.b32.xlu0 %v610, 118
  %v647 = vpop.permute.xlu0 %646
  %648 = vrot.lane.b32.xlu0 %v611, 118
  %v649 = vpop.permute.xlu0 %648
  %v650 = vsel %vm105, %v643, %v645
  %v651 = vsel %vm105, %v647, %v649
  %v658 = vsel %vm105, %v645, %v643
  %v659 = vsel %vm105, %v649, %v647
  %660 = vrot.lane.b32.xlu0 %v608, 117
  %v661 = vpop.permute.xlu0 %660
  %662 = vrot.lane.b32.xlu0 %v609, 117
  %v663 = vpop.permute.xlu0 %662
  %664 = vrot.lane.b32.xlu0 %v610, 117
  %v665 = vpop.permute.xlu0 %664
  %666 = vrot.lane.b32.xlu0 %v611, 117
  %v667 = vpop.permute.xlu0 %666
  %v668 = vsel %vm115, %v661, %v663
  %v669 = vsel %vm115, %v665, %v667
  %v676 = vsel %vm115, %v663, %v661
  %v677 = vsel %vm115, %v667, %v665
  %v678 = vmax.f32 %v650, %v668
  %v679 = vmax.f32 %v658, %v676
  %v680 = vmax.f32 %v651, %v669
  %v681 = vmax.f32 %v659, %v677
  %v682 = vmax.f32 %v638, %v678
  %v683 = vmax.f32 %v639, %v679
  %v684 = vmax.f32 %v640, %v680
  %v685 = vmax.f32 %v641, %v681
  %v686 = vld [vmem:[%s8] sm:$0xff]
  %v687 = vld [vmem:[%s8 + $0x8] sm:$0xff]
  %v688 = vld [vmem:[%s8 + $0x10] sm:$0xff]
  %v689 = vld [vmem:[%s8 + $0x18] sm:$0xff]
  %v690 = vld [vmem:[%s8 + $0x20] sm:$0xff]
  %v691 = vld [vmem:[%s8 + $0x28] sm:$0xff]
  %v692 = vld [vmem:[%s8 + $0x30] sm:$0xff]
  %v693 = vld [vmem:[%s8 + $0x38] sm:$0xff]
  %v694 = vld [vmem:[%s8 + $0x40] sm:$0xff]
  %v695 = vld [vmem:[%s8 + $0x48] sm:$0xff]
  %v696 = vld [vmem:[%s8 + $0x50] sm:$0xff]
  %v697 = vld [vmem:[%s8 + $0x58] sm:$0xff]
  %v698 = vld [vmem:[%s8 + $0x60] sm:$0xff]
  %v699 = vld [vmem:[%s8 + $0x68] sm:$0xff]
  %v700 = vld [vmem:[%s8 + $0x70] sm:$0xff]
  %v701 = vld [vmem:[%s8 + $0x78] sm:$0xff]
  %v702 = vld [vmem:[%s8 + $0x80] sm:$0xff]
  %v703 = vld [vmem:[%s8 + $0x88] sm:$0xff]
  %v704 = vld [vmem:[%s8 + $0x90] sm:$0xff]
  %v705 = vld [vmem:[%s8 + $0x98] sm:$0xff]
  %v706 = vld [vmem:[%s8 + $0xa0] sm:$0xff]
  %v707 = vld [vmem:[%s8 + $0xa8] sm:$0xff]
  %v708 = vld [vmem:[%s8 + $0xb0] sm:$0xff]
  %v709 = vld [vmem:[%s8 + $0xb8] sm:$0xff]
  %v710 = vld [vmem:[%s8 + $0xc0] sm:$0xff]
  %v711 = vld [vmem:[%s8 + $0xc8] sm:$0xff]
  %v712 = vld [vmem:[%s8 + $0xd0] sm:$0xff]
  %v713 = vld [vmem:[%s8 + $0xd8] sm:$0xff]
  %v714 = vld [vmem:[%s8 + $0xe0] sm:$0xff]
  %v715 = vld [vmem:[%s8 + $0xe8] sm:$0xff]
  %v716 = vld [vmem:[%s8 + $0xf0] sm:$0xff]
  %v717 = vld [vmem:[%s8 + $0xf8] sm:$0xff]
  %v718 = vld [vmem:[%s8 + $0x100] sm:$0xff]
  %v719 = vld [vmem:[%s8 + $0x108] sm:$0xff]
  %v720 = vld [vmem:[%s8 + $0x110] sm:$0xff]
  %v721 = vld [vmem:[%s8 + $0x118] sm:$0xff]
  %v722 = vld [vmem:[%s8 + $0x120] sm:$0xff]
  %v723 = vld [vmem:[%s8 + $0x128] sm:$0xff]
  %v724 = vld [vmem:[%s8 + $0x130] sm:$0xff]
  %v725 = vld [vmem:[%s8 + $0x138] sm:$0xff]
  %v726 = vld [vmem:[%s8 + $0x140] sm:$0xff]
  %v727 = vld [vmem:[%s8 + $0x148] sm:$0xff]
  %v728 = vld [vmem:[%s8 + $0x150] sm:$0xff]
  %v729 = vld [vmem:[%s8 + $0x158] sm:$0xff]
  %v730 = vld [vmem:[%s8 + $0x160] sm:$0xff]
  %v731 = vld [vmem:[%s8 + $0x168] sm:$0xff]
  %v732 = vld [vmem:[%s8 + $0x170] sm:$0xff]
  %v733 = vld [vmem:[%s8 + $0x178] sm:$0xff]
  %v734 = vld [vmem:[%s8 + $0x180] sm:$0xff]
  %v735 = vld [vmem:[%s8 + $0x188] sm:$0xff]
  %v736 = vld [vmem:[%s8 + $0x190] sm:$0xff]
  %v737 = vld [vmem:[%s8 + $0x198] sm:$0xff]
  %v738 = vld [vmem:[%s8 + $0x1a0] sm:$0xff]
  %v739 = vld [vmem:[%s8 + $0x1a8] sm:$0xff]
  %v740 = vld [vmem:[%s8 + $0x1b0] sm:$0xff]
  %v741 = vld [vmem:[%s8 + $0x1b8] sm:$0xff]
  %v742 = vld [vmem:[%s8 + $0x1c0] sm:$0xff]
  %v743 = vld [vmem:[%s8 + $0x1c8] sm:$0xff]
  %v744 = vld [vmem:[%s8 + $0x1d0] sm:$0xff]
  %v745 = vld [vmem:[%s8 + $0x1d8] sm:$0xff]
  %v746 = vld [vmem:[%s8 + $0x1e0] sm:$0xff]
  %v747 = vld [vmem:[%s8 + $0x1e8] sm:$0xff]
  %v748 = vld [vmem:[%s8 + $0x1f0] sm:$0xff]
  %v749 = vld [vmem:[%s8 + $0x1f8] sm:$0xff]
  %750 = vmatprep.subr.mxu0 %v687
  %751 = vmatpush1.msra.mxu0 %v686
  %752 = vmatprep.subr.mxu0 %v689
  %753 = vmatpush1.msra.mxu0 %v688
  %754 = vmatprep.subr.mxu0 %v691
  %755 = vmatpush1.msra.mxu0 %v690
  %756 = vmatprep.subr.mxu0 %v693
  %757 = vmatpush1.msra.mxu0 %v692
  %758 = vmatprep.subr.mxu0 %v695
  %759 = vmatpush1.msra.mxu0 %v694
  %760 = vmatprep.subr.mxu0 %v697
  %761 = vmatpush1.msra.mxu0 %v696
  %762 = vmatprep.subr.mxu0 %v699
  %763 = vmatpush1.msra.mxu0 %v698
  %764 = vmatprep.subr.mxu0 %v701
  %765 = vmatpush1.msra.mxu0 %v700
  %766 = vmatprep.subr.mxu0 %v703
  %767 = vmatpush1.msra.mxu0 %v702
  %768 = vmatprep.subr.mxu0 %v705
  %769 = vmatpush1.msra.mxu0 %v704
  %770 = vmatprep.subr.mxu0 %v707
  %771 = vmatpush1.msra.mxu0 %v706
  %772 = vmatprep.subr.mxu0 %v709
  %773 = vmatpush1.msra.mxu0 %v708
  %774 = vmatprep.subr.mxu0 %v711
  %775 = vmatpush1.msra.mxu0 %v710
  %776 = vmatprep.subr.mxu0 %v713
  %777 = vmatpush1.msra.mxu0 %v712
  %778 = vmatprep.subr.mxu0 %v715
  %779 = vmatpush1.msra.mxu0 %v714
  %780 = vmatprep.subr.mxu0 %v717
  %781 = vmatpush1.msra.mxu0 %v716
  %782 = vmatprep.subr.mxu0 %v719
  %783 = vmatpush1.msra.mxu0 %v718
  %784 = vmatprep.subr.mxu0 %v721
  %785 = vmatpush1.msra.mxu0 %v720
  %786 = vmatprep.subr.mxu0 %v723
  %787 = vmatpush1.msra.mxu0 %v722
  %788 = vmatprep.subr.mxu0 %v725
  %789 = vmatpush1.msra.mxu0 %v724
  %790 = vmatprep.subr.mxu0 %v727
  %791 = vmatpush1.msra.mxu0 %v726
  %792 = vmatprep.subr.mxu0 %v729
  %793 = vmatpush1.msra.mxu0 %v728
  %794 = vmatprep.subr.mxu0 %v731
  %795 = vmatpush1.msra.mxu0 %v730
  %796 = vmatprep.subr.mxu0 %v733
  %797 = vmatpush1.msra.mxu0 %v732
  %798 = vmatprep.subr.mxu0 %v735
  %799 = vmatpush1.msra.mxu0 %v734
  %800 = vmatprep.subr.mxu0 %v737
  %801 = vmatpush1.msra.mxu0 %v736
  %802 = vmatprep.subr.mxu0 %v739
  %803 = vmatpush1.msra.mxu0 %v738
  %804 = vmatprep.subr.mxu0 %v741
  %805 = vmatpush1.msra.mxu0 %v740
  %806 = vmatprep.subr.mxu0 %v743
  %807 = vmatpush1.msra.mxu0 %v742
  %808 = vmatprep.subr.mxu0 %v745
  %809 = vmatpush1.msra.mxu0 %v744
  %810 = vmatprep.subr.mxu0 %v747
  %811 = vmatpush1.msra.mxu0 %v746
  %812 = vmatprep.subr.mxu0 %v749
  %813 = vmatpush1.msra.mxu0 %v748
  %814 = vmatprep.mubr.f32.mxu0 %v683
  %815 = vmatmul.mubr.f32.gmra.mrb[0].mxu0 %v682
  %v816 = vpop.f32.mrb[0].mxu0
  %v817 = vadd.f32 0.0, %v816
  %v818 = vpop.f32.mrb[0].mxu0
  %v819 = vadd.f32 0.0, %v818
  %820 = vmatprep.mubr.f32.mxu0 %v685
  %821 = vmatmul.mubr.f32.gmra.mrb[0].mxu0 %v684
  %v822 = vpop.f32.mrb[0].mxu0
  %v823 = vadd.f32 0.0, %v822
  %v824 = vpop.f32.mrb[0].mxu0
  %v825 = vadd.f32 0.0, %v824
  %826 = vdwg.mxu0
  %827 = vst [vmem:[%s10] sm:$0xff] %v817
  %828 = vst [vmem:[%s10 + $0x8] sm:$0xff] %v819
  %829 = vst [vmem:[%s10 + $0x10] sm:$0xff] %v823
  %830 = vst [vmem:[%s10 + $0x18] sm:$0xff] %v825
  // Predicated region
  $region38: #{_lambda_.3} parent=0 // pred_check
    _
  $region39: #{_lambda_.3} parent=0 // pred_check_branch
    %832 = sbr.rel (0) target = $region41
  $region40: #{_lambda_.3} parent=0 // pred_region
    _
  $region41: #{_lambda_.3} parent=0 // pred_fallthru
    _
  // Predicated region
  $region42: #{_lambda_.3} parent=0 // pred_check
    _
  $region43: #{_lambda_.3} parent=0 // pred_check_branch
    %834 = sbr.rel (0) target = $region45
  $region44: #{_lambda_.3} parent=0 // pred_region
    _
  $region45: #{_lambda_.3} parent=0 // pred_fallthru
    _
  // Predicated region
  $region46: #{_lambda_.3} parent=0 // pred_check
    _
  $region47: #{_lambda_.3} parent=0 // pred_check_branch
    %836 = sbr.rel (0) target = $region49
  $region48: #{_lambda_.3} parent=0 // pred_region
    _
  $region49: #{_lambda_.3} parent=0 // pred_fallthru
    _
  // Predicated region
  $region50: #{_lambda_.3} parent=0 // pred_check
    _
  $region51: #{_lambda_.3} parent=0 // pred_check_branch
    %838 = sbr.rel (0) target = $region53
  $region52: #{_lambda_.3} parent=0 // pred_region
    _
  $region53: #{_lambda_.3} parent=0 // pred_fallthru
    _

// kernel: _lambda_.2
$region0: #{_lambda_.2}
  #allocation0 [shape = 'u32[]', space=smem, size = 0x4, offset = 0x4, fixed_abs, tag = 'smem constant byte address 0x4 - core index']
  #allocation1 [shape = 'u32[144,128]{1,0:T(1,128)}', space=vmem, size = 0x12000, scoped, tag = 'internal scratch']
  %s0 = inlined_call_operand.vmem [shape: f32[8,768], index: 0, kind: input, shape index: {}]
  %s1 = inlined_call_operand.vmem [shape: f32[8,72], index: 1, kind: input, shape index: {}]
  %s2 = inlined_call_operand.vmem [shape: f32[8,1], index: 2, kind: input, shape index: {}, may-alias: {2,5}]
  %s3 = inlined_call_operand.vmem [shape: f32[8,1], index: 3, kind: input, shape index: {}, may-alias: {3,6}]
  %s4 = inlined_call_operand.vmem [shape: f32[8,72], index: 4, kind: input, shape index: {}]
  %s5 = inlined_call_operand.vmem [shape: f32[8,1], index: 5, kind: input, shape index: {}, may-alias: {2,5}]
  %s6 = inlined_call_operand.vmem [shape: f32[8,1], index: 6, kind: input, shape index: {}, may-alias: {3,6}]
  %s7 = inlined_call_operand.vmem [shape: f32[1,768], index: 7, kind: input, shape index: {}]
  %s8 = inlined_call_operand.hbm [shape: f32[768,256], index: 8, kind: input, shape index: {}]
  %s9 = inlined_call_operand.vmem [shape: f32[8,768], index: 9, kind: output, shape index: {0}]
  %s10 = inlined_call_operand.vmem [shape: f32[8,256], index: 10, kind: output, shape index: {1}]
  %11 = xla_tuple %s9, %s10
  %s12 = sld [smem:[#allocation0]]
  $region58: #{_lambda_.2} parent=0
    _
  %s14 = ssub.s32 1, %s12
  %s15 = scalar_select 0, %s14, %s12
  $region1: #{_lambda_.2} parent=0
    #allocation2 [shape = 'u8[786432]{0}', space=vmem, size = 0xc0000, scoped, tag = 'input window, operand 8, single buffered']
    #allocation3 [shape = 's32[1]{0}', space=sflag, size = 0x4, scoped, tag = 'scoped memory for _lambda_.2']
    %16 = vsyncpa [#allocation3], 0
    // Predicated region
    $region2: #{_lambda_.2} parent=1 // pred_check
      _
    $region3: #{_lambda_.2} parent=1 // pred_check_branch
      %18 = sbr.rel (0) target = $region5
    $region4: #{_lambda_.2} parent=1 // pred_region
      _
    $region5: #{_lambda_.2} parent=1 // pred_fallthru
      _
    // Predicated region
    $region6: #{_lambda_.2} parent=1 // pred_check
      _
    $region7: #{_lambda_.2} parent=1 // pred_check_branch
      %20 = sbr.rel (0) target = $region9
    $region8: #{_lambda_.2} parent=1 // pred_region
      _
    $region9: #{_lambda_.2} parent=1 // pred_fallthru
      _
    // Predicated region
    $region10: #{_lambda_.2} parent=1 // pred_check
      _
    $region11: #{_lambda_.2} parent=1 // pred_check_branch
      %22 = sbr.rel (0) target = $region13
    $region12: #{_lambda_.2} parent=1 // pred_region
      _
    $region13: #{_lambda_.2} parent=1 // pred_fallthru
      _
    // Predicated region
    $region14: #{_lambda_.2} parent=1 // pred_check
      _
    $region15: #{_lambda_.2} parent=1 // pred_check_branch
      %24 = sbr.rel (0) target = $region17
    $region16: #{_lambda_.2} parent=1 // pred_region
      _
    $region17: #{_lambda_.2} parent=1 // pred_fallthru
      _
    // Predicated region
    $region18: #{_lambda_.2} parent=1 // pred_check
      _
    $region19: #{_lambda_.2} parent=1 // pred_check_branch
      %26 = sbr.rel (0) target = $region21
    $region20: #{_lambda_.2} parent=1 // pred_region
      _
    $region21: #{_lambda_.2} parent=1 // pred_fallthru
      _
    // Predicated region
    $region22: #{_lambda_.2} parent=1 // pred_check
      _
    $region23: #{_lambda_.2} parent=1 // pred_check_branch
      %28 = sbr.rel (0) target = $region25
    $region24: #{_lambda_.2} parent=1 // pred_region
      _
    $region25: #{_lambda_.2} parent=1 // pred_fallthru
      _
    // Predicated region
    $region26: #{_lambda_.2} parent=1 // pred_check
      _
    $region27: #{_lambda_.2} parent=1 // pred_check_branch
      %30 = sbr.rel (0) target = $region29
    $region28: #{_lambda_.2} parent=1 // pred_region
      _
    $region29: #{_lambda_.2} parent=1 // pred_fallthru
      _
    // Predicated region
    $region30: #{_lambda_.2} parent=1 // pred_check
      _
    $region31: #{_lambda_.2} parent=1 // pred_check_branch
      %32 = sbr.rel (0) target = $region33
    $region32: #{_lambda_.2} parent=1 // pred_region
      _
    $region33: #{_lambda_.2} parent=1 // pred_fallthru
      _
    // Predicated region
    $region34: #{_lambda_.2} parent=1 // pred_check
      _
    $region35: #{_lambda_.2} parent=1 // pred_check_branch
      %34 = sbr.rel (0) target = $region37
    $region36: #{_lambda_.2} parent=1 // pred_region
      %s36 = ssub.s32 24576, 24576
      %37 = vsyncadd [#allocation3], %s36
      %s38 = sshll.u32 [#allocation2], 4
      %s39 = int_to_ptr.vmem [resolvable:$true] %s38
      %44 = dma.hbm_to_vmem [thread:$0]  %s8, 24576, %s39, [#allocation3], 256, 256, 16
    $region37: #{_lambda_.2} parent=1 // pred_fallthru
      _
    // Predicated region
    $region38: #{_lambda_.2} parent=1 // pred_check
      _
    $region39: #{_lambda_.2} parent=1 // pred_check_branch
      %46 = sbr.rel (0) target = $region41
    $region40: #{_lambda_.2} parent=1 // pred_region
      %47 = dma.done [#allocation3], 24576
    $region41: #{_lambda_.2} parent=1 // pred_fallthru
      _
    %v48 = vld [vmem:[%s7] sm:$0x3f]
    %v49 = vld [vmem:[%s0] sm:$0xff]
    %v50 = vld [vmem:[%s0 + $0x8] sm:$0xff]
    %v51 = vld [vmem:[%s0 + $0x10] sm:$0xff]
    %v52 = vld [vmem:[%s0 + $0x18] sm:$0xff]
    %v53 = vld [vmem:[%s0 + $0x20] sm:$0xff]
    %v54 = vld [vmem:[%s0 + $0x28] sm:$0xff]
    %v55 = vld [vmem:[%s1] sm:$0xff]
    %57 = vrot.lane.b32.xlu0 %v54, 19
    %v58 = vpop.permute.xlu0 %57
    %65 = vrot.lane.b32.xlu0 %v49, 19
    %v66 = vpop.permute.xlu0 %65
    %67 = vrot.lane.b32.xlu0 %v50, 19
    %v68 = vpop.permute.xlu0 %67
    %69 = vrot.lane.b32.xlu0 %v51, 19
    %v70 = vpop.permute.xlu0 %69
    %71 = vrot.lane.b32.xlu0 %v52, 19
    %v72 = vpop.permute.xlu0 %71
    %73 = vrot.lane.b32.xlu0 %v53, 19
    %v74 = vpop.permute.xlu0 %73
    %vm75 = vcmask 154624
    %v76 = vsel %vm75, %v66, %v68
    %v77 = vsel %vm75, %v68, %v70
    %v78 = vsel %vm75, %v70, %v72
    %v79 = vsel %vm75, %v72, %v74
    %v80 = vsel %vm75, %v74, %v58
    %v87 = vsel %vm75, %v58, %v66
    %88 = vrot.lane.b32.xlu0 %v54, 18
    %v89 = vpop.permute.xlu0 %88
    %91 = vrot.lane.b32.xlu0 %v49, 18
    %v92 = vpop.permute.xlu0 %91
    %93 = vrot.lane.b32.xlu0 %v50, 18
    %v94 = vpop.permute.xlu0 %93
    %95 = vrot.lane.b32.xlu0 %v51, 18
    %v96 = vpop.permute.xlu0 %95
    %97 = vrot.lane.b32.xlu0 %v52, 18
    %v98 = vpop.permute.xlu0 %97
    %99 = vrot.lane.b32.xlu0 %v53, 18
    %v100 = vpop.permute.xlu0 %99
    %vm101 = vcmask 146432
    %v102 = vsel %vm101, %v92, %v94
    %v103 = vsel %vm101, %v94, %v96
    %v104 = vsel %vm101, %v96, %v98
    %v105 = vsel %vm101, %v98, %v100
    %v106 = vsel %vm101, %v100, %v89
    %v113 = vsel %vm101, %v89, %v92
    %114 = vrot.lane.b32.xlu0 %v54, 17
    %v115 = vpop.permute.xlu0 %114
    %117 = vrot.lane.b32.xlu0 %v49, 17
    %v118 = vpop.permute.xlu0 %117
    %119 = vrot.lane.b32.xlu0 %v50, 17
    %v120 = vpop.permute.xlu0 %119
    %121 = vrot.lane.b32.xlu0 %v51, 17
    %v122 = vpop.permute.xlu0 %121
    %123 = vrot.lane.b32.xlu0 %v52, 17
    %v124 = vpop.permute.xlu0 %123
    %125 = vrot.lane.b32.xlu0 %v53, 17
    %v126 = vpop.permute.xlu0 %125
    %vm127 = vcmask 138240
    %v128 = vsel %vm127, %v118, %v120
    %v129 = vsel %vm127, %v120, %v122
    %v130 = vsel %vm127, %v122, %v124
    %v131 = vsel %vm127, %v124, %v126
    %v132 = vsel %vm127, %v126, %v115
    %v139 = vsel %vm127, %v115, %v118
    %140 = vrot.lane.b32.xlu0 %v54, 1
    %v141 = vpop.permute.xlu0 %140
    %143 = vrot.lane.b32.xlu0 %v49, 1
    %v144 = vpop.permute.xlu0 %143
    %145 = vrot.lane.b32.xlu0 %v50, 1
    %v146 = vpop.permute.xlu0 %145
    %147 = vrot.lane.b32.xlu0 %v51, 1
    %v148 = vpop.permute.xlu0 %147
    %149 = vrot.lane.b32.xlu0 %v52, 1
    %v150 = vpop.permute.xlu0 %149
    %151 = vrot.lane.b32.xlu0 %v53, 1
    %v152 = vpop.permute.xlu0 %151
    %vm153 = vcmask 7168
    %v154 = vsel %vm153, %v144, %v146
    %v155 = vsel %vm153, %v146, %v148
    %v156 = vsel %vm153, %v148, %v150
    %v157 = vsel %vm153, %v150, %v152
    %v158 = vsel %vm153, %v152, %v141
    %v165 = vsel %vm153, %v141, %v144
    %166 = vrot.lane.b32.xlu0 %v49, 127
    %v167 = vpop.permute.xlu0 %166
    %168 = vrot.lane.b32.xlu0 %v50, 127
    %v169 = vpop.permute.xlu0 %168
    %170 = vrot.lane.b32.xlu0 %v51, 127
    %v171 = vpop.permute.xlu0 %170
    %172 = vrot.lane.b32.xlu0 %v52, 127
    %v173 = vpop.permute.xlu0 %172
    %174 = vrot.lane.b32.xlu0 %v53, 127
    %v175 = vpop.permute.xlu0 %174
    %176 = vrot.lane.b32.xlu0 %v54, 127
    %v177 = vpop.permute.xlu0 %176
    %vm178 = vcmask 1039360
    %v179 = vsel %vm178, %v167, %v169
    %v180 = vsel %vm178, %v169, %v171
    %v181 = vsel %vm178, %v171, %v173
    %v182 = vsel %vm178, %v173, %v175
    %v183 = vsel %vm178, %v175, %v177
    %v191 = vsel %vm178, %v177, %v167
    %192 = vrot.lane.b32.xlu0 %v49, 111
    %v193 = vpop.permute.xlu0 %192
    %194 = vrot.lane.b32.xlu0 %v50, 111
    %v195 = vpop.permute.xlu0 %194
    %196 = vrot.lane.b32.xlu0 %v51, 111
    %v197 = vpop.permute.xlu0 %196
    %198 = vrot.lane.b32.xlu0 %v52, 111
    %v199 = vpop.permute.xlu0 %198
    %200 = vrot.lane.b32.xlu0 %v53, 111
    %v201 = vpop.permute.xlu0 %200
    %202 = vrot.lane.b32.xlu0 %v54, 111
    %v203 = vpop.permute.xlu0 %202
    %vm204 = vcmask 908288
    %v205 = vsel %vm204, %v193, %v195
    %v206 = vsel %vm204, %v195, %v197
    %v207 = vsel %vm204, %v197, %v199
    %v208 = vsel %vm204, %v199, %v201
    %v209 = vsel %vm204, %v201, %v203
    %v217 = vsel %vm204, %v203, %v193
    %218 = vrot.lane.b32.xlu0 %v49, 110
    %v219 = vpop.permute.xlu0 %218
    %220 = vrot.lane.b32.xlu0 %v50, 110
    %v221 = vpop.permute.xlu0 %220
    %222 = vrot.lane.b32.xlu0 %v51, 110
    %v223 = vpop.permute.xlu0 %222
    %224 = vrot.lane.b32.xlu0 %v52, 110
    %v225 = vpop.permute.xlu0 %224
    %226 = vrot.lane.b32.xlu0 %v53, 110
    %v227 = vpop.permute.xlu0 %226
    %228 = vrot.lane.b32.xlu0 %v54, 110
    %v229 = vpop.permute.xlu0 %228
    %vm230 = vcmask 900096
    %v231 = vsel %vm230, %v219, %v221
    %v232 = vsel %vm230, %v221, %v223
    %v233 = vsel %vm230, %v223, %v225
    %v234 = vsel %vm230, %v225, %v227
    %v235 = vsel %vm230, %v227, %v229
    %v243 = vsel %vm230, %v229, %v219
    %244 = vrot.lane.b32.xlu0 %v49, 109
    %v245 = vpop.permute.xlu0 %244
    %246 = vrot.lane.b32.xlu0 %v50, 109
    %v247 = vpop.permute.xlu0 %246
    %248 = vrot.lane.b32.xlu0 %v51, 109
    %v249 = vpop.permute.xlu0 %248
    %250 = vrot.lane.b32.xlu0 %v52, 109
    %v251 = vpop.permute.xlu0 %250
    %252 = vrot.lane.b32.xlu0 %v53, 109
    %v253 = vpop.permute.xlu0 %252
    %254 = vrot.lane.b32.xlu0 %v54, 109
    %v255 = vpop.permute.xlu0 %254
    %vm256 = vcmask 891904
    %v257 = vsel %vm256, %v245, %v247
    %v258 = vsel %vm256, %v247, %v249
    %v259 = vsel %vm256, %v249, %v251
    %v260 = vsel %vm256, %v251, %v253
    %v261 = vsel %vm256, %v253, %v255
    %v269 = vsel %vm256, %v255, %v245
    %vm270 = vcmask 588800
    %v272 = vsel %vm270, %v55, 0
    %274 = vmatprep.subr.mxu0 %v76
    %275 = vmatpush1.msra.mxu0 %v87
    %276 = vmatprep.subr.mxu0 %v102
    %277 = vmatpush1.msra.mxu0 %v113
    %278 = vmatprep.subr.mxu0 %v128
    %279 = vmatpush1.msra.mxu0 %v139
    %280 = vmatprep.subr.mxu0 %v154
    %281 = vmatpush1.msra.mxu0 %v165
    %282 = vmatprep.subr.mxu0 %v50
    %283 = vmatpush1.msra.mxu0 %v49
    %284 = vmatprep.subr.mxu0 %v180
    %285 = vmatpush1.msra.mxu0 %v179
    %286 = vmatprep.subr.mxu0 %v206
    %287 = vmatpush1.msra.mxu0 %v205
    %288 = vmatprep.subr.mxu0 %v232
    %289 = vmatpush1.msra.mxu0 %v231
    %290 = vmatprep.subr.mxu0 %v258
    %291 = vmatpush1.msra.mxu0 %v257
    %292 = vmatprep.subr.mxu0 0.0
    %293 = vmatpush1.msra.mxu0 0.0
    %294 = vmatprep.subr.mxu0 0.0
    %295 = vmatpush1.msra.mxu0 0.0
    %296 = vmatprep.subr.mxu0 0.0
    %297 = vmatpush1.msra.mxu0 0.0
    %298 = vmatprep.subr.mxu0 0.0
    %299 = vmatpush1.msra.mxu0 0.0
    %300 = vmatprep.subr.mxu0 0.0
    %301 = vmatpush1.msra.mxu0 0.0
    %302 = vmatprep.subr.mxu0 0.0
    %303 = vmatpush1.msra.mxu0 0.0
    %304 = vmatprep.subr.mxu0 0.0
    %305 = vmatpush1.msra.mxu0 0.0
    %306 = vmatprep.subr.mxu0 0.0
    %307 = vmatpush1.msra.mxu0 0.0
    %308 = vmatprep.subr.mxu0 0.0
    %309 = vmatpush1.msra.mxu0 0.0
    %310 = vmatprep.subr.mxu0 0.0
    %311 = vmatpush1.msra.mxu0 0.0
    %312 = vmatprep.subr.mxu0 0.0
    %313 = vmatpush1.msra.mxu0 0.0
    %314 = vmatprep.subr.mxu0 0.0
    %315 = vmatpush1.msra.mxu0 0.0
    %316 = vmatprep.subr.mxu0 0.0
    %317 = vmatpush1.msra.mxu0 0.0
    %318 = vmatprep.subr.mxu0 0.0
    %319 = vmatpush1.msra.mxu0 0.0
    %320 = vmatprep.subr.mxu0 0.0
    %321 = vmatpush1.msra.mxu0 0.0
    %322 = vmatprep.subr.mxu0 0.0
    %323 = vmatpush1.msra.mxu0 0.0
    %324 = vmatprep.subr.mxu0 0.0
    %325 = vmatpush1.msra.mxu0 0.0
    %326 = vmatprep.subr.mxu0 0.0
    %327 = vmatpush1.msra.mxu0 0.0
    %328 = vmatprep.subr.mxu0 0.0
    %329 = vmatpush1.msra.mxu0 0.0
    %330 = vmatprep.subr.mxu0 0.0
    %331 = vmatpush1.msra.mxu0 0.0
    %332 = vmatprep.subr.mxu0 0.0
    %333 = vmatpush1.msra.mxu0 0.0
    %334 = vmatprep.subr.mxu0 0.0
    %335 = vmatpush1.msra.mxu0 0.0
    %336 = vmatprep.subr.mxu0 0.0
    %337 = vmatpush1.msra.mxu0 0.0
    %338 = vmatprep.mubr.f32.mxu0 0.0
    %339 = vmatmul.mubr.f32.gmra.mrb[0].mxu0 %v272
    %v340 = vpop.f32.mrb[0].mxu0
    %v341 = vadd.f32 0.0, %v340
    %v342 = vpop.f32.mrb[0].mxu0
    %v343 = vadd.f32 0.0, %v342
    %344 = vdwg.mxu0
    %345 = vmatprep.subr.mxu0 %v78
    %346 = vmatpush1.msra.mxu0 %v77
    %347 = vmatprep.subr.mxu0 %v104
    %348 = vmatpush1.msra.mxu0 %v103
    %349 = vmatprep.subr.mxu0 %v130
    %350 = vmatpush1.msra.mxu0 %v129
    %351 = vmatprep.subr.mxu0 %v156
    %352 = vmatpush1.msra.mxu0 %v155
    %353 = vmatprep.subr.mxu0 %v52
    %354 = vmatpush1.msra.mxu0 %v51
    %355 = vmatprep.subr.mxu0 %v182
    %356 = vmatpush1.msra.mxu0 %v181
    %357 = vmatprep.subr.mxu0 %v208
    %358 = vmatpush1.msra.mxu0 %v207
    %359 = vmatprep.subr.mxu0 %v234
    %360 = vmatpush1.msra.mxu0 %v233
    %361 = vmatprep.subr.mxu0 %v260
    %362 = vmatpush1.msra.mxu0 %v259
    %363 = vmatprep.subr.mxu0 0.0
    %364 = vmatpush1.msra.mxu0 0.0
    %365 = vmatprep.subr.mxu0 0.0
    %366 = vmatpush1.msra.mxu0 0.0
    %367 = vmatprep.subr.mxu0 0.0
    %368 = vmatpush1.msra.mxu0 0.0
    %369 = vmatprep.subr.mxu0 0.0
    %370 = vmatpush1.msra.mxu0 0.0
    %371 = vmatprep.subr.mxu0 0.0
    %372 = vmatpush1.msra.mxu0 0.0
    %373 = vmatprep.subr.mxu0 0.0
    %374 = vmatpush1.msra.mxu0 0.0
    %375 = vmatprep.subr.mxu0 0.0
    %376 = vmatpush1.msra.mxu0 0.0
    %377 = vmatprep.subr.mxu0 0.0
    %378 = vmatpush1.msra.mxu0 0.0
    %379 = vmatprep.subr.mxu0 0.0
    %380 = vmatpush1.msra.mxu0 0.0
    %381 = vmatprep.subr.mxu0 0.0
    %382 = vmatpush1.msra.mxu0 0.0
    %383 = vmatprep.subr.mxu0 0.0
    %384 = vmatpush1.msra.mxu0 0.0
    %385 = vmatprep.subr.mxu0 0.0
    %386 = vmatpush1.msra.mxu0 0.0
    %387 = vmatprep.subr.mxu0 0.0
    %388 = vmatpush1.msra.mxu0 0.0
    %389 = vmatprep.subr.mxu0 0.0
    %390 = vmatpush1.msra.mxu0 0.0
    %391 = vmatprep.subr.mxu0 0.0
    %392 = vmatpush1.msra.mxu0 0.0
    %393 = vmatprep.subr.mxu0 0.0
    %394 = vmatpush1.msra.mxu0 0.0
    %395 = vmatprep.subr.mxu0 0.0
    %396 = vmatpush1.msra.mxu0 0.0
    %397 = vmatprep.subr.mxu0 0.0
    %398 = vmatpush1.msra.mxu0 0.0
    %399 = vmatprep.subr.mxu0 0.0
    %400 = vmatpush1.msra.mxu0 0.0
    %401 = vmatprep.subr.mxu0 0.0
    %402 = vmatpush1.msra.mxu0 0.0
    %403 = vmatprep.subr.mxu0 0.0
    %404 = vmatpush1.msra.mxu0 0.0
    %405 = vmatprep.subr.mxu0 0.0
    %406 = vmatpush1.msra.mxu0 0.0
    %407 = vmatprep.subr.mxu0 0.0
    %408 = vmatpush1.msra.mxu0 0.0
    %409 = vmatprep.mubr.f32.mxu0 0.0
    %410 = vmatmul.mubr.f32.gmra.mrb[0].mxu0 %v272
    %v411 = vpop.f32.mrb[0].mxu0
    %v412 = vadd.f32 0.0, %v411
    %v413 = vpop.f32.mrb[0].mxu0
    %v414 = vadd.f32 0.0, %v413
    %415 = vdwg.mxu0
    %416 = vmatprep.subr.mxu0 %v80
    %417 = vmatpush1.msra.mxu0 %v79
    %418 = vmatprep.subr.mxu0 %v106
    %419 = vmatpush1.msra.mxu0 %v105
    %420 = vmatprep.subr.mxu0 %v132
    %421 = vmatpush1.msra.mxu0 %v131
    %422 = vmatprep.subr.mxu0 %v158
    %423 = vmatpush1.msra.mxu0 %v157
    %424 = vmatprep.subr.mxu0 %v54
    %425 = vmatpush1.msra.mxu0 %v53
    %426 = vmatprep.subr.mxu0 %v191
    %427 = vmatpush1.msra.mxu0 %v183
    %428 = vmatprep.subr.mxu0 %v217
    %429 = vmatpush1.msra.mxu0 %v209
    %430 = vmatprep.subr.mxu0 %v243
    %431 = vmatpush1.msra.mxu0 %v235
    %432 = vmatprep.subr.mxu0 %v269
    %433 = vmatpush1.msra.mxu0 %v261
    %434 = vmatprep.subr.mxu0 0.0
    %435 = vmatpush1.msra.mxu0 0.0
    %436 = vmatprep.subr.mxu0 0.0
    %437 = vmatpush1.msra.mxu0 0.0
    %438 = vmatprep.subr.mxu0 0.0
    %439 = vmatpush1.msra.mxu0 0.0
    %440 = vmatprep.subr.mxu0 0.0
    %441 = vmatpush1.msra.mxu0 0.0
    %442 = vmatprep.subr.mxu0 0.0
    %443 = vmatpush1.msra.mxu0 0.0
    %444 = vmatprep.subr.mxu0 0.0
    %445 = vmatpush1.msra.mxu0 0.0
    %446 = vmatprep.subr.mxu0 0.0
    %447 = vmatpush1.msra.mxu0 0.0
    %448 = vmatprep.subr.mxu0 0.0
    %449 = vmatpush1.msra.mxu0 0.0
    %450 = vmatprep.subr.mxu0 0.0
    %451 = vmatpush1.msra.mxu0 0.0
    %452 = vmatprep.subr.mxu0 0.0
    %453 = vmatpush1.msra.mxu0 0.0
    %454 = vmatprep.subr.mxu0 0.0
    %455 = vmatpush1.msra.mxu0 0.0
    %456 = vmatprep.subr.mxu0 0.0
    %457 = vmatpush1.msra.mxu0 0.0
    %458 = vmatprep.subr.mxu0 0.0
    %459 = vmatpush1.msra.mxu0 0.0
    %460 = vmatprep.subr.mxu0 0.0
    %461 = vmatpush1.msra.mxu0 0.0
    %462 = vmatprep.subr.mxu0 0.0
    %463 = vmatpush1.msra.mxu0 0.0
    %464 = vmatprep.subr.mxu0 0.0
    %465 = vmatpush1.msra.mxu0 0.0
    %466 = vmatprep.subr.mxu0 0.0
    %467 = vmatpush1.msra.mxu0 0.0
    %468 = vmatprep.subr.mxu0 0.0
    %469 = vmatpush1.msra.mxu0 0.0
    %470 = vmatprep.subr.mxu0 0.0
    %471 = vmatpush1.msra.mxu0 0.0
    %472 = vmatprep.subr.mxu0 0.0
    %473 = vmatpush1.msra.mxu0 0.0
    %474 = vmatprep.subr.mxu0 0.0
    %475 = vmatpush1.msra.mxu0 0.0
    %476 = vmatprep.subr.mxu0 0.0
    %477 = vmatpush1.msra.mxu0 0.0
    %478 = vmatprep.subr.mxu0 0.0
    %479 = vmatpush1.msra.mxu0 0.0
    %480 = vmatprep.mubr.f32.mxu0 0.0
    %481 = vmatmul.mubr.f32.gmra.mrb[0].mxu0 %v272
    %v482 = vpop.f32.mrb[0].mxu0
    %v483 = vadd.f32 0.0, %v482
    %v484 = vpop.f32.mrb[0].mxu0
    %v485 = vadd.f32 0.0, %v484
    %486 = vdwg.mxu0
    %v487 = vld [vmem:[%s2] sm:$0xff]
    %v488 = vld [vmem:[%s3] sm:$0xff]
    %v490 = vlaneseq
    %v491 = vshrl.u32 %v490, 7
    %v492 = vsub.s32 0, %v491
    %v493 = vrot.slane %v48, %v492
    %v494 = vlaneseq
    %v495 = vshrl.u32 %v494, 7
    %v496 = vsub.s32 1, %v495
    %v497 = vrot.slane %v48, %v496
    %v498 = vlaneseq
    %v499 = vshrl.u32 %v498, 7
    %v500 = vsub.s32 2, %v499
    %v501 = vrot.slane %v48, %v500
    %v502 = vlaneseq
    %v503 = vshrl.u32 %v502, 7
    %v504 = vsub.s32 3, %v503
    %v505 = vrot.slane %v48, %v504
    %v506 = vlaneseq
    %v507 = vshrl.u32 %v506, 7
    %v508 = vsub.s32 4, %v507
    %v509 = vrot.slane %v48, %v508
    %v510 = vlaneseq
    %v511 = vshrl.u32 %v510, 7
    %v512 = vsub.s32 5, %v511
    %v513 = vrot.slane %v48, %v512
    %v520 = vmul.f32 %v341, %v493
    %v521 = vmul.f32 %v343, %v497
    %v522 = vmul.f32 %v412, %v501
    %v523 = vmul.f32 %v414, %v505
    %v524 = vmul.f32 %v483, %v509
    %v525 = vmul.f32 %v485, %v513
    %v526 = vadd.f32 %v520, %v521
    %v527 = vadd.f32 %v526, %v522
    %v528 = vadd.f32 %v527, %v523
    %v529 = vadd.f32 %v528, %v524
    %v530 = vadd.f32 %v529, %v525
    %531 = vadd.xlane.f32.xlu0 %v530
    %v532 = vpop.xlane.xlu0 %531
    %v533 = vmul.f32 %v532, 0.001953125
    %v534 = vmul.f32 %v520, %v341
    %v535 = vmul.f32 %v521, %v343
    %v536 = vmul.f32 %v522, %v412
    %v537 = vmul.f32 %v523, %v414
    %v538 = vmul.f32 %v524, %v483
    %v539 = vmul.f32 %v525, %v485
    %v540 = vadd.f32 %v534, %v535
    %v541 = vadd.f32 %v540, %v536
    %v542 = vadd.f32 %v541, %v537
    %v543 = vadd.f32 %v542, %v538
    %v544 = vadd.f32 %v543, %v539
    %545 = vadd.xlane.f32.xlu0 %v544
    %v546 = vpop.xlane.xlu0 %545
    %v547 = vmul.f32 %v546, 0.001953125
    %v548 = vmul.f32 %v533, %v533
    %v549 = vsub.f32 %v547, %v548
    %v550 = vmax.f32 %v549, 0.0
    %v551 = vadd.f32 %v550, 1e-05
    %v552 = vrsqrt.pop %v551
    %v553 = vmul.f32 %v487, %v552
    %v554 = vmul.f32 %v533, %v553
    %v555 = vsub.f32 %v488, %v554
    %557 = vset.pattern.permute.xlu0 0
    %558 = vperm.xlu0 %557, %v553
    %v559 = vpop.permute.xlu0 %558
    %v561 = vmul.f32 %v341, %v559
    %v562 = vmul.f32 %v343, %v559
    %v563 = vmul.f32 %v412, %v559
    %v564 = vmul.f32 %v414, %v559
    %v565 = vmul.f32 %v483, %v559
    %v566 = vmul.f32 %v485, %v559
    %568 = vset.pattern.permute.xlu0 0
    %569 = vperm.xlu0 %568, %v555
    %v570 = vpop.permute.xlu0 %569
    %v572 = vadd.f32 %v561, %v570
    %v573 = vadd.f32 %v562, %v570
    %v574 = vadd.f32 %v563, %v570
    %v575 = vadd.f32 %v564, %v570
    %v576 = vadd.f32 %v565, %v570
    %v577 = vadd.f32 %v566, %v570
    %v578 = vmax.f32 %v572, 0.0
    %v579 = vmax.f32 %v573, 0.0
    %v580 = vmax.f32 %v574, 0.0
    %v581 = vmax.f32 %v575, 0.0
    %v582 = vmax.f32 %v576, 0.0
    %v583 = vmax.f32 %v577, 0.0
    %v584 = vmul.f32 %v578, %v493
    %v585 = vmul.f32 %v579, %v497
    %v586 = vmul.f32 %v580, %v501
    %v587 = vmul.f32 %v581, %v505
    %v588 = vmul.f32 %v582, %v509
    %v589 = vmul.f32 %v583, %v513
    %v590 = vld [vmem:[%s4] sm:$0xff]
    %592 = vrot.lane.b32.xlu0 %v589, 19
    %v593 = vpop.permute.xlu0 %592
    %600 = vrot.lane.b32.xlu0 %v584, 19
    %v601 = vpop.permute.xlu0 %600
    %602 = vrot.lane.b32.xlu0 %v585, 19
    %v603 = vpop.permute.xlu0 %602
    %604 = vrot.lane.b32.xlu0 %v586, 19
    %v605 = vpop.permute.xlu0 %604
    %606 = vrot.lane.b32.xlu0 %v587, 19
    %v607 = vpop.permute.xlu0 %606
    %608 = vrot.lane.b32.xlu0 %v588, 19
    %v609 = vpop.permute.xlu0 %608
    %v610 = vsel %vm75, %v601, %v603
    %v611 = vsel %vm75, %v603, %v605
    %v612 = vsel %vm75, %v605, %v607
    %v613 = vsel %vm75, %v607, %v609
    %v614 = vsel %vm75, %v609, %v593
    %v621 = vsel %vm75, %v593, %v601
    %622 = vrot.lane.b32.xlu0 %v589, 18
    %v623 = vpop.permute.xlu0 %622
    %625 = vrot.lane.b32.xlu0 %v584, 18
    %v626 = vpop.permute.xlu0 %625
    %627 = vrot.lane.b32.xlu0 %v585, 18
    %v628 = vpop.permute.xlu0 %627
    %629 = vrot.lane.b32.xlu0 %v586, 18
    %v630 = vpop.permute.xlu0 %629
    %631 = vrot.lane.b32.xlu0 %v587, 18
    %v632 = vpop.permute.xlu0 %631
    %633 = vrot.lane.b32.xlu0 %v588, 18
    %v634 = vpop.permute.xlu0 %633
    %v635 = vsel %vm101, %v626, %v628
    %v636 = vsel %vm101, %v628, %v630
    %v637 = vsel %vm101, %v630, %v632
    %v638 = vsel %vm101, %v632, %v634
    %v639 = vsel %vm101, %v634, %v623
    %v646 = vsel %vm101, %v623, %v626
    %647 = vrot.lane.b32.xlu0 %v589, 17
    %v648 = vpop.permute.xlu0 %647
    %650 = vrot.lane.b32.xlu0 %v584, 17
    %v651 = vpop.permute.xlu0 %650
    %652 = vrot.lane.b32.xlu0 %v585, 17
    %v653 = vpop.permute.xlu0 %652
    %654 = vrot.lane.b32.xlu0 %v586, 17
    %v655 = vpop.permute.xlu0 %654
    %656 = vrot.lane.b32.xlu0 %v587, 17
    %v657 = vpop.permute.xlu0 %656
    %658 = vrot.lane.b32.xlu0 %v588, 17
    %v659 = vpop.permute.xlu0 %658
    %v660 = vsel %vm127, %v651, %v653
    %v661 = vsel %vm127, %v653, %v655
    %v662 = vsel %vm127, %v655, %v657
    %v663 = vsel %vm127, %v657, %v659
    %v664 = vsel %vm127, %v659, %v648
    %v671 = vsel %vm127, %v648, %v651
    %672 = vrot.lane.b32.xlu0 %v589, 1
    %v673 = vpop.permute.xlu0 %672
    %675 = vrot.lane.b32.xlu0 %v584, 1
    %v676 = vpop.permute.xlu0 %675
    %677 = vrot.lane.b32.xlu0 %v585, 1
    %v678 = vpop.permute.xlu0 %677
    %679 = vrot.lane.b32.xlu0 %v586, 1
    %v680 = vpop.permute.xlu0 %679
    %681 = vrot.lane.b32.xlu0 %v587, 1
    %v682 = vpop.permute.xlu0 %681
    %683 = vrot.lane.b32.xlu0 %v588, 1
    %v684 = vpop.permute.xlu0 %683
    %v685 = vsel %vm153, %v676, %v678
    %v686 = vsel %vm153, %v678, %v680
    %v687 = vsel %vm153, %v680, %v682
    %v688 = vsel %vm153, %v682, %v684
    %v689 = vsel %vm153, %v684, %v673
    %v696 = vsel %vm153, %v673, %v676
    %697 = vrot.lane.b32.xlu0 %v584, 127
    %v698 = vpop.permute.xlu0 %697
    %699 = vrot.lane.b32.xlu0 %v585, 127
    %v700 = vpop.permute.xlu0 %699
    %701 = vrot.lane.b32.xlu0 %v586, 127
    %v702 = vpop.permute.xlu0 %701
    %703 = vrot.lane.b32.xlu0 %v587, 127
    %v704 = vpop.permute.xlu0 %703
    %705 = vrot.lane.b32.xlu0 %v588, 127
    %v706 = vpop.permute.xlu0 %705
    %707 = vrot.lane.b32.xlu0 %v589, 127
    %v708 = vpop.permute.xlu0 %707
    %v709 = vsel %vm178, %v698, %v700
    %v710 = vsel %vm178, %v700, %v702
    %v711 = vsel %vm178, %v702, %v704
    %v712 = vsel %vm178, %v704, %v706
    %v713 = vsel %vm178, %v706, %v708
    %v721 = vsel %vm178, %v708, %v698
    %722 = vrot.lane.b32.xlu0 %v584, 111
    %v723 = vpop.permute.xlu0 %722
    %724 = vrot.lane.b32.xlu0 %v585, 111
    %v725 = vpop.permute.xlu0 %724
    %726 = vrot.lane.b32.xlu0 %v586, 111
    %v727 = vpop.permute.xlu0 %726
    %728 = vrot.lane.b32.xlu0 %v587, 111
    %v729 = vpop.permute.xlu0 %728
    %730 = vrot.lane.b32.xlu0 %v588, 111
    %v731 = vpop.permute.xlu0 %730
    %732 = vrot.lane.b32.xlu0 %v589, 111
    %v733 = vpop.permute.xlu0 %732
    %v734 = vsel %vm204, %v723, %v725
    %v735 = vsel %vm204, %v725, %v727
    %v736 = vsel %vm204, %v727, %v729
    %v737 = vsel %vm204, %v729, %v731
    %v738 = vsel %vm204, %v731, %v733
    %v746 = vsel %vm204, %v733, %v723
    %747 = vrot.lane.b32.xlu0 %v584, 110
    %v748 = vpop.permute.xlu0 %747
    %749 = vrot.lane.b32.xlu0 %v585, 110
    %v750 = vpop.permute.xlu0 %749
    %751 = vrot.lane.b32.xlu0 %v586, 110
    %v752 = vpop.permute.xlu0 %751
    %753 = vrot.lane.b32.xlu0 %v587, 110
    %v754 = vpop.permute.xlu0 %753
    %755 = vrot.lane.b32.xlu0 %v588, 110
    %v756 = vpop.permute.xlu0 %755
    %757 = vrot.lane.b32.xlu0 %v589, 110
    %v758 = vpop.permute.xlu0 %757
    %v759 = vsel %vm230, %v748, %v750
    %v760 = vsel %vm230, %v750, %v752
    %v761 = vsel %vm230, %v752, %v754
    %v762 = vsel %vm230, %v754, %v756
    %v763 = vsel %vm230, %v756, %v758
    %v771 = vsel %vm230, %v758, %v748
    %772 = vrot.lane.b32.xlu0 %v584, 109
    %v773 = vpop.permute.xlu0 %772
    %774 = vrot.lane.b32.xlu0 %v585, 109
    %v775 = vpop.permute.xlu0 %774
    %776 = vrot.lane.b32.xlu0 %v586, 109
    %v777 = vpop.permute.xlu0 %776
    %778 = vrot.lane.b32.xlu0 %v587, 109
    %v779 = vpop.permute.xlu0 %778
    %780 = vrot.lane.b32.xlu0 %v588, 109
    %v781 = vpop.permute.xlu0 %780
    %782 = vrot.lane.b32.xlu0 %v589, 109
    %v783 = vpop.permute.xlu0 %782
    %v784 = vsel %vm256, %v773, %v775
    %v785 = vsel %vm256, %v775, %v777
    %v786 = vsel %vm256, %v777, %v779
    %v787 = vsel %vm256, %v779, %v781
    %v788 = vsel %vm256, %v781, %v783
    %v796 = vsel %vm256, %v783, %v773
    %v798 = vsel %vm270, %v590, 0
    %800 = vmatprep.subr.mxu0 %v610
    %801 = vmatpush1.msra.mxu0 %v621
    %802 = vmatprep.subr.mxu0 %v635
    %803 = vmatpush1.msra.mxu0 %v646
    %804 = vmatprep.subr.mxu0 %v660
    %805 = vmatpush1.msra.mxu0 %v671
    %806 = vmatprep.subr.mxu0 %v685
    %807 = vmatpush1.msra.mxu0 %v696
    %808 = vmatprep.subr.mxu0 %v585
    %809 = vmatpush1.msra.mxu0 %v584
    %810 = vmatprep.subr.mxu0 %v710
    %811 = vmatpush1.msra.mxu0 %v709
    %812 = vmatprep.subr.mxu0 %v735
    %813 = vmatpush1.msra.mxu0 %v734
    %814 = vmatprep.subr.mxu0 %v760
    %815 = vmatpush1.msra.mxu0 %v759
    %816 = vmatprep.subr.mxu0 %v785
    %817 = vmatpush1.msra.mxu0 %v784
    %818 = vmatprep.subr.mxu0 0.0
    %819 = vmatpush1.msra.mxu0 0.0
    %820 = vmatprep.subr.mxu0 0.0
    %821 = vmatpush1.msra.mxu0 0.0
    %822 = vmatprep.subr.mxu0 0.0
    %823 = vmatpush1.msra.mxu0 0.0
    %824 = vmatprep.subr.mxu0 0.0
    %825 = vmatpush1.msra.mxu0 0.0
    %826 = vmatprep.subr.mxu0 0.0
    %827 = vmatpush1.msra.mxu0 0.0
    %828 = vmatprep.subr.mxu0 0.0
    %829 = vmatpush1.msra.mxu0 0.0
    %830 = vmatprep.subr.mxu0 0.0
    %831 = vmatpush1.msra.mxu0 0.0
    %832 = vmatprep.subr.mxu0 0.0
    %833 = vmatpush1.msra.mxu0 0.0
    %834 = vmatprep.subr.mxu0 0.0
    %835 = vmatpush1.msra.mxu0 0.0
    %836 = vmatprep.subr.mxu0 0.0
    %837 = vmatpush1.msra.mxu0 0.0
    %838 = vmatprep.subr.mxu0 0.0
    %839 = vmatpush1.msra.mxu0 0.0
    %840 = vmatprep.subr.mxu0 0.0
    %841 = vmatpush1.msra.mxu0 0.0
    %842 = vmatprep.subr.mxu0 0.0
    %843 = vmatpush1.msra.mxu0 0.0
    %844 = vmatprep.subr.mxu0 0.0
    %845 = vmatpush1.msra.mxu0 0.0
    %846 = vmatprep.subr.mxu0 0.0
    %847 = vmatpush1.msra.mxu0 0.0
    %848 = vmatprep.subr.mxu0 0.0
    %849 = vmatpush1.msra.mxu0 0.0
    %850 = vmatprep.subr.mxu0 0.0
    %851 = vmatpush1.msra.mxu0 0.0
    %852 = vmatprep.subr.mxu0 0.0
    %853 = vmatpush1.msra.mxu0 0.0
    %854 = vmatprep.subr.mxu0 0.0
    %855 = vmatpush1.msra.mxu0 0.0
    %856 = vmatprep.subr.mxu0 0.0
    %857 = vmatpush1.msra.mxu0 0.0
    %858 = vmatprep.subr.mxu0 0.0
    %859 = vmatpush1.msra.mxu0 0.0
    %860 = vmatprep.subr.mxu0 0.0
    %861 = vmatpush1.msra.mxu0 0.0
    %862 = vmatprep.subr.mxu0 0.0
    %863 = vmatpush1.msra.mxu0 0.0
    %864 = vmatprep.mubr.f32.mxu0 0.0
    %865 = vmatmul.mubr.f32.gmra.mrb[0].mxu0 %v798
    %v866 = vpop.f32.mrb[0].mxu0
    %v867 = vadd.f32 0.0, %v866
    %v868 = vpop.f32.mrb[0].mxu0
    %v869 = vadd.f32 0.0, %v868
    %870 = vdwg.mxu0
    %871 = vmatprep.subr.mxu0 %v612
    %872 = vmatpush1.msra.mxu0 %v611
    %873 = vmatprep.subr.mxu0 %v637
    %874 = vmatpush1.msra.mxu0 %v636
    %875 = vmatprep.subr.mxu0 %v662
    %876 = vmatpush1.msra.mxu0 %v661
    %877 = vmatprep.subr.mxu0 %v687
    %878 = vmatpush1.msra.mxu0 %v686
    %879 = vmatprep.subr.mxu0 %v587
    %880 = vmatpush1.msra.mxu0 %v586
    %881 = vmatprep.subr.mxu0 %v712
    %882 = vmatpush1.msra.mxu0 %v711
    %883 = vmatprep.subr.mxu0 %v737
    %884 = vmatpush1.msra.mxu0 %v736
    %885 = vmatprep.subr.mxu0 %v762
    %886 = vmatpush1.msra.mxu0 %v761
    %887 = vmatprep.subr.mxu0 %v787
    %888 = vmatpush1.msra.mxu0 %v786
    %889 = vmatprep.subr.mxu0 0.0
    %890 = vmatpush1.msra.mxu0 0.0
    %891 = vmatprep.subr.mxu0 0.0
    %892 = vmatpush1.msra.mxu0 0.0
    %893 = vmatprep.subr.mxu0 0.0
    %894 = vmatpush1.msra.mxu0 0.0
    %895 = vmatprep.subr.mxu0 0.0
    %896 = vmatpush1.msra.mxu0 0.0
    %897 = vmatprep.subr.mxu0 0.0
    %898 = vmatpush1.msra.mxu0 0.0
    %899 = vmatprep.subr.mxu0 0.0
    %900 = vmatpush1.msra.mxu0 0.0
    %901 = vmatprep.subr.mxu0 0.0
    %902 = vmatpush1.msra.mxu0 0.0
    %903 = vmatprep.subr.mxu0 0.0
    %904 = vmatpush1.msra.mxu0 0.0
    %905 = vmatprep.subr.mxu0 0.0
    %906 = vmatpush1.msra.mxu0 0.0
    %907 = vmatprep.subr.mxu0 0.0
    %908 = vmatpush1.msra.mxu0 0.0
    %909 = vmatprep.subr.mxu0 0.0
    %910 = vmatpush1.msra.mxu0 0.0
    %911 = vmatprep.subr.mxu0 0.0
    %912 = vmatpush1.msra.mxu0 0.0
    %913 = vmatprep.subr.mxu0 0.0
    %914 = vmatpush1.msra.mxu0 0.0
    %915 = vmatprep.subr.mxu0 0.0
    %916 = vmatpush1.msra.mxu0 0.0
    %917 = vmatprep.subr.mxu0 0.0
    %918 = vmatpush1.msra.mxu0 0.0
    %919 = vmatprep.subr.mxu0 0.0
    %920 = vmatpush1.msra.mxu0 0.0
    %921 = vmatprep.subr.mxu0 0.0
    %922 = vmatpush1.msra.mxu0 0.0
    %923 = vmatprep.subr.mxu0 0.0
    %924 = vmatpush1.msra.mxu0 0.0
    %925 = vmatprep.subr.mxu0 0.0
    %926 = vmatpush1.msra.mxu0 0.0
    %927 = vmatprep.subr.mxu0 0.0
    %928 = vmatpush1.msra.mxu0 0.0
    %929 = vmatprep.subr.mxu0 0.0
    %930 = vmatpush1.msra.mxu0 0.0
    %931 = vmatprep.subr.mxu0 0.0
    %932 = vmatpush1.msra.mxu0 0.0
    %933 = vmatprep.subr.mxu0 0.0
    %934 = vmatpush1.msra.mxu0 0.0
    %935 = vmatprep.mubr.f32.mxu0 0.0
    %936 = vmatmul.mubr.f32.gmra.mrb[0].mxu0 %v798
    %v937 = vpop.f32.mrb[0].mxu0
    %v938 = vadd.f32 0.0, %v937
    %v939 = vpop.f32.mrb[0].mxu0
    %v940 = vadd.f32 0.0, %v939
    %941 = vdwg.mxu0
    %942 = vmatprep.subr.mxu0 %v614
    %943 = vmatpush1.msra.mxu0 %v613
    %944 = vmatprep.subr.mxu0 %v639
    %945 = vmatpush1.msra.mxu0 %v638
    %946 = vmatprep.subr.mxu0 %v664
    %947 = vmatpush1.msra.mxu0 %v663
    %948 = vmatprep.subr.mxu0 %v689
    %949 = vmatpush1.msra.mxu0 %v688
    %950 = vmatprep.subr.mxu0 %v589
    %951 = vmatpush1.msra.mxu0 %v588
    %952 = vmatprep.subr.mxu0 %v721
    %953 = vmatpush1.msra.mxu0 %v713
    %954 = vmatprep.subr.mxu0 %v746
    %955 = vmatpush1.msra.mxu0 %v738
    %956 = vmatprep.subr.mxu0 %v771
    %957 = vmatpush1.msra.mxu0 %v763
    %958 = vmatprep.subr.mxu0 %v796
    %959 = vmatpush1.msra.mxu0 %v788
    %960 = vmatprep.subr.mxu0 0.0
    %961 = vmatpush1.msra.mxu0 0.0
    %962 = vmatprep.subr.mxu0 0.0
    %963 = vmatpush1.msra.mxu0 0.0
    %964 = vmatprep.subr.mxu0 0.0
    %965 = vmatpush1.msra.mxu0 0.0
    %966 = vmatprep.subr.mxu0 0.0
    %967 = vmatpush1.msra.mxu0 0.0
    %968 = vmatprep.subr.mxu0 0.0
    %969 = vmatpush1.msra.mxu0 0.0
    %970 = vmatprep.subr.mxu0 0.0
    %971 = vmatpush1.msra.mxu0 0.0
    %972 = vmatprep.subr.mxu0 0.0
    %973 = vmatpush1.msra.mxu0 0.0
    %974 = vmatprep.subr.mxu0 0.0
    %975 = vmatpush1.msra.mxu0 0.0
    %976 = vmatprep.subr.mxu0 0.0
    %977 = vmatpush1.msra.mxu0 0.0
    %978 = vmatprep.subr.mxu0 0.0
    %979 = vmatpush1.msra.mxu0 0.0
    %980 = vmatprep.subr.mxu0 0.0
    %981 = vmatpush1.msra.mxu0 0.0
    %982 = vmatprep.subr.mxu0 0.0
    %983 = vmatpush1.msra.mxu0 0.0
    %984 = vmatprep.subr.mxu0 0.0
    %985 = vmatpush1.msra.mxu0 0.0
    %986 = vmatprep.subr.mxu0 0.0
    %987 = vmatpush1.msra.mxu0 0.0
    %988 = vmatprep.subr.mxu0 0.0
    %989 = vmatpush1.msra.mxu0 0.0
    %990 = vmatprep.subr.mxu0 0.0
    %991 = vmatpush1.msra.mxu0 0.0
    %992 = vmatprep.subr.mxu0 0.0
    %993 = vmatpush1.msra.mxu0 0.0
    %994 = vmatprep.subr.mxu0 0.0
    %995 = vmatpush1.msra.mxu0 0.0
    %996 = vmatprep.subr.mxu0 0.0
    %997 = vmatpush1.msra.mxu0 0.0
    %998 = vmatprep.subr.mxu0 0.0
    %999 = vmatpush1.msra.mxu0 0.0
    %1000 = vmatprep.subr.mxu0 0.0
    %1001 = vmatpush1.msra.mxu0 0.0
    %1002 = vmatprep.subr.mxu0 0.0
    %1003 = vmatpush1.msra.mxu0 0.0
    %1004 = vmatprep.subr.mxu0 0.0
    %1005 = vmatpush1.msra.mxu0 0.0
    %1006 = vmatprep.mubr.f32.mxu0 0.0
    %1007 = vmatmul.mubr.f32.gmra.mrb[0].mxu0 %v798
    %v1008 = vpop.f32.mrb[0].mxu0
    %v1009 = vadd.f32 0.0, %v1008
    %v1010 = vpop.f32.mrb[0].mxu0
    %v1011 = vadd.f32 0.0, %v1010
    %1012 = vdwg.mxu0
    %v1013 = vld [vmem:[%s5] sm:$0xff]
    %v1014 = vld [vmem:[%s6] sm:$0xff]
    %v1015 = vmul.f32 %v867, %v493
    %v1016 = vmul.f32 %v869, %v497
    %v1017 = vmul.f32 %v938, %v501
    %v1018 = vmul.f32 %v940, %v505
    %v1019 = vmul.f32 %v1009, %v509
    %v1020 = vmul.f32 %v1011, %v513
    %v1021 = vadd.f32 %v1015, %v1016
    %v1022 = vadd.f32 %v1021, %v1017
    %v1023 = vadd.f32 %v1022, %v1018
    %v1024 = vadd.f32 %v1023, %v1019
    %v1025 = vadd.f32 %v1024, %v1020
    %1026 = vadd.xlane.f32.xlu0 %v1025
    %v1027 = vpop.xlane.xlu0 %1026
    %v1028 = vmul.f32 %v1027, 0.001953125
    %v1029 = vmul.f32 %v1015, %v867
    %v1030 = vmul.f32 %v1016, %v869
    %v1031 = vmul.f32 %v1017, %v938
    %v1032 = vmul.f32 %v1018, %v940
    %v1033 = vmul.f32 %v1019, %v1009
    %v1034 = vmul.f32 %v1020, %v1011
    %v1035 = vadd.f32 %v1029, %v1030
    %v1036 = vadd.f32 %v1035, %v1031
    %v1037 = vadd.f32 %v1036, %v1032
    %v1038 = vadd.f32 %v1037, %v1033
    %v1039 = vadd.f32 %v1038, %v1034
    %1040 = vadd.xlane.f32.xlu0 %v1039
    %v1041 = vpop.xlane.xlu0 %1040
    %v1042 = vmul.f32 %v1041, 0.001953125
    %v1043 = vmul.f32 %v1028, %v1028
    %v1044 = vsub.f32 %v1042, %v1043
    %v1045 = vmax.f32 %v1044, 0.0
    %v1046 = vadd.f32 %v1045, 1e-05
    %v1047 = vrsqrt.pop %v1046
    %v1048 = vmul.f32 %v1013, %v1047
    %v1049 = vmul.f32 %v1028, %v1048
    %v1050 = vsub.f32 %v1014, %v1049
    %1052 = vset.pattern.permute.xlu0 0
    %1053 = vperm.xlu0 %1052, %v1048
    %v1054 = vpop.permute.xlu0 %1053
    %v1056 = vmul.f32 %v867, %v1054
    %v1057 = vmul.f32 %v869, %v1054
    %v1058 = vmul.f32 %v938, %v1054
    %v1059 = vmul.f32 %v940, %v1054
    %v1060 = vmul.f32 %v1009, %v1054
    %v1061 = vmul.f32 %v1011, %v1054
    %1063 = vset.pattern.permute.xlu0 0
    %1064 = vperm.xlu0 %1063, %v1050
    %v1065 = vpop.permute.xlu0 %1064
    %v1067 = vadd.f32 %v1056, %v1065
    %v1068 = vadd.f32 %v1057, %v1065
    %v1069 = vadd.f32 %v1058, %v1065
    %v1070 = vadd.f32 %v1059, %v1065
    %v1071 = vadd.f32 %v1060, %v1065
    %v1072 = vadd.f32 %v1061, %v1065
    %v1073 = vmax.f32 %v1067, 0.0
    %v1074 = vmax.f32 %v1068, 0.0
    %v1075 = vmax.f32 %v1069, 0.0
    %v1076 = vmax.f32 %v1070, 0.0
    %v1077 = vmax.f32 %v1071, 0.0
    %v1078 = vmax.f32 %v1072, 0.0
    %v1079 = vmul.f32 %v1073, %v493
    %v1080 = vmul.f32 %v1074, %v497
    %v1081 = vmul.f32 %v1075, %v501
    %v1082 = vmul.f32 %v1076, %v505
    %v1083 = vmul.f32 %v1077, %v509
    %v1084 = vmul.f32 %v1078, %v513
    %1085 = vst [vmem:[%s9] sm:$0xff] %v1079
    %1086 = vst [vmem:[%s9 + $0x8] sm:$0xff] %v1080
    %1087 = vst [vmem:[%s9 + $0x10] sm:$0xff] %v1081
    %1088 = vst [vmem:[%s9 + $0x18] sm:$0xff] %v1082
    %1089 = vst [vmem:[%s9 + $0x20] sm:$0xff] %v1083
    %1090 = vst [vmem:[%s9 + $0x28] sm:$0xff] %v1084
    %1097 = vrot.lane.b32.xlu0 %v1079, 127
    %v1098 = vpop.permute.xlu0 %1097
    %1099 = vrot.lane.b32.xlu0 %v1080, 127
    %v1100 = vpop.permute.xlu0 %1099
    %1101 = vrot.lane.b32.xlu0 %v1081, 127
    %v1102 = vpop.permute.xlu0 %1101
    %1103 = vrot.lane.b32.xlu0 %v1082, 127
    %v1104 = vpop.permute.xlu0 %1103
    %1105 = vrot.lane.b32.xlu0 %v1083, 127
    %v1106 = vpop.permute.xlu0 %1105
    %1107 = vrot.lane.b32.xlu0 %v1084, 127
    %v1108 = vpop.permute.xlu0 %1107
    %v1109 = vsel %vm178, %v1098, %v1100
    %v1110 = vsel %vm178, %v1100, %v1102
    %v1111 = vsel %vm178, %v1102, %v1104
    %v1112 = vsel %vm178, %v1104, %v1106
    %v1113 = vsel %vm178, %v1106, %v1108
    %v1121 = vsel %vm178, %v1108, %v1098
    %v1122 = vmax.f32 %v1079, %v1109
    %v1123 = vmax.f32 %v1080, %v1110
    %v1124 = vmax.f32 %v1081, %v1111
    %v1125 = vmax.f32 %v1082, %v1112
    %v1126 = vmax.f32 %v1083, %v1113
    %v1127 = vmax.f32 %v1084, %v1121
    %1128 = vrot.lane.b32.xlu0 %v1079, 110
    %v1129 = vpop.permute.xlu0 %1128
    %1130 = vrot.lane.b32.xlu0 %v1080, 110
    %v1131 = vpop.permute.xlu0 %1130
    %1132 = vrot.lane.b32.xlu0 %v1081, 110
    %v1133 = vpop.permute.xlu0 %1132
    %1134 = vrot.lane.b32.xlu0 %v1082, 110
    %v1135 = vpop.permute.xlu0 %1134
    %1136 = vrot.lane.b32.xlu0 %v1083, 110
    %v1137 = vpop.permute.xlu0 %1136
    %1138 = vrot.lane.b32.xlu0 %v1084, 110
    %v1139 = vpop.permute.xlu0 %1138
    %v1140 = vsel %vm230, %v1129, %v1131
    %v1141 = vsel %vm230, %v1131, %v1133
    %v1142 = vsel %vm230, %v1133, %v1135
    %v1143 = vsel %vm230, %v1135, %v1137
    %v1144 = vsel %vm230, %v1137, %v1139
    %v1152 = vsel %vm230, %v1139, %v1129
    %1153 = vrot.lane.b32.xlu0 %v1079, 109
    %v1154 = vpop.permute.xlu0 %1153
    %1155 = vrot.lane.b32.xlu0 %v1080, 109
    %v1156 = vpop.permute.xlu0 %1155
    %1157 = vrot.lane.b32.xlu0 %v1081, 109
    %v1158 = vpop.permute.xlu0 %1157
    %1159 = vrot.lane.b32.xlu0 %v1082, 109
    %v1160 = vpop.permute.xlu0 %1159
    %1161 = vrot.lane.b32.xlu0 %v1083, 109
    %v1162 = vpop.permute.xlu0 %1161
    %1163 = vrot.lane.b32.xlu0 %v1084, 109
    %v1164 = vpop.permute.xlu0 %1163
    %v1165 = vsel %vm256, %v1154, %v1156
    %v1166 = vsel %vm256, %v1156, %v1158
    %v1167 = vsel %vm256, %v1158, %v1160
    %v1168 = vsel %vm256, %v1160, %v1162
    %v1169 = vsel %vm256, %v1162, %v1164
    %v1177 = vsel %vm256, %v1164, %v1154
    %v1178 = vmax.f32 %v1140, %v1165
    %v1179 = vmax.f32 %v1141, %v1166
    %v1180 = vmax.f32 %v1142, %v1167
    %v1181 = vmax.f32 %v1143, %v1168
    %v1182 = vmax.f32 %v1144, %v1169
    %v1183 = vmax.f32 %v1152, %v1177
    %v1184 = vmax.f32 %v1122, %v1178
    %v1185 = vmax.f32 %v1123, %v1179
    %v1186 = vmax.f32 %v1124, %v1180
    %v1187 = vmax.f32 %v1125, %v1181
    %v1188 = vmax.f32 %v1126, %v1182
    %v1189 = vmax.f32 %v1127, %v1183
    %v1190 = vld [vmem:[#allocation2] sm:$0xff]
    %v1191 = vld [vmem:[#allocation2 + $0x8] sm:$0xff]
    %v1192 = vld [vmem:[#allocation2 + $0x10] sm:$0xff]
    %v1193 = vld [vmem:[#allocation2 + $0x18] sm:$0xff]
    %v1194 = vld [vmem:[#allocation2 + $0x20] sm:$0xff]
    %v1195 = vld [vmem:[#allocation2 + $0x28] sm:$0xff]
    %v1196 = vld [vmem:[#allocation2 + $0x30] sm:$0xff]
    %v1197 = vld [vmem:[#allocation2 + $0x38] sm:$0xff]
    %v1198 = vld [vmem:[#allocation2 + $0x40] sm:$0xff]
    %v1199 = vld [vmem:[#allocation2 + $0x48] sm:$0xff]
    %v1200 = vld [vmem:[#allocation2 + $0x50] sm:$0xff]
    %v1201 = vld [vmem:[#allocation2 + $0x58] sm:$0xff]
    %v1202 = vld [vmem:[#allocation2 + $0x60] sm:$0xff]
    %v1203 = vld [vmem:[#allocation2 + $0x68] sm:$0xff]
    %v1204 = vld [vmem:[#allocation2 + $0x70] sm:$0xff]
    %v1205 = vld [vmem:[#allocation2 + $0x78] sm:$0xff]
    %v1206 = vld [vmem:[#allocation2 + $0x80] sm:$0xff]
    %v1207 = vld [vmem:[#allocation2 + $0x88] sm:$0xff]
    %v1208 = vld [vmem:[#allocation2 + $0x90] sm:$0xff]
    %v1209 = vld [vmem:[#allocation2 + $0x98] sm:$0xff]
    %v1210 = vld [vmem:[#allocation2 + $0xa0] sm:$0xff]
    %v1211 = vld [vmem:[#allocation2 + $0xa8] sm:$0xff]
    %v1212 = vld [vmem:[#allocation2 + $0xb0] sm:$0xff]
    %v1213 = vld [vmem:[#allocation2 + $0xb8] sm:$0xff]
    %v1214 = vld [vmem:[#allocation2 + $0xc0] sm:$0xff]
    %v1215 = vld [vmem:[#allocation2 + $0xc8] sm:$0xff]
    %v1216 = vld [vmem:[#allocation2 + $0xd0] sm:$0xff]
    %v1217 = vld [vmem:[#allocation2 + $0xd8] sm:$0xff]
    %v1218 = vld [vmem:[#allocation2 + $0xe0] sm:$0xff]
    %v1219 = vld [vmem:[#allocation2 + $0xe8] sm:$0xff]
    %v1220 = vld [vmem:[#allocation2 + $0xf0] sm:$0xff]
    %v1221 = vld [vmem:[#allocation2 + $0xf8] sm:$0xff]
    %v1222 = vld [vmem:[#allocation2 + $0x100] sm:$0xff]
    %v1223 = vld [vmem:[#allocation2 + $0x108] sm:$0xff]
    %v1224 = vld [vmem:[#allocation2 + $0x110] sm:$0xff]
    %v1225 = vld [vmem:[#allocation2 + $0x118] sm:$0xff]
    %v1226 = vld [vmem:[#allocation2 + $0x120] sm:$0xff]
    %v1227 = vld [vmem:[#allocation2 + $0x128] sm:$0xff]
    %v1228 = vld [vmem:[#allocation2 + $0x130] sm:$0xff]
    %v1229 = vld [vmem:[#allocation2 + $0x138] sm:$0xff]
    %v1230 = vld [vmem:[#allocation2 + $0x140] sm:$0xff]
    %v1231 = vld [vmem:[#allocation2 + $0x148] sm:$0xff]
    %v1232 = vld [vmem:[#allocation2 + $0x150] sm:$0xff]
    %v1233 = vld [vmem:[#allocation2 + $0x158] sm:$0xff]
    %v1234 = vld [vmem:[#allocation2 + $0x160] sm:$0xff]
    %v1235 = vld [vmem:[#allocation2 + $0x168] sm:$0xff]
    %v1236 = vld [vmem:[#allocation2 + $0x170] sm:$0xff]
    %v1237 = vld [vmem:[#allocation2 + $0x178] sm:$0xff]
    %v1238 = vld [vmem:[#allocation2 + $0x180] sm:$0xff]
    %v1239 = vld [vmem:[#allocation2 + $0x188] sm:$0xff]
    %v1240 = vld [vmem:[#allocation2 + $0x190] sm:$0xff]
    %v1241 = vld [vmem:[#allocation2 + $0x198] sm:$0xff]
    %v1242 = vld [vmem:[#allocation2 + $0x1a0] sm:$0xff]
    %v1243 = vld [vmem:[#allocation2 + $0x1a8] sm:$0xff]
    %v1244 = vld [vmem:[#allocation2 + $0x1b0] sm:$0xff]
    %v1245 = vld [vmem:[#allocation2 + $0x1b8] sm:$0xff]
    %v1246 = vld [vmem:[#allocation2 + $0x1c0] sm:$0xff]
    %v1247 = vld [vmem:[#allocation2 + $0x1c8] sm:$0xff]
    %v1248 = vld [vmem:[#allocation2 + $0x1d0] sm:$0xff]
    %v1249 = vld [vmem:[#allocation2 + $0x1d8] sm:$0xff]
    %v1250 = vld [vmem:[#allocation2 + $0x1e0] sm:$0xff]
    %v1251 = vld [vmem:[#allocation2 + $0x1e8] sm:$0xff]
    %v1252 = vld [vmem:[#allocation2 + $0x1f0] sm:$0xff]
    %v1253 = vld [vmem:[#allocation2 + $0x1f8] sm:$0xff]
    %v1254 = vld [vmem:[#allocation2 + $0x200] sm:$0xff]
    %v1255 = vld [vmem:[#allocation2 + $0x208] sm:$0xff]
    %v1256 = vld [vmem:[#allocation2 + $0x210] sm:$0xff]
    %v1257 = vld [vmem:[#allocation2 + $0x218] sm:$0xff]
    %v1258 = vld [vmem:[#allocation2 + $0x220] sm:$0xff]
    %v1259 = vld [vmem:[#allocation2 + $0x228] sm:$0xff]
    %v1260 = vld [vmem:[#allocation2 + $0x230] sm:$0xff]
    %v1261 = vld [vmem:[#allocation2 + $0x238] sm:$0xff]
    %v1262 = vld [vmem:[#allocation2 + $0x240] sm:$0xff]
    %v1263 = vld [vmem:[#allocation2 + $0x248] sm:$0xff]
    %v1264 = vld [vmem:[#allocation2 + $0x250] sm:$0xff]
    %v1265 = vld [vmem:[#allocation2 + $0x258] sm:$0xff]
    %v1266 = vld [vmem:[#allocation2 + $0x260] sm:$0xff]
    %v1267 = vld [vmem:[#allocation2 + $0x268] sm:$0xff]
    %v1268 = vld [vmem:[#allocation2 + $0x270] sm:$0xff]
    %v1269 = vld [vmem:[#allocation2 + $0x278] sm:$0xff]
    %v1270 = vld [vmem:[#allocation2 + $0x280] sm:$0xff]
    %v1271 = vld [vmem:[#allocation2 + $0x288] sm:$0xff]
    %v1272 = vld [vmem:[#allocation2 + $0x290] sm:$0xff]
    %v1273 = vld [vmem:[#allocation2 + $0x298] sm:$0xff]
    %v1274 = vld [vmem:[#allocation2 + $0x2a0] sm:$0xff]
    %v1275 = vld [vmem:[#allocation2 + $0x2a8] sm:$0xff]
    %v1276 = vld [vmem:[#allocation2 + $0x2b0] sm:$0xff]
    %v1277 = vld [vmem:[#allocation2 + $0x2b8] sm:$0xff]
    %v1278 = vld [vmem:[#allocation2 + $0x2c0] sm:$0xff]
    %v1279 = vld [vmem:[#allocation2 + $0x2c8] sm:$0xff]
    %v1280 = vld [vmem:[#allocation2 + $0x2d0] sm:$0xff]
    %v1281 = vld [vmem:[#allocation2 + $0x2d8] sm:$0xff]
    %v1282 = vld [vmem:[#allocation2 + $0x2e0] sm:$0xff]
    %v1283 = vld [vmem:[#allocation2 + $0x2e8] sm:$0xff]
    %v1284 = vld [vmem:[#allocation2 + $0x2f0] sm:$0xff]
    %v1285 = vld [vmem:[#allocation2 + $0x2f8] sm:$0xff]
    %v1286 = vld [vmem:[#allocation2 + $0x300] sm:$0xff]
    %v1287 = vld [vmem:[#allocation2 + $0x308] sm:$0xff]
    %v1288 = vld [vmem:[#allocation2 + $0x310] sm:$0xff]
    %v1289 = vld [vmem:[#allocation2 + $0x318] sm:$0xff]
    %v1290 = vld [vmem:[#allocation2 + $0x320] sm:$0xff]
    %v1291 = vld [vmem:[#allocation2 + $0x328] sm:$0xff]
    %v1292 = vld [vmem:[#allocation2 + $0x330] sm:$0xff]
    %v1293 = vld [vmem:[#allocation2 + $0x338] sm:$0xff]
    %v1294 = vld [vmem:[#allocation2 + $0x340] sm:$0xff]
    %v1295 = vld [vmem:[#allocation2 + $0x348] sm:$0xff]
    %v1296 = vld [vmem:[#allocation2 + $0x350] sm:$0xff]
    %v1297 = vld [vmem:[#allocation2 + $0x358] sm:$0xff]
    %v1298 = vld [vmem:[#allocation2 + $0x360] sm:$0xff]
    %v1299 = vld [vmem:[#allocation2 + $0x368] sm:$0xff]
    %v1300 = vld [vmem:[#allocation2 + $0x370] sm:$0xff]
    %v1301 = vld [vmem:[#allocation2 + $0x378] sm:$0xff]
    %v1302 = vld [vmem:[#allocation2 + $0x380] sm:$0xff]
    %v1303 = vld [vmem:[#allocation2 + $0x388] sm:$0xff]
    %v1304 = vld [vmem:[#allocation2 + $0x390] sm:$0xff]
    %v1305 = vld [vmem:[#allocation2 + $0x398] sm:$0xff]
    %v1306 = vld [vmem:[#allocation2 + $0x3a0] sm:$0xff]
    %v1307 = vld [vmem:[#allocation2 + $0x3a8] sm:$0xff]
    %v1308 = vld [vmem:[#allocation2 + $0x3b0] sm:$0xff]
    %v1309 = vld [vmem:[#allocation2 + $0x3b8] sm:$0xff]
    %v1310 = vld [vmem:[#allocation2 + $0x3c0] sm:$0xff]
    %v1311 = vld [vmem:[#allocation2 + $0x3c8] sm:$0xff]
    %v1312 = vld [vmem:[#allocation2 + $0x3d0] sm:$0xff]
    %v1313 = vld [vmem:[#allocation2 + $0x3d8] sm:$0xff]
    %v1314 = vld [vmem:[#allocation2 + $0x3e0] sm:$0xff]
    %v1315 = vld [vmem:[#allocation2 + $0x3e8] sm:$0xff]
    %v1316 = vld [vmem:[#allocation2 + $0x3f0] sm:$0xff]
    %v1317 = vld [vmem:[#allocation2 + $0x3f8] sm:$0xff]
    %v1318 = vld [vmem:[#allocation2 + $0x400] sm:$0xff]
    %v1319 = vld [vmem:[#allocation2 + $0x408] sm:$0xff]
    %v1320 = vld [vmem:[#allocation2 + $0x410] sm:$0xff]
    %v1321 = vld [vmem:[#allocation2 + $0x418] sm:$0xff]
    %v1322 = vld [vmem:[#allocation2 + $0x420] sm:$0xff]
    %v1323 = vld [vmem:[#allocation2 + $0x428] sm:$0xff]
    %v1324 = vld [vmem:[#allocation2 + $0x430] sm:$0xff]
    %v1325 = vld [vmem:[#allocation2 + $0x438] sm:$0xff]
    %v1326 = vld [vmem:[#allocation2 + $0x440] sm:$0xff]
    %v1327 = vld [vmem:[#allocation2 + $0x448] sm:$0xff]
    %v1328 = vld [vmem:[#allocation2 + $0x450] sm:$0xff]
    %v1329 = vld [vmem:[#allocation2 + $0x458] sm:$0xff]
    %v1330 = vld [vmem:[#allocation2 + $0x460] sm:$0xff]
    %v1331 = vld [vmem:[#allocation2 + $0x468] sm:$0xff]
    %v1332 = vld [vmem:[#allocation2 + $0x470] sm:$0xff]
    %v1333 = vld [vmem:[#allocation2 + $0x478] sm:$0xff]
    %v1334 = vld [vmem:[#allocation2 + $0x480] sm:$0xff]
    %v1335 = vld [vmem:[#allocation2 + $0x488] sm:$0xff]
    %v1336 = vld [vmem:[#allocation2 + $0x490] sm:$0xff]
    %v1337 = vld [vmem:[#allocation2 + $0x498] sm:$0xff]
    %v1338 = vld [vmem:[#allocation2 + $0x4a0] sm:$0xff]
    %v1339 = vld [vmem:[#allocation2 + $0x4a8] sm:$0xff]
    %v1340 = vld [vmem:[#allocation2 + $0x4b0] sm:$0xff]
    %v1341 = vld [vmem:[#allocation2 + $0x4b8] sm:$0xff]
    %v1342 = vld [vmem:[#allocation2 + $0x4c0] sm:$0xff]
    %v1343 = vld [vmem:[#allocation2 + $0x4c8] sm:$0xff]
    %v1344 = vld [vmem:[#allocation2 + $0x4d0] sm:$0xff]
    %v1345 = vld [vmem:[#allocation2 + $0x4d8] sm:$0xff]
    %v1346 = vld [vmem:[#allocation2 + $0x4e0] sm:$0xff]
    %v1347 = vld [vmem:[#allocation2 + $0x4e8] sm:$0xff]
    %v1348 = vld [vmem:[#allocation2 + $0x4f0] sm:$0xff]
    %v1349 = vld [vmem:[#allocation2 + $0x4f8] sm:$0xff]
    %v1350 = vld [vmem:[#allocation2 + $0x500] sm:$0xff]
    %v1351 = vld [vmem:[#allocation2 + $0x508] sm:$0xff]
    %v1352 = vld [vmem:[#allocation2 + $0x510] sm:$0xff]
    %v1353 = vld [vmem:[#allocation2 + $0x518] sm:$0xff]
    %v1354 = vld [vmem:[#allocation2 + $0x520] sm:$0xff]
    %v1355 = vld [vmem:[#allocation2 + $0x528] sm:$0xff]
    %v1356 = vld [vmem:[#allocation2 + $0x530] sm:$0xff]
    %v1357 = vld [vmem:[#allocation2 + $0x538] sm:$0xff]
    %v1358 = vld [vmem:[#allocation2 + $0x540] sm:$0xff]
    %v1359 = vld [vmem:[#allocation2 + $0x548] sm:$0xff]
    %v1360 = vld [vmem:[#allocation2 + $0x550] sm:$0xff]
    %v1361 = vld [vmem:[#allocation2 + $0x558] sm:$0xff]
    %v1362 = vld [vmem:[#allocation2 + $0x560] sm:$0xff]
    %v1363 = vld [vmem:[#allocation2 + $0x568] sm:$0xff]
    %v1364 = vld [vmem:[#allocation2 + $0x570] sm:$0xff]
    %v1365 = vld [vmem:[#allocation2 + $0x578] sm:$0xff]
    %v1366 = vld [vmem:[#allocation2 + $0x580] sm:$0xff]
    %v1367 = vld [vmem:[#allocation2 + $0x588] sm:$0xff]
    %v1368 = vld [vmem:[#allocation2 + $0x590] sm:$0xff]
    %v1369 = vld [vmem:[#allocation2 + $0x598] sm:$0xff]
    %v1370 = vld [vmem:[#allocation2 + $0x5a0] sm:$0xff]
    %v1371 = vld [vmem:[#allocation2 + $0x5a8] sm:$0xff]
    %v1372 = vld [vmem:[#allocation2 + $0x5b0] sm:$0xff]
    %v1373 = vld [vmem:[#allocation2 + $0x5b8] sm:$0xff]
    %v1374 = vld [vmem:[#allocation2 + $0x5c0] sm:$0xff]
    %v1375 = vld [vmem:[#allocation2 + $0x5c8] sm:$0xff]
    %v1376 = vld [vmem:[#allocation2 + $0x5d0] sm:$0xff]
    %v1377 = vld [vmem:[#allocation2 + $0x5d8] sm:$0xff]
    %v1378 = vld [vmem:[#allocation2 + $0x5e0] sm:$0xff]
    %v1379 = vld [vmem:[#allocation2 + $0x5e8] sm:$0xff]
    %v1380 = vld [vmem:[#allocation2 + $0x5f0] sm:$0xff]
    %v1381 = vld [vmem:[#allocation2 + $0x5f8] sm:$0xff]
    %1382 = vmatprep.subr.mxu0 %v1191
    %1383 = vmatpush1.msra.mxu0 %v1190
    %1384 = vmatprep.subr.mxu0 %v1193
    %1385 = vmatpush1.msra.mxu0 %v1192
    %1386 = vmatprep.subr.mxu0 %v1195
    %1387 = vmatpush1.msra.mxu0 %v1194
    %1388 = vmatprep.subr.mxu0 %v1197
    %1389 = vmatpush1.msra.mxu0 %v1196
    %1390 = vmatprep.subr.mxu0 %v1199
    %1391 = vmatpush1.msra.mxu0 %v1198
    %1392 = vmatprep.subr.mxu0 %v1201
    %1393 = vmatpush1.msra.mxu0 %v1200
    %1394 = vmatprep.subr.mxu0 %v1203
    %1395 = vmatpush1.msra.mxu0 %v1202
    %1396 = vmatprep.subr.mxu0 %v1205
    %1397 = vmatpush1.msra.mxu0 %v1204
    %1398 = vmatprep.subr.mxu0 %v1207
    %1399 = vmatpush1.msra.mxu0 %v1206
    %1400 = vmatprep.subr.mxu0 %v1209
    %1401 = vmatpush1.msra.mxu0 %v1208
    %1402 = vmatprep.subr.mxu0 %v1211
    %1403 = vmatpush1.msra.mxu0 %v1210
    %1404 = vmatprep.subr.mxu0 %v1213
    %1405 = vmatpush1.msra.mxu0 %v1212
    %1406 = vmatprep.subr.mxu0 %v1215
    %1407 = vmatpush1.msra.mxu0 %v1214
    %1408 = vmatprep.subr.mxu0 %v1217
    %1409 = vmatpush1.msra.mxu0 %v1216
    %1410 = vmatprep.subr.mxu0 %v1219
    %1411 = vmatpush1.msra.mxu0 %v1218
    %1412 = vmatprep.subr.mxu0 %v1221
    %1413 = vmatpush1.msra.mxu0 %v1220
    %1414 = vmatprep.subr.mxu0 %v1223
    %1415 = vmatpush1.msra.mxu0 %v1222
    %1416 = vmatprep.subr.mxu0 %v1225
    %1417 = vmatpush1.msra.mxu0 %v1224
    %1418 = vmatprep.subr.mxu0 %v1227
    %1419 = vmatpush1.msra.mxu0 %v1226
    %1420 = vmatprep.subr.mxu0 %v1229
    %1421 = vmatpush1.msra.mxu0 %v1228
    %1422 = vmatprep.subr.mxu0 %v1231
    %1423 = vmatpush1.msra.mxu0 %v1230
    %1424 = vmatprep.subr.mxu0 %v1233
    %1425 = vmatpush1.msra.mxu0 %v1232
    %1426 = vmatprep.subr.mxu0 %v1235
    %1427 = vmatpush1.msra.mxu0 %v1234
    %1428 = vmatprep.subr.mxu0 %v1237
    %1429 = vmatpush1.msra.mxu0 %v1236
    %1430 = vmatprep.subr.mxu0 %v1239
    %1431 = vmatpush1.msra.mxu0 %v1238
    %1432 = vmatprep.subr.mxu0 %v1241
    %1433 = vmatpush1.msra.mxu0 %v1240
    %1434 = vmatprep.subr.mxu0 %v1243
    %1435 = vmatpush1.msra.mxu0 %v1242
    %1436 = vmatprep.subr.mxu0 %v1245
    %1437 = vmatpush1.msra.mxu0 %v1244
    %1438 = vmatprep.subr.mxu0 %v1247
    %1439 = vmatpush1.msra.mxu0 %v1246
    %1440 = vmatprep.subr.mxu0 %v1249
    %1441 = vmatpush1.msra.mxu0 %v1248
    %1442 = vmatprep.subr.mxu0 %v1251
    %1443 = vmatpush1.msra.mxu0 %v1250
    %1444 = vmatprep.subr.mxu0 %v1253
    %1445 = vmatpush1.msra.mxu0 %v1252
    %1446 = vmatprep.mubr.f32.mxu0 %v1185
    %1447 = vmatmul.mubr.f32.gmra.mrb[0].mxu0 %v1184
    %v1448 = vpop.f32.mrb[0].mxu0
    %v1449 = vadd.f32 0.0, %v1448
    %v1450 = vpop.f32.mrb[0].mxu0
    %v1451 = vadd.f32 0.0, %v1450
    %1452 = vdwg.mxu0
    %1453 = vmatprep.subr.mxu0 %v1255
    %1454 = vmatpush1.msra.mxu0 %v1254
    %1455 = vmatprep.subr.mxu0 %v1257
    %1456 = vmatpush1.msra.mxu0 %v1256
    %1457 = vmatprep.subr.mxu0 %v1259
    %1458 = vmatpush1.msra.mxu0 %v1258
    %1459 = vmatprep.subr.mxu0 %v1261
    %1460 = vmatpush1.msra.mxu0 %v1260
    %1461 = vmatprep.subr.mxu0 %v1263
    %1462 = vmatpush1.msra.mxu0 %v1262
    %1463 = vmatprep.subr.mxu0 %v1265
    %1464 = vmatpush1.msra.mxu0 %v1264
    %1465 = vmatprep.subr.mxu0 %v1267
    %1466 = vmatpush1.msra.mxu0 %v1266
    %1467 = vmatprep.subr.mxu0 %v1269
    %1468 = vmatpush1.msra.mxu0 %v1268
    %1469 = vmatprep.subr.mxu0 %v1271
    %1470 = vmatpush1.msra.mxu0 %v1270
    %1471 = vmatprep.subr.mxu0 %v1273
    %1472 = vmatpush1.msra.mxu0 %v1272
    %1473 = vmatprep.subr.mxu0 %v1275
    %1474 = vmatpush1.msra.mxu0 %v1274
    %1475 = vmatprep.subr.mxu0 %v1277
    %1476 = vmatpush1.msra.mxu0 %v1276
    %1477 = vmatprep.subr.mxu0 %v1279
    %1478 = vmatpush1.msra.mxu0 %v1278
    %1479 = vmatprep.subr.mxu0 %v1281
    %1480 = vmatpush1.msra.mxu0 %v1280
    %1481 = vmatprep.subr.mxu0 %v1283
    %1482 = vmatpush1.msra.mxu0 %v1282
    %1483 = vmatprep.subr.mxu0 %v1285
    %1484 = vmatpush1.msra.mxu0 %v1284
    %1485 = vmatprep.subr.mxu0 %v1287
    %1486 = vmatpush1.msra.mxu0 %v1286
    %1487 = vmatprep.subr.mxu0 %v1289
    %1488 = vmatpush1.msra.mxu0 %v1288
    %1489 = vmatprep.subr.mxu0 %v1291
    %1490 = vmatpush1.msra.mxu0 %v1290
    %1491 = vmatprep.subr.mxu0 %v1293
    %1492 = vmatpush1.msra.mxu0 %v1292
    %1493 = vmatprep.subr.mxu0 %v1295
    %1494 = vmatpush1.msra.mxu0 %v1294
    %1495 = vmatprep.subr.mxu0 %v1297
    %1496 = vmatpush1.msra.mxu0 %v1296
    %1497 = vmatprep.subr.mxu0 %v1299
    %1498 = vmatpush1.msra.mxu0 %v1298
    %1499 = vmatprep.subr.mxu0 %v1301
    %1500 = vmatpush1.msra.mxu0 %v1300
    %1501 = vmatprep.subr.mxu0 %v1303
    %1502 = vmatpush1.msra.mxu0 %v1302
    %1503 = vmatprep.subr.mxu0 %v1305
    %1504 = vmatpush1.msra.mxu0 %v1304
    %1505 = vmatprep.subr.mxu0 %v1307
    %1506 = vmatpush1.msra.mxu0 %v1306
    %1507 = vmatprep.subr.mxu0 %v1309
    %1508 = vmatpush1.msra.mxu0 %v1308
    %1509 = vmatprep.subr.mxu0 %v1311
    %1510 = vmatpush1.msra.mxu0 %v1310
    %1511 = vmatprep.subr.mxu0 %v1313
    %1512 = vmatpush1.msra.mxu0 %v1312
    %1513 = vmatprep.subr.mxu0 %v1315
    %1514 = vmatpush1.msra.mxu0 %v1314
    %1515 = vmatprep.subr.mxu0 %v1317
    %1516 = vmatpush1.msra.mxu0 %v1316
    %1517 = vmatprep.mubr.f32.mxu0 %v1187
    %1518 = vmatmul.mubr.f32.gmra.mrb[0].mxu0 %v1186
    %v1519 = vpop.f32.mrb[0].mxu0
    %v1520 = vadd.f32 %v1449, %v1519
    %v1521 = vpop.f32.mrb[0].mxu0
    %v1522 = vadd.f32 %v1451, %v1521
    %1523 = vdwg.mxu0
    %1524 = vmatprep.subr.mxu0 %v1319
    %1525 = vmatpush1.msra.mxu0 %v1318
    %1526 = vmatprep.subr.mxu0 %v1321
    %1527 = vmatpush1.msra.mxu0 %v1320
    %1528 = vmatprep.subr.mxu0 %v1323
    %1529 = vmatpush1.msra.mxu0 %v1322
    %1530 = vmatprep.subr.mxu0 %v1325
    %1531 = vmatpush1.msra.mxu0 %v1324
    %1532 = vmatprep.subr.mxu0 %v1327
    %1533 = vmatpush1.msra.mxu0 %v1326
    %1534 = vmatprep.subr.mxu0 %v1329
    %1535 = vmatpush1.msra.mxu0 %v1328
    %1536 = vmatprep.subr.mxu0 %v1331
    %1537 = vmatpush1.msra.mxu0 %v1330
    %1538 = vmatprep.subr.mxu0 %v1333
    %1539 = vmatpush1.msra.mxu0 %v1332
    %1540 = vmatprep.subr.mxu0 %v1335
    %1541 = vmatpush1.msra.mxu0 %v1334
    %1542 = vmatprep.subr.mxu0 %v1337
    %1543 = vmatpush1.msra.mxu0 %v1336
    %1544 = vmatprep.subr.mxu0 %v1339
    %1545 = vmatpush1.msra.mxu0 %v1338
    %1546 = vmatprep.subr.mxu0 %v1341
    %1547 = vmatpush1.msra.mxu0 %v1340
    %1548 = vmatprep.subr.mxu0 %v1343
    %1549 = vmatpush1.msra.mxu0 %v1342
    %1550 = vmatprep.subr.mxu0 %v1345
    %1551 = vmatpush1.msra.mxu0 %v1344
    %1552 = vmatprep.subr.mxu0 %v1347
    %1553 = vmatpush1.msra.mxu0 %v1346
    %1554 = vmatprep.subr.mxu0 %v1349
    %1555 = vmatpush1.msra.mxu0 %v1348
    %1556 = vmatprep.subr.mxu0 %v1351
    %1557 = vmatpush1.msra.mxu0 %v1350
    %1558 = vmatprep.subr.mxu0 %v1353
    %1559 = vmatpush1.msra.mxu0 %v1352
    %1560 = vmatprep.subr.mxu0 %v1355
    %1561 = vmatpush1.msra.mxu0 %v1354
    %1562 = vmatprep.subr.mxu0 %v1357
    %1563 = vmatpush1.msra.mxu0 %v1356
    %1564 = vmatprep.subr.mxu0 %v1359
    %1565 = vmatpush1.msra.mxu0 %v1358
    %1566 = vmatprep.subr.mxu0 %v1361
    %1567 = vmatpush1.msra.mxu0 %v1360
    %1568 = vmatprep.subr.mxu0 %v1363
    %1569 = vmatpush1.msra.mxu0 %v1362
    %1570 = vmatprep.subr.mxu0 %v1365
    %1571 = vmatpush1.msra.mxu0 %v1364
    %1572 = vmatprep.subr.mxu0 %v1367
    %1573 = vmatpush1.msra.mxu0 %v1366
    %1574 = vmatprep.subr.mxu0 %v1369
    %1575 = vmatpush1.msra.mxu0 %v1368
    %1576 = vmatprep.subr.mxu0 %v1371
    %1577 = vmatpush1.msra.mxu0 %v1370
    %1578 = vmatprep.subr.mxu0 %v1373
    %1579 = vmatpush1.msra.mxu0 %v1372
    %1580 = vmatprep.subr.mxu0 %v1375
    %1581 = vmatpush1.msra.mxu0 %v1374
    %1582 = vmatprep.subr.mxu0 %v1377
    %1583 = vmatpush1.msra.mxu0 %v1376
    %1584 = vmatprep.subr.mxu0 %v1379
    %1585 = vmatpush1.msra.mxu0 %v1378
    %1586 = vmatprep.subr.mxu0 %v1381
    %1587 = vmatpush1.msra.mxu0 %v1380
    %1588 = vmatprep.mubr.f32.mxu0 %v1189
    %1589 = vmatmul.mubr.f32.gmra.mrb[0].mxu0 %v1188
    %v1590 = vpop.f32.mrb[0].mxu0
    %v1591 = vadd.f32 %v1520, %v1590
    %v1592 = vpop.f32.mrb[0].mxu0
    %v1593 = vadd.f32 %v1522, %v1592
    %1594 = vdwg.mxu0
    %1595 = vst [vmem:[%s10] sm:$0xff] %v1591
    %1596 = vst [vmem:[%s10 + $0x8] sm:$0xff] %v1593
    // Predicated region
    $region42: #{_lambda_.2} parent=1 // pred_check
      _
    $region43: #{_lambda_.2} parent=1 // pred_check_branch
      %1598 = sbr.rel (0) target = $region45
    $region44: #{_lambda_.2} parent=1 // pred_region
      _
    $region45: #{_lambda_.2} parent=1 // pred_fallthru
      _
    // Predicated region
    $region46: #{_lambda_.2} parent=1 // pred_check
      _
    $region47: #{_lambda_.2} parent=1 // pred_check_branch
      %1600 = sbr.rel (0) target = $region49
    $region48: #{_lambda_.2} parent=1 // pred_region
      _
    $region49: #{_lambda_.2} parent=1 // pred_fallthru
      _
    // Predicated region
    $region50: #{_lambda_.2} parent=1 // pred_check
      _
    $region51: #{_lambda_.2} parent=1 // pred_check_branch
      %1602 = sbr.rel (0) target = $region53
    $region52: #{_lambda_.2} parent=1 // pred_region
      _
    $region53: #{_lambda_.2} parent=1 // pred_fallthru
      _
    // Predicated region
    $region54: #{_lambda_.2} parent=1 // pred_check
      _
    $region55: #{_lambda_.2} parent=1 // pred_check_branch
      %1604 = sbr.rel (0) target = $region57
    $region56: #{_lambda_.2} parent=1 // pred_region
      _
    $region57: #{_lambda_.2} parent=1 // pred_fallthru
      _
    %1605 = vsyncpa [#allocation3], 1

</llo_original>
